<compile_context>
chip_gen: v7x
topology: tpu7x:2x2x1
jax: 0.10.0
libtpu: 0.0.40
codegen_flags: <defaults>
</compile_context>

<pallas_src>
import functools
import math

import jax
import jax.numpy as jnp
from jax import lax
from jax.experimental import pallas as pl
from jax.experimental.pallas import tpu as pltpu


def _cnn_block_kernel(x_ref, w_ref, b_ref, o_ref, pad_ref, col_ref,
                      *, H, W, Cin, Cout):
    """Per grid step (one image):
      x_ref:   (H, W, Cin)      NHWC input block
      w_ref:   (9*Cin, Cpad)    im2col weight matrix (Cout zero-padded to 128 lanes)
      b_ref:   (1, Cpad)        bias (zero-padded)
      o_ref:   (Ho, Wo, Cout)   pooled output block (only the real channels)
      pad_ref: (H+2, W+2, Cin)  zero-padded input scratch
      col_ref: (H*W, 9*Cin)     im2col LHS scratch
    """
    Ho, Wo = H // 2, W // 2
    M = H * W
    Cpad = w_ref.shape[1]

    # 1) Zero only the 1-pixel conv border; the interior is overwritten below.
    #    Done every step so there is no cross-step scratch dependency and the
    #    batch grid axis can be "parallel" on multi-TensorCore chips.
    pad_ref[0:1, :, :] = jnp.zeros((1, W + 2, Cin), jnp.float32)
    pad_ref[H + 1:H + 2, :, :] = jnp.zeros((1, W + 2, Cin), jnp.float32)
    pad_ref[:, 0:1, :] = jnp.zeros((H + 2, 1, Cin), jnp.float32)
    pad_ref[:, W + 1:W + 2, :] = jnp.zeros((H + 2, 1, Cin), jnp.float32)
    pad_ref[1:H + 1, 1:W + 1, :] = x_ref[...].astype(jnp.float32)
    xp = pad_ref[...]

    # 2) im2col: pack the 9 shifted taps ONCE into the (M, 9*Cin) LHS scratch.
    for dy in range(3):
        for dx in range(3):
            t = dy * 3 + dx
            col_ref[:, t * Cin:(t + 1) * Cin] = (
                xp[dy:dy + H, dx:dx + W, :].reshape(M, Cin))

    # 3) ONE MXU pass: (M, 9*Cin) @ (9*Cin, Cpad), f32 accumulate.  No separate
    #    accumulator scratch and no read-modify-write sweeps.
    acc = jnp.dot(col_ref[...], w_ref[...], preferred_element_type=jnp.float32)

    # 4) bias + ReLU.  Dropout(p=0.1) is identity at inference.
    # TODO(synk): training-mode dropout (PRNG mask + 1/(1-p) scale) not implemented.
    acc = jnp.maximum(acc + b_ref[...], 0.0)

    # 5) fused MaxPool2d(2, 2): adjacent-pair maxes via reshapes (lane-dense,
    #    no strided gathers).  acc rows are (y, x)-ordered.
    wp = acc.reshape(H * Wo, 2, Cpad)
    wp = jnp.maximum(wp[:, 0, :], wp[:, 1, :])        # W-pooled: rows (y, xo)
    hp = wp.reshape(Ho, 2, Wo, Cpad)
    pooled = jnp.maximum(hp[:, 0], hp[:, 1])          # (Ho, Wo, Cpad)

    # 6) Write back only the real output channels so HBM never sees the 128-lane
    #    padding (tiny masked store; 16x fewer output bytes at Cout=8).
    o_ref[...] = pooled[:, :, :Cout].astype(o_ref.dtype)


def cnn_block_forward(x_nchw, w_oihw, bias):
    """Forward of CNNBlock (batch_norm=False, eval mode): NCHW in -> NCHW out."""
    B, Cin, H, W = x_nchw.shape
    Cout = w_oihw.shape[0]
    # TODO(synk): odd spatial sizes (MaxPool2d floor semantics) not handled here.
    assert H % 2 == 0 and W % 2 == 0, "even spatial dims expected"
    Ho, Wo = H // 2, W // 2
    K = 9 * Cin                                       # im2col contraction depth
    Cpad = ((Cout + 127) // 128) * 128                # lane-dense N for MXU/epilogue

    # Boundary-only layout prep (tiny, one-time XLA ops).  The PyTorch module
    # interface is NCHW; a chained NHWC pipeline would keep activations NHWC
    # and drop both transposes.
    x_nhwc = jnp.transpose(x_nchw, (0, 2, 3, 1))                      # (B, H, W, Cin)
    # (Cout, Cin, 3, 3) -> (3, 3, Cin, Cout) -> (9*Cin, Cout) -> pad lanes to Cpad.
    w_mat = jnp.transpose(w_oihw, (2, 3, 1, 0)).reshape(K, Cout)
    w_mat = jnp.pad(w_mat, ((0, 0), (0, Cpad - Cout))).astype(jnp.float32)
    b_pad = jnp.pad(bias, (0, Cpad - Cout)).reshape(1, Cpad).astype(jnp.float32)

    kernel = functools.partial(_cnn_block_kernel, H=H, W=W, Cin=Cin, Cout=Cout)
    # Per-step VMEM (f32): x block + pad + im2col + dot result
    # ~ H*W*(Cin*3 + 9*Cin + Cpad) floats -> a few hundred KiB here, far under
    # every generation's scoped-VMEM default, so no explicit vmem_limit_bytes.
    # At larger H*W, additionally tile the grid over row bands (1-row halo via
    # the index_map) and re-derive the tile so the per-step footprint stays
    # well inside the target chip's VMEM (only 64 MiB on v7x).
    out_nhwc = pl.pallas_call(
        kernel,
        out_shape=jax.ShapeDtypeStruct((B, Ho, Wo, Cout), x_nchw.dtype),
        grid=(B,),                                    # batch-tiled, double-buffered
        in_specs=[
            pl.BlockSpec((None, H, W, Cin), lambda b: (b, 0, 0, 0)),
            pl.BlockSpec((K, Cpad), lambda b: (0, 0)),
            pl.BlockSpec((1, Cpad), lambda b: (0, 0)),
        ],
        out_specs=pl.BlockSpec((None, Ho, Wo, Cout), lambda b: (b, 0, 0, 0)),
        scratch_shapes=[
            pltpu.VMEM((H + 2, W + 2, Cin), jnp.float32),   # zero-padded input
            pltpu.VMEM((H * W, K), jnp.float32),            # im2col LHS
        ],
        compiler_params=pltpu.CompilerParams(
            dimension_semantics=("parallel",),        # shards batch across v7x's 2 TCs
        ),
    )(x_nhwc, w_mat, b_pad)

    return jnp.transpose(out_nhwc, (0, 3, 1, 2))      # NHWC -> NCHW (module interface)


def init_params(key, inp, out):
    """Matches CNNBlock._init_weights: xavier_uniform conv weight (OIHW), zero bias."""
    fan_in, fan_out = inp * 9, out * 9
    bound = math.sqrt(6.0 / (fan_in + fan_out))
    w = jax.random.uniform(key, (out, inp, 3, 3), jnp.float32, -bound, bound)
    b = jnp.zeros((out,), jnp.float32)
    return w, b


def reference_forward(x_nchw, w_oihw, bias):
    """Pure-JAX reference (eval mode: dropout == identity)."""
    y = lax.conv_general_dilated(
        x_nchw, w_oihw, window_strides=(1, 1), padding=((1, 1), (1, 1)),
        dimension_numbers=("NCHW", "OIHW", "NCHW"),
        precision=lax.Precision.HIGHEST)
    y = jnp.maximum(y + bias.reshape(1, -1, 1, 1), 0.0)       # conv + bias + ReLU
    return lax.reduce_window(                                 # MaxPool2d(2, 2)
        y, -jnp.inf, lax.max,
        window_dimensions=(1, 1, 2, 2), window_strides=(1, 1, 2, 2),
        padding=((0, 0), (0, 0), (0, 0), (0, 0)))


if __name__ == "__main__":
    B, C_IN, H, W = 2, 4, 16, 16
    C_OUT = 8

    key = jax.random.PRNGKey(0)
    k_x, k_w = jax.random.split(key)
    x = jax.random.normal(k_x, (B, C_IN, H, W), jnp.float32)
    w, b = init_params(k_w, C_IN, C_OUT)

    fwd = jax.jit(cnn_block_forward)
    out = jax.block_until_ready(fwd(x, w, b))
    ref = jax.block_until_ready(reference_forward(x, w, b))

    assert out.shape == (B, C_OUT, H // 2, W // 2), out.shape
    max_err = float(jnp.max(jnp.abs(out - ref)))
    assert jnp.allclose(out, ref, rtol=2e-2, atol=2e-2), max_err
    print("KERNEL_OK")
</pallas_src>

<mosaic_0001>
module attributes {stable_mosaic.version = 11 : i64} {
  func.func @_cnn_block_kernel(%arg0: i32, %arg1: memref<1x16x16x4xf32, #tpu.memory_space<vmem>>, %arg2: memref<36x128xf32, #tpu.memory_space<vmem>>, %arg3: memref<1x128xf32, #tpu.memory_space<vmem>>, %arg4: memref<1x8x8x8xf32, #tpu.memory_space<vmem>>, %arg5: memref<18x18x4xf32, #tpu.memory_space<vmem>>, %arg6: memref<256x36xf32, #tpu.memory_space<vmem>>) attributes {dimension_semantics = [#tpu.dimension_semantics<parallel>], iteration_bounds = array<i64: 2>, scalar_prefetch = 0 : i64, scratch_operands = 2 : i64, tpu.core_type = #tpu.core_type<tc>, window_params = [{transform_indices = @transform_0, window_bounds = array<i64: 1, 16, 16, 4>}, {pipeline_mode = #tpu.pipeline_mode<synchronous>, transform_indices = @transform_1, window_bounds = array<i64: 36, 128>}, {pipeline_mode = #tpu.pipeline_mode<synchronous>, transform_indices = @transform_2, window_bounds = array<i64: 1, 128>}, {transform_indices = @transform_3, window_bounds = array<i64: 1, 8, 8, 8>}]} {
    %cst = arith.constant 0.000000e+00 : f32
    %0 = vector.broadcast %cst : f32 to vector<1x18x4xf32>
    %c0 = arith.constant 0 : index
    %c0_0 = arith.constant 0 : index
    %c0_1 = arith.constant 0 : index
    %1 = vector.load %arg5[%c0, %c0_0, %c0_1] : memref<18x18x4xf32, #tpu.memory_space<vmem>>, vector<1x18x4xf32>
    tpu.vector_store %arg5[%c0, %c0_0, %c0_1], %0 {strides = array<i32>} : memref<18x18x4xf32, #tpu.memory_space<vmem>>, vector<1x18x4xf32>,
    %cst_2 = arith.constant 0.000000e+00 : f32
    %2 = vector.broadcast %cst_2 : f32 to vector<1x18x4xf32>
    %c17 = arith.constant 17 : index
    %c0_3 = arith.constant 0 : index
    %c0_4 = arith.constant 0 : index
    %3 = vector.load %arg5[%c17, %c0_3, %c0_4] : memref<18x18x4xf32, #tpu.memory_space<vmem>>, vector<1x18x4xf32>
    tpu.vector_store %arg5[%c17, %c0_3, %c0_4], %2 {strides = array<i32>} : memref<18x18x4xf32, #tpu.memory_space<vmem>>, vector<1x18x4xf32>,
    %cst_5 = arith.constant 0.000000e+00 : f32
    %4 = vector.broadcast %cst_5 : f32 to vector<18x1x4xf32>
    %c0_6 = arith.constant 0 : index
    %c0_7 = arith.constant 0 : index
    %c0_8 = arith.constant 0 : index
    %5 = vector.load %arg5[%c0_6, %c0_7, %c0_8] : memref<18x18x4xf32, #tpu.memory_space<vmem>>, vector<18x1x4xf32>
    tpu.vector_store %arg5[%c0_6, %c0_7, %c0_8], %4 {strides = array<i32>} : memref<18x18x4xf32, #tpu.memory_space<vmem>>, vector<18x1x4xf32>,
    %cst_9 = arith.constant 0.000000e+00 : f32
    %6 = vector.broadcast %cst_9 : f32 to vector<18x1x4xf32>
    %c0_10 = arith.constant 0 : index
    %c17_11 = arith.constant 17 : index
    %c0_12 = arith.constant 0 : index
    %7 = vector.load %arg5[%c0_10, %c17_11, %c0_12] : memref<18x18x4xf32, #tpu.memory_space<vmem>>, vector<18x1x4xf32>
    tpu.vector_store %arg5[%c0_10, %c17_11, %c0_12], %6 {strides = array<i32>} : memref<18x18x4xf32, #tpu.memory_space<vmem>>, vector<18x1x4xf32>,
    %c0_13 = arith.constant 0 : index
    %c0_14 = arith.constant 0 : index
    %c0_15 = arith.constant 0 : index
    %c0_16 = arith.constant 0 : index
    %8 = vector.load %arg1[%c0_13, %c0_14, %c0_15, %c0_16] : memref<1x16x16x4xf32, #tpu.memory_space<vmem>>, vector<1x16x16x4xf32>
    %9 = vector.shape_cast %8 : vector<1x16x16x4xf32> to vector<16x16x4xf32>
    %c1 = arith.constant 1 : index
    %c1_17 = arith.constant 1 : index
    %c0_18 = arith.constant 0 : index
    %10 = vector.load %arg5[%c1, %c1_17, %c0_18] : memref<18x18x4xf32, #tpu.memory_space<vmem>>, vector<16x16x4xf32>
    tpu.vector_store %arg5[%c1, %c1_17, %c0_18], %9 {strides = array<i32>} : memref<18x18x4xf32, #tpu.memory_space<vmem>>, vector<16x16x4xf32>,
    %c0_19 = arith.constant 0 : index
    %c0_20 = arith.constant 0 : index
    %c0_21 = arith.constant 0 : index
    %11 = vector.load %arg5[%c0_19, %c0_20, %c0_21] : memref<18x18x4xf32, #tpu.memory_space<vmem>>, vector<18x18x4xf32>
    %12 = vector.extract_strided_slice %11 {offsets = [0, 0, 0], sizes = [16, 16, 4], strides = [1, 1, 1]} : vector<18x18x4xf32> to vector<16x16x4xf32>
    %13 = vector.shape_cast %12 : vector<16x16x4xf32> to vector<256x4xf32>
    %c0_22 = arith.constant 0 : index
    %c0_23 = arith.constant 0 : index
    %14 = vector.load %arg6[%c0_22, %c0_23] : memref<256x36xf32, #tpu.memory_space<vmem>>, vector<256x4xf32>
    tpu.vector_store %arg6[%c0_22, %c0_23], %13 {strides = array<i32>} : memref<256x36xf32, #tpu.memory_space<vmem>>, vector<256x4xf32>,
    %15 = vector.extract_strided_slice %11 {offsets = [0, 1, 0], sizes = [16, 16, 4], strides = [1, 1, 1]} : vector<18x18x4xf32> to vector<16x16x4xf32>
    %16 = vector.shape_cast %15 : vector<16x16x4xf32> to vector<256x4xf32>
    %c0_24 = arith.constant 0 : index
    %c4 = arith.constant 4 : index
    %17 = vector.load %arg6[%c0_24, %c4] : memref<256x36xf32, #tpu.memory_space<vmem>>, vector<256x4xf32>
    tpu.vector_store %arg6[%c0_24, %c4], %16 {strides = array<i32>} : memref<256x36xf32, #tpu.memory_space<vmem>>, vector<256x4xf32>,
    %18 = vector.extract_strided_slice %11 {offsets = [0, 2, 0], sizes = [16, 16, 4], strides = [1, 1, 1]} : vector<18x18x4xf32> to vector<16x16x4xf32>
    %19 = vector.shape_cast %18 : vector<16x16x4xf32> to vector<256x4xf32>
    %c0_25 = arith.constant 0 : index
    %c8 = arith.constant 8 : index
    %20 = vector.load %arg6[%c0_25, %c8] : memref<256x36xf32, #tpu.memory_space<vmem>>, vector<256x4xf32>
    tpu.vector_store %arg6[%c0_25, %c8], %19 {strides = array<i32>} : memref<256x36xf32, #tpu.memory_space<vmem>>, vector<256x4xf32>,
    %21 = vector.extract_strided_slice %11 {offsets = [1, 0, 0], sizes = [16, 16, 4], strides = [1, 1, 1]} : vector<18x18x4xf32> to vector<16x16x4xf32>
    %22 = vector.shape_cast %21 : vector<16x16x4xf32> to vector<256x4xf32>
    %c0_26 = arith.constant 0 : index
    %c12 = arith.constant 12 : index
    %23 = vector.load %arg6[%c0_26, %c12] : memref<256x36xf32, #tpu.memory_space<vmem>>, vector<256x4xf32>
    tpu.vector_store %arg6[%c0_26, %c12], %22 {strides = array<i32>} : memref<256x36xf32, #tpu.memory_space<vmem>>, vector<256x4xf32>,
    %24 = vector.extract_strided_slice %11 {offsets = [1, 1, 0], sizes = [16, 16, 4], strides = [1, 1, 1]} : vector<18x18x4xf32> to vector<16x16x4xf32>
    %25 = vector.shape_cast %24 : vector<16x16x4xf32> to vector<256x4xf32>
    %c0_27 = arith.constant 0 : index
    %c16 = arith.constant 16 : index
    %26 = vector.load %arg6[%c0_27, %c16] : memref<256x36xf32, #tpu.memory_space<vmem>>, vector<256x4xf32>
    tpu.vector_store %arg6[%c0_27, %c16], %25 {strides = array<i32>} : memref<256x36xf32, #tpu.memory_space<vmem>>, vector<256x4xf32>,
    %27 = vector.extract_strided_slice %11 {offsets = [1, 2, 0], sizes = [16, 16, 4], strides = [1, 1, 1]} : vector<18x18x4xf32> to vector<16x16x4xf32>
    %28 = vector.shape_cast %27 : vector<16x16x4xf32> to vector<256x4xf32>
    %c0_28 = arith.constant 0 : index
    %c20 = arith.constant 20 : index
    %29 = vector.load %arg6[%c0_28, %c20] : memref<256x36xf32, #tpu.memory_space<vmem>>, vector<256x4xf32>
    tpu.vector_store %arg6[%c0_28, %c20], %28 {strides = array<i32>} : memref<256x36xf32, #tpu.memory_space<vmem>>, vector<256x4xf32>,
    %30 = vector.extract_strided_slice %11 {offsets = [2, 0, 0], sizes = [16, 16, 4], strides = [1, 1, 1]} : vector<18x18x4xf32> to vector<16x16x4xf32>
    %31 = vector.shape_cast %30 : vector<16x16x4xf32> to vector<256x4xf32>
    %c0_29 = arith.constant 0 : index
    %c24 = arith.constant 24 : index
    %32 = vector.load %arg6[%c0_29, %c24] : memref<256x36xf32, #tpu.memory_space<vmem>>, vector<256x4xf32>
    tpu.vector_store %arg6[%c0_29, %c24], %31 {strides = array<i32>} : memref<256x36xf32, #tpu.memory_space<vmem>>, vector<256x4xf32>,
    %33 = vector.extract_strided_slice %11 {offsets = [2, 1, 0], sizes = [16, 16, 4], strides = [1, 1, 1]} : vector<18x18x4xf32> to vector<16x16x4xf32>
    %34 = vector.shape_cast %33 : vector<16x16x4xf32> to vector<256x4xf32>
    %c0_30 = arith.constant 0 : index
    %c28 = arith.constant 28 : index
    %35 = vector.load %arg6[%c0_30, %c28] : memref<256x36xf32, #tpu.memory_space<vmem>>, vector<256x4xf32>
    tpu.vector_store %arg6[%c0_30, %c28], %34 {strides = array<i32>} : memref<256x36xf32, #tpu.memory_space<vmem>>, vector<256x4xf32>,
    %36 = vector.extract_strided_slice %11 {offsets = [2, 2, 0], sizes = [16, 16, 4], strides = [1, 1, 1]} : vector<18x18x4xf32> to vector<16x16x4xf32>
    %37 = vector.shape_cast %36 : vector<16x16x4xf32> to vector<256x4xf32>
    %c0_31 = arith.constant 0 : index
    %c32 = arith.constant 32 : index
    %38 = vector.load %arg6[%c0_31, %c32] : memref<256x36xf32, #tpu.memory_space<vmem>>, vector<256x4xf32>
    tpu.vector_store %arg6[%c0_31, %c32], %37 {strides = array<i32>} : memref<256x36xf32, #tpu.memory_space<vmem>>, vector<256x4xf32>,
    %c0_32 = arith.constant 0 : index
    %c0_33 = arith.constant 0 : index
    %39 = vector.load %arg6[%c0_32, %c0_33] : memref<256x36xf32, #tpu.memory_space<vmem>>, vector<256x36xf32>
    %c0_34 = arith.constant 0 : index
    %c0_35 = arith.constant 0 : index
    %40 = vector.load %arg2[%c0_34, %c0_35] : memref<36x128xf32, #tpu.memory_space<vmem>>, vector<36x128xf32>
    %cst_36 = arith.constant dense<0.000000e+00> : vector<256x128xf32>
    %41 = tpu.matmul %39, %40, %cst_36 {dimension_numbers = #tpu.dot_dimension_numbers<[1], [0], [0], [1], [0, 0, 1, 1], [], []>} : vector<256x36xf32>, vector<36x128xf32>, vector<256x128xf32> -> vector<256x128xf32>
    %c0_37 = arith.constant 0 : index
    %c0_38 = arith.constant 0 : index
    %42 = vector.load %arg3[%c0_37, %c0_38] : memref<1x128xf32, #tpu.memory_space<vmem>>, vector<1x128xf32>
    %43 = vector.broadcast %42 : vector<1x128xf32> to vector<256x128xf32>
    %44 = arith.addf %41, %43 : vector<256x128xf32>
    %cst_39 = arith.constant 0.000000e+00 : f32
    %45 = vector.broadcast %cst_39 : f32 to vector<256x128xf32>
    %46 = arith.maximumf %44, %45 : vector<256x128xf32>
    %47 = vector.shape_cast %46 : vector<256x128xf32> to vector<128x2x128xf32>
    %48 = vector.extract_strided_slice %47 {offsets = [0, 0, 0], sizes = [128, 1, 128], strides = [1, 1, 1]} : vector<128x2x128xf32> to vector<128x1x128xf32>
    %49 = vector.shape_cast %48 : vector<128x1x128xf32> to vector<128x128xf32>
    %50 = vector.extract_strided_slice %47 {offsets = [0, 1, 0], sizes = [128, 1, 128], strides = [1, 1, 1]} : vector<128x2x128xf32> to vector<128x1x128xf32>
    %51 = vector.shape_cast %50 : vector<128x1x128xf32> to vector<128x128xf32>
    %52 = arith.maximumf %49, %51 : vector<128x128xf32>
    %53 = vector.shape_cast %52 : vector<128x128xf32> to vector<8x2x8x128xf32>
    %54 = vector.extract_strided_slice %53 {offsets = [0, 0, 0, 0], sizes = [8, 1, 8, 128], strides = [1, 1, 1, 1]} : vector<8x2x8x128xf32> to vector<8x1x8x128xf32>
    %55 = vector.shape_cast %54 : vector<8x1x8x128xf32> to vector<8x8x128xf32>
    %56 = vector.extract_strided_slice %53 {offsets = [0, 1, 0, 0], sizes = [8, 1, 8, 128], strides = [1, 1, 1, 1]} : vector<8x2x8x128xf32> to vector<8x1x8x128xf32>
    %57 = vector.shape_cast %56 : vector<8x1x8x128xf32> to vector<8x8x128xf32>
    %58 = arith.maximumf %55, %57 : vector<8x8x128xf32>
    %59 = vector.extract_strided_slice %58 {offsets = [0, 0, 0], sizes = [8, 8, 8], strides = [1, 1, 1]} : vector<8x8x128xf32> to vector<8x8x8xf32>
    %c0_40 = arith.constant 0 : index
    %c0_41 = arith.constant 0 : index
    %c0_42 = arith.constant 0 : index
    %c0_43 = arith.constant 0 : index
    %60 = vector.load %arg4[%c0_40, %c0_41, %c0_42, %c0_43] : memref<1x8x8x8xf32, #tpu.memory_space<vmem>>, vector<1x8x8x8xf32>
    %61 = vector.shape_cast %60 : vector<1x8x8x8xf32> to vector<8x8x8xf32>
    %62 = vector.shape_cast %59 : vector<8x8x8xf32> to vector<1x8x8x8xf32>
    tpu.vector_store %arg4[%c0_40, %c0_41, %c0_42, %c0_43], %62 {strides = array<i32>} : memref<1x8x8x8xf32, #tpu.memory_space<vmem>>, vector<1x8x8x8xf32>,
    return
  }
  func.func @transform_0(%arg0: i32) -> (i32, i32, i32, i32) {
    %c0_i32 = arith.constant 0 : i32
    %c0_i32_0 = arith.constant 0 : i32
    %c0_i32_1 = arith.constant 0 : i32
    %c0_i32_2 = arith.constant 0 : i32
    return %arg0, %c0_i32, %c0_i32_0, %c0_i32_1 : i32, i32, i32, i32
  }
  func.func @transform_1(%arg0: i32) -> (i32, i32) {
    %c0_i32 = arith.constant 0 : i32
    %c0_i32_0 = arith.constant 0 : i32
    %c0_i32_1 = arith.constant 0 : i32
    return %c0_i32, %c0_i32_0 : i32, i32
  }
  func.func @transform_2(%arg0: i32) -> (i32, i32) {
    %c0_i32 = arith.constant 0 : i32
    %c0_i32_0 = arith.constant 0 : i32
    %c0_i32_1 = arith.constant 0 : i32
    return %c0_i32, %c0_i32_0 : i32, i32
  }
  func.func @transform_3(%arg0: i32) -> (i32, i32, i32, i32) {
    %c0_i32 = arith.constant 0 : i32
    %c0_i32_0 = arith.constant 0 : i32
    %c0_i32_1 = arith.constant 0 : i32
    %c0_i32_2 = arith.constant 0 : i32
    return %arg0, %c0_i32, %c0_i32_0, %c0_i32_1 : i32, i32, i32, i32
  }
}

</mosaic_0001>

<llo_original>
// kernel: cnn_block_forward.1
$region0: #{cnn_block_forward.1}
  #allocation0 [shape = 'u32[]', space=smem, size = 0x4, offset = 0x4, fixed_abs, tag = 'smem constant byte address 0x4 - core index']
  #allocation1 [shape = 'u32[144,128]{1,0:T(1,128)}', space=vmem, size = 0x12000, scoped, tag = 'internal scratch']
  #allocation2 [shape = 'f32[18,18,4]{2,1,0:T(8,128)}', space=vmem, size = 0x36000, scoped, tag = 'scratch operand']
  #allocation3 [shape = 'f32[256,36]{1,0:T(8,128)}', space=vmem, size = 0x20000, scoped, tag = 'scratch operand']
  %s0 = inlined_call_operand.vmem [shape: f32[2,16,16,4], index: 0, kind: input, shape index: {}]
  %s1 = inlined_call_operand.vmem [shape: f32[36,128], index: 1, kind: input, shape index: {}]
  %s2 = inlined_call_operand.vmem [shape: f32[1,128], index: 2, kind: input, shape index: {}]
  %s3 = inlined_call_operand.vmem [shape: f32[2,8,8,8], index: 3, kind: output, shape index: {}]
  %s4 = sld [smem:[#allocation0]]
  $region45: #{cnn_block_forward.1} parent=0
    _
  %s6 = ssub.s32 1, %s4
  %s7 = scalar_select 0, %s6, %s4
  loop: start=0, step=1, limit=4
  $region2: #{cnn_block_forward.1} parent=0 // loop_pre_header
    _
  $region3: #{cnn_block_forward.1} parent=0 // loop_header
    %s9 = sphi 0, %s13
    %p10 = scmp.ge.s32.totalorder %s9, 4
    %s19 = sphi 0, %s21
    %s22 = sphi 0, %s19
    %s23 = sphi 0, %s22
    %s39 = sphi 0, %s23
    %s43 = sphi 0, %s43
    %s45 = sphi 0, %s43
    %s46 = sphi 0, %s45
    %s60 = sphi 0, %s46
    %s64 = sphi 0, %s64
    %s66 = sphi 0, %s64
    %s67 = sphi 0, %s66
    %s81 = sphi 0, %s67
    %s87 = sphi 0, %s89
    %s90 = sphi 0, %s87
    %s91 = sphi 0, %s90
    %s107 = sphi 0, %s91
  $region4: #{cnn_block_forward.1} parent=0 // loop_header_branch
    %12 = sbr.rel (%p10) target = $region8
  $region5: #{cnn_block_forward.1} parent=0 // loop_body
    %s14 = ssub.s32 %s9, 1
    %s15 = ssub.s32 %s9, 2
    %s16 = sadd.s32 %s9, 1
    %s17 = ssub.s32 %s9, %s16
    %p18 = scmp.eq.s32.totalorder %s17, 0
    %s20 = sadd.s32 %s19, 1
    %s21 = scalar_select %p18, %s19, %s20
    %p24 = pneg %p18
    %p25 = scmp.eq.s32.totalorder %s9, 1
    %p26 = por %p24, %p25
    %p27 = scmp.ne.s32.totalorder %s19, %s22
    %p28 = scmp.eq.s32.totalorder %s9, 0
    %p29 = por %p27, %p28
    %p30 = scmp.ne.s32.totalorder %s19, %s22
    %p31 = scmp.eq.s32.totalorder %s14, 1
    %p32 = por %p30, %p31
    %p33 = scmp.ne.s32.totalorder %s22, %s23
    %p34 = scmp.eq.s32.totalorder %s14, 0
    %p35 = por %p33, %p34
    %p36 = scmp.ne.s32.totalorder %s22, %s23
    %p37 = scmp.eq.s32.totalorder %s15, 1
    %p38 = por %p36, %p37
    %p40 = scmp.ne.s32.totalorder %s23, %s39
    %p41 = scmp.eq.s32.totalorder %s15, 0
    %p42 = por %p40, %p41
    %s44 = sadd.s32 %s43, 1
    %p47 = scmp.eq.s32.totalorder %s9, 1
    %p48 = scmp.ne.s32.totalorder %s43, %s45
    %p49 = scmp.eq.s32.totalorder %s9, 0
    %p50 = por %p48, %p49
    %p51 = scmp.ne.s32.totalorder %s43, %s45
    %p52 = scmp.eq.s32.totalorder %s14, 1
    %p53 = por %p51, %p52
    %p54 = scmp.ne.s32.totalorder %s45, %s46
    %p55 = scmp.eq.s32.totalorder %s14, 0
    %p56 = por %p54, %p55
    %p57 = scmp.ne.s32.totalorder %s45, %s46
    %p58 = scmp.eq.s32.totalorder %s15, 1
    %p59 = por %p57, %p58
    %p61 = scmp.ne.s32.totalorder %s46, %s60
    %p62 = scmp.eq.s32.totalorder %s15, 0
    %p63 = por %p61, %p62
    %s65 = sadd.s32 %s64, 1
    %p68 = scmp.eq.s32.totalorder %s9, 1
    %p69 = scmp.ne.s32.totalorder %s64, %s66
    %p70 = scmp.eq.s32.totalorder %s9, 0
    %p71 = por %p69, %p70
    %p72 = scmp.ne.s32.totalorder %s64, %s66
    %p73 = scmp.eq.s32.totalorder %s14, 1
    %p74 = por %p72, %p73
    %p75 = scmp.ne.s32.totalorder %s66, %s67
    %p76 = scmp.eq.s32.totalorder %s14, 0
    %p77 = por %p75, %p76
    %p78 = scmp.ne.s32.totalorder %s66, %s67
    %p79 = scmp.eq.s32.totalorder %s15, 1
    %p80 = por %p78, %p79
    %p82 = scmp.ne.s32.totalorder %s67, %s81
    %p83 = scmp.eq.s32.totalorder %s15, 0
    %p84 = por %p82, %p83
    %s85 = ssub.s32 %s9, %s16
    %p86 = scmp.eq.s32.totalorder %s85, 0
    %s88 = sadd.s32 %s87, 1
    %s89 = scalar_select %p86, %s87, %s88
    %p92 = pneg %p86
    %p93 = scmp.eq.s32.totalorder %s9, 1
    %p94 = por %p92, %p93
    %p95 = scmp.ne.s32.totalorder %s87, %s90
    %p96 = scmp.eq.s32.totalorder %s9, 0
    %p97 = por %p95, %p96
    %p98 = scmp.ne.s32.totalorder %s87, %s90
    %p99 = scmp.eq.s32.totalorder %s14, 1
    %p100 = por %p98, %p99
    %p101 = scmp.ne.s32.totalorder %s90, %s91
    %p102 = scmp.eq.s32.totalorder %s14, 0
    %p103 = por %p101, %p102
    %p104 = scmp.ne.s32.totalorder %s90, %s91
    %p105 = scmp.eq.s32.totalorder %s15, 1
    %p106 = por %p104, %p105
    %p108 = scmp.ne.s32.totalorder %s91, %s107
    %p109 = scmp.eq.s32.totalorder %s15, 0
    %p110 = por %p108, %p109
    %p111 = scmp.le.s32.totalorder 1, %s9
    %p112 = scmp.lt.s32.totalorder %s9, 3
    %p113 = pnand %p111, %p112
    %p114 = pneg %p113
    // Predicated region
    $region9: #{cnn_block_forward.1} parent=5 // pred_check
      _
    $region10: #{cnn_block_forward.1} parent=5 // pred_check_branch
      %116 = sbr.rel (%p113) target = $region12
    $region11: #{cnn_block_forward.1} parent=5 // pred_region
      %s117 = ssub.s32 %s9, 1
      // Predicated region
      $region13: #{cnn_block_forward.1} parent=11 // pred_check
        %p118 = pneg %p56
      $region14: #{cnn_block_forward.1} parent=11 // pred_check_branch
        %120 = sbr.rel (%p118) target = $region16
      $region15: #{cnn_block_forward.1} parent=11 // pred_region
        _
      $region16: #{cnn_block_forward.1} parent=11 // pred_fallthru
        _
      // Predicated region
      $region17: #{cnn_block_forward.1} parent=11 // pred_check
        %p121 = pneg %p77
      $region18: #{cnn_block_forward.1} parent=11 // pred_check_branch
        %123 = sbr.rel (%p121) target = $region20
      $region19: #{cnn_block_forward.1} parent=11 // pred_region
        _
      $region20: #{cnn_block_forward.1} parent=11 // pred_fallthru
        _
    $region12: #{cnn_block_forward.1} parent=5 // pred_fallthru
      _
    %p124 = scmp.lt.s32.totalorder %s9, 2
    // Predicated region
    $region21: #{cnn_block_forward.1} parent=5 // pred_check
      %p125 = pneg %p124
    $region22: #{cnn_block_forward.1} parent=5 // pred_check_branch
      %127 = sbr.rel (%p125) target = $region24
    $region23: #{cnn_block_forward.1} parent=5 // pred_region
      // Predicated region
      $region25: #{cnn_block_forward.1} parent=23 // pred_check
        %p128 = pneg %p29
      $region26: #{cnn_block_forward.1} parent=23 // pred_check_branch
        %130 = sbr.rel (%p128) target = $region28
      $region27: #{cnn_block_forward.1} parent=23 // pred_region
        %p131 = scmp.lt.s32.totalorder %s9, 1
        %s132 = scalar_select %p131, %s9, 1
        %s133 = smul.addr %s132, 32
        %s134 = smul.addr %s133, 8
        %s135 = scalar_lea.vmem %s0, %s134
      $region28: #{cnn_block_forward.1} parent=23 // pred_fallthru
        _
    $region24: #{cnn_block_forward.1} parent=5 // pred_fallthru
      _
    %p136 = scmp.le.s32.totalorder 1, %s9
    %p137 = scmp.lt.s32.totalorder %s9, 3
    %p138 = pnand %p136, %p137
    %p139 = pneg %p138
    // Predicated region
    $region29: #{cnn_block_forward.1} parent=5 // pred_check
      _
    $region30: #{cnn_block_forward.1} parent=5 // pred_check_branch
      %141 = sbr.rel (%p138) target = $region32
    $region31: #{cnn_block_forward.1} parent=5 // pred_region
      %s142 = ssub.s32 %s9, 1
      %p143 = scmp.lt.s32.totalorder %s14, 1
      %s144 = scalar_select %p143, %s14, 1
      %s145 = smul.addr %s144, 32
      %s146 = smul.addr %s145, 8
      %s147 = scalar_lea.vmem %s0, %s146
      %p148 = pneg %p35
      %p149 = pneg %p32
      %p150 = pneg %p56
      %p151 = pneg %p53
      %p152 = pneg %p77
      %p153 = pneg %p74
      %p154 = pneg %p103
      %p155 = pneg %p100
      %p156 = scmp.lt.s32.totalorder %s14, 1
      %s157 = scalar_select %p156, %s14, 1
      %s158 = smul.addr %s157, 8
      %s159 = smul.addr %s158, 8
      %s160 = scalar_lea.vmem %s3, %s159
      %p161 = scmp.lt.s32.totalorder %s14, 1
      %s162 = scalar_select %p161, %s14, 1
      %s163 = smul.addr %s162, 32
      %s164 = smul.addr %s163, 8
      %s165 = scalar_lea.vmem %s0, %s164
      %p166 = scmp.lt.s32.totalorder %s14, 1
      %s167 = scalar_select %p166, %s14, 1
      %s168 = smul.addr %s167, 8
      %s169 = smul.addr %s168, 8
      %s170 = scalar_lea.vmem %s3, %s169
      %vm171 = vcmask 31744
      %172 = vst.msk [vmem:[#allocation2] sm:$0xff] %vm171, 0.0
      %173 = vst.msk [vmem:[#allocation2 + $0x8] sm:$0xff] %vm171, 0.0
      %vm174 = vcmask 25600
      %175 = vst.msk [vmem:[#allocation2 + $0x10] sm:$0x3] %vm174, 0.0
      %s176 = scalar_lea.vmem [#allocation2], 408
      %177 = vst.msk [vmem:[%s176] sm:$0xff] %vm171, 0.0
      %178 = vst.msk [vmem:[%s176 + $0x8] sm:$0xff] %vm171, 0.0
      %179 = vst.msk [vmem:[%s176 + $0x10] sm:$0x3] %vm174, 0.0
      %vm180 = vcmask 24576
      %181 = vst.msk [vmem:[#allocation2] sm:$0x1] %vm180, 0.0
      %182 = vst.msk [vmem:[#allocation2 + $0x18] sm:$0x1] %vm180, 0.0
      %183 = vst.msk [vmem:[#allocation2 + $0x30] sm:$0x1] %vm180, 0.0
      %184 = vst.msk [vmem:[#allocation2 + $0x48] sm:$0x1] %vm180, 0.0
      %185 = vst.msk [vmem:[#allocation2 + $0x60] sm:$0x1] %vm180, 0.0
      %186 = vst.msk [vmem:[#allocation2 + $0x78] sm:$0x1] %vm180, 0.0
      %187 = vst.msk [vmem:[#allocation2 + $0x90] sm:$0x1] %vm180, 0.0
      %188 = vst.msk [vmem:[#allocation2 + $0xa8] sm:$0x1] %vm180, 0.0
      %189 = vst.msk [vmem:[#allocation2 + $0xc0] sm:$0x1] %vm180, 0.0
      %190 = vst.msk [vmem:[#allocation2 + $0xd8] sm:$0x1] %vm180, 0.0
      %191 = vst.msk [vmem:[#allocation2 + $0xf0] sm:$0x1] %vm180, 0.0
      %192 = vst.msk [vmem:[#allocation2 + $0x108] sm:$0x1] %vm180, 0.0
      %193 = vst.msk [vmem:[#allocation2 + $0x120] sm:$0x1] %vm180, 0.0
      %194 = vst.msk [vmem:[#allocation2 + $0x138] sm:$0x1] %vm180, 0.0
      %195 = vst.msk [vmem:[#allocation2 + $0x150] sm:$0x1] %vm180, 0.0
      %196 = vst.msk [vmem:[#allocation2 + $0x168] sm:$0x1] %vm180, 0.0
      %197 = vst.msk [vmem:[#allocation2 + $0x180] sm:$0x1] %vm180, 0.0
      %198 = vst.msk [vmem:[#allocation2 + $0x198] sm:$0x1] %vm180, 0.0
      %199 = vst.msk [vmem:[#allocation2 + $0x11] sm:$0x1] %vm180, 0.0
      %200 = vst.msk [vmem:[#allocation2 + $0x29] sm:$0x1] %vm180, 0.0
      %201 = vst.msk [vmem:[#allocation2 + $0x41] sm:$0x1] %vm180, 0.0
      %202 = vst.msk [vmem:[#allocation2 + $0x59] sm:$0x1] %vm180, 0.0
      %203 = vst.msk [vmem:[#allocation2 + $0x71] sm:$0x1] %vm180, 0.0
      %204 = vst.msk [vmem:[#allocation2 + $0x89] sm:$0x1] %vm180, 0.0
      %205 = vst.msk [vmem:[#allocation2 + $0xa1] sm:$0x1] %vm180, 0.0
      %206 = vst.msk [vmem:[#allocation2 + $0xb9] sm:$0x1] %vm180, 0.0
      %207 = vst.msk [vmem:[#allocation2 + $0xd1] sm:$0x1] %vm180, 0.0
      %208 = vst.msk [vmem:[#allocation2 + $0xe9] sm:$0x1] %vm180, 0.0
      %209 = vst.msk [vmem:[#allocation2 + $0x101] sm:$0x1] %vm180, 0.0
      %210 = vst.msk [vmem:[#allocation2 + $0x119] sm:$0x1] %vm180, 0.0
      %211 = vst.msk [vmem:[#allocation2 + $0x131] sm:$0x1] %vm180, 0.0
      %212 = vst.msk [vmem:[#allocation2 + $0x149] sm:$0x1] %vm180, 0.0
      %213 = vst.msk [vmem:[#allocation2 + $0x161] sm:$0x1] %vm180, 0.0
      %214 = vst.msk [vmem:[#allocation2 + $0x179] sm:$0x1] %vm180, 0.0
      %215 = vst.msk [vmem:[#allocation2 + $0x191] sm:$0x1] %vm180, 0.0
      %216 = vst.msk [vmem:[#allocation2 + $0x1a9] sm:$0x1] %vm180, 0.0
      %v217 = vld [vmem:[%s165] sm:$0xff]
      %v218 = vld [vmem:[%s165 + $0x8] sm:$0xff]
      %v219 = vld [vmem:[%s165 + $0x10] sm:$0xff]
      %v220 = vld [vmem:[%s165 + $0x18] sm:$0xff]
      %v221 = vld [vmem:[%s165 + $0x20] sm:$0xff]
      %v222 = vld [vmem:[%s165 + $0x28] sm:$0xff]
      %v223 = vld [vmem:[%s165 + $0x30] sm:$0xff]
      %v224 = vld [vmem:[%s165 + $0x38] sm:$0xff]
      %v225 = vld [vmem:[%s165 + $0x40] sm:$0xff]
      %v226 = vld [vmem:[%s165 + $0x48] sm:$0xff]
      %v227 = vld [vmem:[%s165 + $0x50] sm:$0xff]
      %v228 = vld [vmem:[%s165 + $0x58] sm:$0xff]
      %v229 = vld [vmem:[%s165 + $0x60] sm:$0xff]
      %v230 = vld [vmem:[%s165 + $0x68] sm:$0xff]
      %v231 = vld [vmem:[%s165 + $0x70] sm:$0xff]
      %v232 = vld [vmem:[%s165 + $0x78] sm:$0xff]
      %v233 = vld [vmem:[%s165 + $0x80] sm:$0xff]
      %v234 = vld [vmem:[%s165 + $0x88] sm:$0xff]
      %v235 = vld [vmem:[%s165 + $0x90] sm:$0xff]
      %v236 = vld [vmem:[%s165 + $0x98] sm:$0xff]
      %v237 = vld [vmem:[%s165 + $0xa0] sm:$0xff]
      %v238 = vld [vmem:[%s165 + $0xa8] sm:$0xff]
      %v239 = vld [vmem:[%s165 + $0xb0] sm:$0xff]
      %v240 = vld [vmem:[%s165 + $0xb8] sm:$0xff]
      %v241 = vld [vmem:[%s165 + $0xc0] sm:$0xff]
      %v242 = vld [vmem:[%s165 + $0xc8] sm:$0xff]
      %v243 = vld [vmem:[%s165 + $0xd0] sm:$0xff]
      %v244 = vld [vmem:[%s165 + $0xd8] sm:$0xff]
      %v245 = vld [vmem:[%s165 + $0xe0] sm:$0xff]
      %v246 = vld [vmem:[%s165 + $0xe8] sm:$0xff]
      %v247 = vld [vmem:[%s165 + $0xf0] sm:$0xff]
      %v248 = vld [vmem:[%s165 + $0xf8] sm:$0xff]
      %s249 = scalar_lea.vmem [#allocation2], 24
      %250 = vst.msk [vmem:[%s249 + $0x1] sm:$0xff] %vm171, %v217
      %251 = vst.msk [vmem:[%s249 + $0x9] sm:$0xff] %vm171, %v218
      %252 = vst.msk [vmem:[%s249 + $0x19] sm:$0xff] %vm171, %v219
      %253 = vst.msk [vmem:[%s249 + $0x21] sm:$0xff] %vm171, %v220
      %254 = vst.msk [vmem:[%s249 + $0x31] sm:$0xff] %vm171, %v221
      %255 = vst.msk [vmem:[%s249 + $0x39] sm:$0xff] %vm171, %v222
      %256 = vst.msk [vmem:[%s249 + $0x49] sm:$0xff] %vm171, %v223
      %257 = vst.msk [vmem:[%s249 + $0x51] sm:$0xff] %vm171, %v224
      %258 = vst.msk [vmem:[%s249 + $0x61] sm:$0xff] %vm171, %v225
      %259 = vst.msk [vmem:[%s249 + $0x69] sm:$0xff] %vm171, %v226
      %260 = vst.msk [vmem:[%s249 + $0x79] sm:$0xff] %vm171, %v227
      %261 = vst.msk [vmem:[%s249 + $0x81] sm:$0xff] %vm171, %v228
      %262 = vst.msk [vmem:[%s249 + $0x91] sm:$0xff] %vm171, %v229
      %263 = vst.msk [vmem:[%s249 + $0x99] sm:$0xff] %vm171, %v230
      %264 = vst.msk [vmem:[%s249 + $0xa9] sm:$0xff] %vm171, %v231
      %265 = vst.msk [vmem:[%s249 + $0xb1] sm:$0xff] %vm171, %v232
      %266 = vst.msk [vmem:[%s249 + $0xc1] sm:$0xff] %vm171, %v233
      %267 = vst.msk [vmem:[%s249 + $0xc9] sm:$0xff] %vm171, %v234
      %268 = vst.msk [vmem:[%s249 + $0xd9] sm:$0xff] %vm171, %v235
      %269 = vst.msk [vmem:[%s249 + $0xe1] sm:$0xff] %vm171, %v236
      %270 = vst.msk [vmem:[%s249 + $0xf1] sm:$0xff] %vm171, %v237
      %271 = vst.msk [vmem:[%s249 + $0xf9] sm:$0xff] %vm171, %v238
      %272 = vst.msk [vmem:[%s249 + $0x109] sm:$0xff] %vm171, %v239
      %273 = vst.msk [vmem:[%s249 + $0x111] sm:$0xff] %vm171, %v240
      %274 = vst.msk [vmem:[%s249 + $0x121] sm:$0xff] %vm171, %v241
      %275 = vst.msk [vmem:[%s249 + $0x129] sm:$0xff] %vm171, %v242
      %276 = vst.msk [vmem:[%s249 + $0x139] sm:$0xff] %vm171, %v243
      %277 = vst.msk [vmem:[%s249 + $0x141] sm:$0xff] %vm171, %v244
      %278 = vst.msk [vmem:[%s249 + $0x151] sm:$0xff] %vm171, %v245
      %279 = vst.msk [vmem:[%s249 + $0x159] sm:$0xff] %vm171, %v246
      %280 = vst.msk [vmem:[%s249 + $0x169] sm:$0xff] %vm171, %v247
      %281 = vst.msk [vmem:[%s249 + $0x171] sm:$0xff] %vm171, %v248
      %v282 = vld [vmem:[#allocation2] sm:$0xff]
      %v283 = vld [vmem:[#allocation2 + $0x8] sm:$0xff]
      %v284 = vld [vmem:[#allocation2 + $0x10] sm:$0x3]
      %v285 = vld [vmem:[#allocation2 + $0x18] sm:$0xff]
      %v286 = vld [vmem:[#allocation2 + $0x20] sm:$0xff]
      %v287 = vld [vmem:[#allocation2 + $0x28] sm:$0x3]
      %v288 = vld [vmem:[#allocation2 + $0x30] sm:$0xff]
      %v289 = vld [vmem:[#allocation2 + $0x38] sm:$0xff]
      %v290 = vld [vmem:[#allocation2 + $0x40] sm:$0x3]
      %v291 = vld [vmem:[#allocation2 + $0x48] sm:$0xff]
      %v292 = vld [vmem:[#allocation2 + $0x50] sm:$0xff]
      %v293 = vld [vmem:[#allocation2 + $0x58] sm:$0x3]
      %v294 = vld [vmem:[#allocation2 + $0x60] sm:$0xff]
      %v295 = vld [vmem:[#allocation2 + $0x68] sm:$0xff]
      %v296 = vld [vmem:[#allocation2 + $0x70] sm:$0x3]
      %v297 = vld [vmem:[#allocation2 + $0x78] sm:$0xff]
      %v298 = vld [vmem:[#allocation2 + $0x80] sm:$0xff]
      %v299 = vld [vmem:[#allocation2 + $0x88] sm:$0x3]
      %v300 = vld [vmem:[#allocation2 + $0x90] sm:$0xff]
      %v301 = vld [vmem:[#allocation2 + $0x98] sm:$0xff]
      %v302 = vld [vmem:[#allocation2 + $0xa0] sm:$0x3]
      %v303 = vld [vmem:[#allocation2 + $0xa8] sm:$0xff]
      %v304 = vld [vmem:[#allocation2 + $0xb0] sm:$0xff]
      %v305 = vld [vmem:[#allocation2 + $0xb8] sm:$0x3]
      %v306 = vld [vmem:[#allocation2 + $0xc0] sm:$0xff]
      %v307 = vld [vmem:[#allocation2 + $0xc8] sm:$0xff]
      %v308 = vld [vmem:[#allocation2 + $0xd0] sm:$0x3]
      %v309 = vld [vmem:[#allocation2 + $0xd8] sm:$0xff]
      %v310 = vld [vmem:[#allocation2 + $0xe0] sm:$0xff]
      %v311 = vld [vmem:[#allocation2 + $0xe8] sm:$0x3]
      %v312 = vld [vmem:[#allocation2 + $0xf0] sm:$0xff]
      %v313 = vld [vmem:[#allocation2 + $0xf8] sm:$0xff]
      %v314 = vld [vmem:[#allocation2 + $0x100] sm:$0x3]
      %v315 = vld [vmem:[#allocation2 + $0x108] sm:$0xff]
      %v316 = vld [vmem:[#allocation2 + $0x110] sm:$0xff]
      %v317 = vld [vmem:[#allocation2 + $0x118] sm:$0x3]
      %v318 = vld [vmem:[#allocation2 + $0x120] sm:$0xff]
      %v319 = vld [vmem:[#allocation2 + $0x128] sm:$0xff]
      %v320 = vld [vmem:[#allocation2 + $0x130] sm:$0x3]
      %v321 = vld [vmem:[#allocation2 + $0x138] sm:$0xff]
      %v322 = vld [vmem:[#allocation2 + $0x140] sm:$0xff]
      %v323 = vld [vmem:[#allocation2 + $0x148] sm:$0x3]
      %v324 = vld [vmem:[#allocation2 + $0x150] sm:$0xff]
      %v325 = vld [vmem:[#allocation2 + $0x158] sm:$0xff]
      %v326 = vld [vmem:[#allocation2 + $0x160] sm:$0x3]
      %v327 = vld [vmem:[#allocation2 + $0x168] sm:$0xff]
      %v328 = vld [vmem:[#allocation2 + $0x170] sm:$0xff]
      %v329 = vld [vmem:[#allocation2 + $0x178] sm:$0x3]
      %v330 = vld [vmem:[#allocation2 + $0x180] sm:$0xff]
      %v331 = vld [vmem:[#allocation2 + $0x188] sm:$0xff]
      %v332 = vld [vmem:[#allocation2 + $0x190] sm:$0x3]
      %v333 = vld [vmem:[#allocation2 + $0x198] sm:$0xff]
      %v334 = vld [vmem:[#allocation2 + $0x1a0] sm:$0xff]
      %v335 = vld [vmem:[#allocation2 + $0x1a8] sm:$0x3]
      %336 = vst.msk [vmem:[#allocation3] sm:$0xff] %vm171, %v282
      %337 = vst.msk [vmem:[#allocation3 + $0x8] sm:$0xff] %vm171, %v283
      %338 = vst.msk [vmem:[#allocation3 + $0x10] sm:$0xff] %vm171, %v285
      %339 = vst.msk [vmem:[#allocation3 + $0x18] sm:$0xff] %vm171, %v286
      %340 = vst.msk [vmem:[#allocation3 + $0x20] sm:$0xff] %vm171, %v288
      %341 = vst.msk [vmem:[#allocation3 + $0x28] sm:$0xff] %vm171, %v289
      %342 = vst.msk [vmem:[#allocation3 + $0x30] sm:$0xff] %vm171, %v291
      %343 = vst.msk [vmem:[#allocation3 + $0x38] sm:$0xff] %vm171, %v292
      %344 = vst.msk [vmem:[#allocation3 + $0x40] sm:$0xff] %vm171, %v294
      %345 = vst.msk [vmem:[#allocation3 + $0x48] sm:$0xff] %vm171, %v295
      %346 = vst.msk [vmem:[#allocation3 + $0x50] sm:$0xff] %vm171, %v297
      %347 = vst.msk [vmem:[#allocation3 + $0x58] sm:$0xff] %vm171, %v298
      %348 = vst.msk [vmem:[#allocation3 + $0x60] sm:$0xff] %vm171, %v300
      %349 = vst.msk [vmem:[#allocation3 + $0x68] sm:$0xff] %vm171, %v301
      %350 = vst.msk [vmem:[#allocation3 + $0x70] sm:$0xff] %vm171, %v303
      %351 = vst.msk [vmem:[#allocation3 + $0x78] sm:$0xff] %vm171, %v304
      %352 = vst.msk [vmem:[#allocation3 + $0x80] sm:$0xff] %vm171, %v306
      %353 = vst.msk [vmem:[#allocation3 + $0x88] sm:$0xff] %vm171, %v307
      %354 = vst.msk [vmem:[#allocation3 + $0x90] sm:$0xff] %vm171, %v309
      %355 = vst.msk [vmem:[#allocation3 + $0x98] sm:$0xff] %vm171, %v310
      %356 = vst.msk [vmem:[#allocation3 + $0xa0] sm:$0xff] %vm171, %v312
      %357 = vst.msk [vmem:[#allocation3 + $0xa8] sm:$0xff] %vm171, %v313
      %358 = vst.msk [vmem:[#allocation3 + $0xb0] sm:$0xff] %vm171, %v315
      %359 = vst.msk [vmem:[#allocation3 + $0xb8] sm:$0xff] %vm171, %v316
      %360 = vst.msk [vmem:[#allocation3 + $0xc0] sm:$0xff] %vm171, %v318
      %361 = vst.msk [vmem:[#allocation3 + $0xc8] sm:$0xff] %vm171, %v319
      %362 = vst.msk [vmem:[#allocation3 + $0xd0] sm:$0xff] %vm171, %v321
      %363 = vst.msk [vmem:[#allocation3 + $0xd8] sm:$0xff] %vm171, %v322
      %364 = vst.msk [vmem:[#allocation3 + $0xe0] sm:$0xff] %vm171, %v324
      %365 = vst.msk [vmem:[#allocation3 + $0xe8] sm:$0xff] %vm171, %v325
      %366 = vst.msk [vmem:[#allocation3 + $0xf0] sm:$0xff] %vm171, %v327
      %367 = vst.msk [vmem:[#allocation3 + $0xf8] sm:$0xff] %vm171, %v328
      %vm416 = vcmask 1046528
      %v417 = vrot.slane %v282, 1
      %v418 = vrot.slane %v283, 1
      %v419 = vsel %vm416, %v417, %v418
      %v420 = vrot.slane %v284, 1
      %v421 = vsel %vm416, %v418, %v420
      %v422 = vrot.slane %v285, 1
      %v423 = vrot.slane %v286, 1
      %v424 = vsel %vm416, %v422, %v423
      %v425 = vrot.slane %v287, 1
      %v426 = vsel %vm416, %v423, %v425
      %v427 = vrot.slane %v288, 1
      %v428 = vrot.slane %v289, 1
      %v429 = vsel %vm416, %v427, %v428
      %v430 = vrot.slane %v290, 1
      %v431 = vsel %vm416, %v428, %v430
      %v432 = vrot.slane %v291, 1
      %v433 = vrot.slane %v292, 1
      %v434 = vsel %vm416, %v432, %v433
      %v435 = vrot.slane %v293, 1
      %v436 = vsel %vm416, %v433, %v435
      %v437 = vrot.slane %v294, 1
      %v438 = vrot.slane %v295, 1
      %v439 = vsel %vm416, %v437, %v438
      %v440 = vrot.slane %v296, 1
      %v441 = vsel %vm416, %v438, %v440
      %v442 = vrot.slane %v297, 1
      %v443 = vrot.slane %v298, 1
      %v444 = vsel %vm416, %v442, %v443
      %v445 = vrot.slane %v299, 1
      %v446 = vsel %vm416, %v443, %v445
      %v447 = vrot.slane %v300, 1
      %v448 = vrot.slane %v301, 1
      %v449 = vsel %vm416, %v447, %v448
      %v450 = vrot.slane %v302, 1
      %v451 = vsel %vm416, %v448, %v450
      %v452 = vrot.slane %v303, 1
      %v453 = vrot.slane %v304, 1
      %v454 = vsel %vm416, %v452, %v453
      %v455 = vrot.slane %v305, 1
      %v456 = vsel %vm416, %v453, %v455
      %v457 = vrot.slane %v306, 1
      %v458 = vrot.slane %v307, 1
      %v459 = vsel %vm416, %v457, %v458
      %v460 = vrot.slane %v308, 1
      %v461 = vsel %vm416, %v458, %v460
      %v462 = vrot.slane %v309, 1
      %v463 = vrot.slane %v310, 1
      %v464 = vsel %vm416, %v462, %v463
      %v465 = vrot.slane %v311, 1
      %v466 = vsel %vm416, %v463, %v465
      %v467 = vrot.slane %v312, 1
      %v468 = vrot.slane %v313, 1
      %v469 = vsel %vm416, %v467, %v468
      %v470 = vrot.slane %v314, 1
      %v471 = vsel %vm416, %v468, %v470
      %v472 = vrot.slane %v315, 1
      %v473 = vrot.slane %v316, 1
      %v474 = vsel %vm416, %v472, %v473
      %v475 = vrot.slane %v317, 1
      %v476 = vsel %vm416, %v473, %v475
      %v477 = vrot.slane %v318, 1
      %v478 = vrot.slane %v319, 1
      %v479 = vsel %vm416, %v477, %v478
      %v480 = vrot.slane %v320, 1
      %v481 = vsel %vm416, %v478, %v480
      %v482 = vrot.slane %v321, 1
      %v483 = vrot.slane %v322, 1
      %v484 = vsel %vm416, %v482, %v483
      %v485 = vrot.slane %v323, 1
      %v486 = vsel %vm416, %v483, %v485
      %v487 = vrot.slane %v324, 1
      %v488 = vrot.slane %v325, 1
      %v489 = vsel %vm416, %v487, %v488
      %v490 = vrot.slane %v326, 1
      %v491 = vsel %vm416, %v488, %v490
      %v492 = vrot.slane %v327, 1
      %v493 = vrot.slane %v328, 1
      %v494 = vsel %vm416, %v492, %v493
      %v495 = vrot.slane %v329, 1
      %v496 = vsel %vm416, %v493, %v495
      %497 = vrot.lane.b32.xlu0 %v419, 4
      %v498 = vpop.permute.xlu0 %497
      %499 = vrot.lane.b32.xlu0 %v421, 4
      %v500 = vpop.permute.xlu0 %499
      %501 = vrot.lane.b32.xlu0 %v424, 4
      %v502 = vpop.permute.xlu0 %501
      %503 = vrot.lane.b32.xlu0 %v426, 4
      %v504 = vpop.permute.xlu0 %503
      %505 = vrot.lane.b32.xlu0 %v429, 4
      %v506 = vpop.permute.xlu0 %505
      %507 = vrot.lane.b32.xlu0 %v431, 4
      %v508 = vpop.permute.xlu0 %507
      %509 = vrot.lane.b32.xlu0 %v434, 4
      %v510 = vpop.permute.xlu0 %509
      %511 = vrot.lane.b32.xlu0 %v436, 4
      %v512 = vpop.permute.xlu0 %511
      %513 = vrot.lane.b32.xlu0 %v439, 4
      %v514 = vpop.permute.xlu0 %513
      %515 = vrot.lane.b32.xlu0 %v441, 4
      %v516 = vpop.permute.xlu0 %515
      %517 = vrot.lane.b32.xlu0 %v444, 4
      %v518 = vpop.permute.xlu0 %517
      %519 = vrot.lane.b32.xlu0 %v446, 4
      %v520 = vpop.permute.xlu0 %519
      %521 = vrot.lane.b32.xlu0 %v449, 4
      %v522 = vpop.permute.xlu0 %521
      %523 = vrot.lane.b32.xlu0 %v451, 4
      %v524 = vpop.permute.xlu0 %523
      %525 = vrot.lane.b32.xlu0 %v454, 4
      %v526 = vpop.permute.xlu0 %525
      %527 = vrot.lane.b32.xlu0 %v456, 4
      %v528 = vpop.permute.xlu0 %527
      %529 = vrot.lane.b32.xlu0 %v459, 4
      %v530 = vpop.permute.xlu0 %529
      %531 = vrot.lane.b32.xlu0 %v461, 4
      %v532 = vpop.permute.xlu0 %531
      %533 = vrot.lane.b32.xlu0 %v464, 4
      %v534 = vpop.permute.xlu0 %533
      %535 = vrot.lane.b32.xlu0 %v466, 4
      %v536 = vpop.permute.xlu0 %535
      %537 = vrot.lane.b32.xlu0 %v469, 4
      %v538 = vpop.permute.xlu0 %537
      %539 = vrot.lane.b32.xlu0 %v471, 4
      %v540 = vpop.permute.xlu0 %539
      %541 = vrot.lane.b32.xlu0 %v474, 4
      %v542 = vpop.permute.xlu0 %541
      %543 = vrot.lane.b32.xlu0 %v476, 4
      %v544 = vpop.permute.xlu0 %543
      %545 = vrot.lane.b32.xlu0 %v479, 4
      %v546 = vpop.permute.xlu0 %545
      %547 = vrot.lane.b32.xlu0 %v481, 4
      %v548 = vpop.permute.xlu0 %547
      %549 = vrot.lane.b32.xlu0 %v484, 4
      %v550 = vpop.permute.xlu0 %549
      %551 = vrot.lane.b32.xlu0 %v486, 4
      %v552 = vpop.permute.xlu0 %551
      %553 = vrot.lane.b32.xlu0 %v489, 4
      %v554 = vpop.permute.xlu0 %553
      %555 = vrot.lane.b32.xlu0 %v491, 4
      %v556 = vpop.permute.xlu0 %555
      %557 = vrot.lane.b32.xlu0 %v494, 4
      %v558 = vpop.permute.xlu0 %557
      %559 = vrot.lane.b32.xlu0 %v496, 4
      %v560 = vpop.permute.xlu0 %559
      %vm593 = vcmask 64544
      %594 = vst.msk [vmem:[#allocation3] sm:$0xff] %vm593, %v498
      %595 = vst.msk [vmem:[#allocation3 + $0x8] sm:$0xff] %vm593, %v500
      %596 = vst.msk [vmem:[#allocation3 + $0x10] sm:$0xff] %vm593, %v502
      %597 = vst.msk [vmem:[#allocation3 + $0x18] sm:$0xff] %vm593, %v504
      %598 = vst.msk [vmem:[#allocation3 + $0x20] sm:$0xff] %vm593, %v506
      %599 = vst.msk [vmem:[#allocation3 + $0x28] sm:$0xff] %vm593, %v508
      %600 = vst.msk [vmem:[#allocation3 + $0x30] sm:$0xff] %vm593, %v510
      %601 = vst.msk [vmem:[#allocation3 + $0x38] sm:$0xff] %vm593, %v512
      %602 = vst.msk [vmem:[#allocation3 + $0x40] sm:$0xff] %vm593, %v514
      %603 = vst.msk [vmem:[#allocation3 + $0x48] sm:$0xff] %vm593, %v516
      %604 = vst.msk [vmem:[#allocation3 + $0x50] sm:$0xff] %vm593, %v518
      %605 = vst.msk [vmem:[#allocation3 + $0x58] sm:$0xff] %vm593, %v520
      %606 = vst.msk [vmem:[#allocation3 + $0x60] sm:$0xff] %vm593, %v522
      %607 = vst.msk [vmem:[#allocation3 + $0x68] sm:$0xff] %vm593, %v524
      %608 = vst.msk [vmem:[#allocation3 + $0x70] sm:$0xff] %vm593, %v526
      %609 = vst.msk [vmem:[#allocation3 + $0x78] sm:$0xff] %vm593, %v528
      %610 = vst.msk [vmem:[#allocation3 + $0x80] sm:$0xff] %vm593, %v530
      %611 = vst.msk [vmem:[#allocation3 + $0x88] sm:$0xff] %vm593, %v532
      %612 = vst.msk [vmem:[#allocation3 + $0x90] sm:$0xff] %vm593, %v534
      %613 = vst.msk [vmem:[#allocation3 + $0x98] sm:$0xff] %vm593, %v536
      %614 = vst.msk [vmem:[#allocation3 + $0xa0] sm:$0xff] %vm593, %v538
      %615 = vst.msk [vmem:[#allocation3 + $0xa8] sm:$0xff] %vm593, %v540
      %616 = vst.msk [vmem:[#allocation3 + $0xb0] sm:$0xff] %vm593, %v542
      %617 = vst.msk [vmem:[#allocation3 + $0xb8] sm:$0xff] %vm593, %v544
      %618 = vst.msk [vmem:[#allocation3 + $0xc0] sm:$0xff] %vm593, %v546
      %619 = vst.msk [vmem:[#allocation3 + $0xc8] sm:$0xff] %vm593, %v548
      %620 = vst.msk [vmem:[#allocation3 + $0xd0] sm:$0xff] %vm593, %v550
      %621 = vst.msk [vmem:[#allocation3 + $0xd8] sm:$0xff] %vm593, %v552
      %622 = vst.msk [vmem:[#allocation3 + $0xe0] sm:$0xff] %vm593, %v554
      %623 = vst.msk [vmem:[#allocation3 + $0xe8] sm:$0xff] %vm593, %v556
      %624 = vst.msk [vmem:[#allocation3 + $0xf0] sm:$0xff] %vm593, %v558
      %625 = vst.msk [vmem:[#allocation3 + $0xf8] sm:$0xff] %vm593, %v560
      %vm626 = vcmask 1045504
      %v627 = vrot.slane %v282, 2
      %v628 = vrot.slane %v283, 2
      %v629 = vsel %vm626, %v627, %v628
      %v630 = vrot.slane %v284, 2
      %v631 = vsel %vm626, %v628, %v630
      %v632 = vrot.slane %v285, 2
      %v633 = vrot.slane %v286, 2
      %v634 = vsel %vm626, %v632, %v633
      %v635 = vrot.slane %v287, 2
      %v636 = vsel %vm626, %v633, %v635
      %v637 = vrot.slane %v288, 2
      %v638 = vrot.slane %v289, 2
      %v639 = vsel %vm626, %v637, %v638
      %v640 = vrot.slane %v290, 2
      %v641 = vsel %vm626, %v638, %v640
      %v642 = vrot.slane %v291, 2
      %v643 = vrot.slane %v292, 2
      %v644 = vsel %vm626, %v642, %v643
      %v645 = vrot.slane %v293, 2
      %v646 = vsel %vm626, %v643, %v645
      %v647 = vrot.slane %v294, 2
      %v648 = vrot.slane %v295, 2
      %v649 = vsel %vm626, %v647, %v648
      %v650 = vrot.slane %v296, 2
      %v651 = vsel %vm626, %v648, %v650
      %v652 = vrot.slane %v297, 2
      %v653 = vrot.slane %v298, 2
      %v654 = vsel %vm626, %v652, %v653
      %v655 = vrot.slane %v299, 2
      %v656 = vsel %vm626, %v653, %v655
      %v657 = vrot.slane %v300, 2
      %v658 = vrot.slane %v301, 2
      %v659 = vsel %vm626, %v657, %v658
      %v660 = vrot.slane %v302, 2
      %v661 = vsel %vm626, %v658, %v660
      %v662 = vrot.slane %v303, 2
      %v663 = vrot.slane %v304, 2
      %v664 = vsel %vm626, %v662, %v663
      %v665 = vrot.slane %v305, 2
      %v666 = vsel %vm626, %v663, %v665
      %v667 = vrot.slane %v306, 2
      %v668 = vrot.slane %v307, 2
      %v669 = vsel %vm626, %v667, %v668
      %v670 = vrot.slane %v308, 2
      %v671 = vsel %vm626, %v668, %v670
      %v672 = vrot.slane %v309, 2
      %v673 = vrot.slane %v310, 2
      %v674 = vsel %vm626, %v672, %v673
      %v675 = vrot.slane %v311, 2
      %v676 = vsel %vm626, %v673, %v675
      %v677 = vrot.slane %v312, 2
      %v678 = vrot.slane %v313, 2
      %v679 = vsel %vm626, %v677, %v678
      %v680 = vrot.slane %v314, 2
      %v681 = vsel %vm626, %v678, %v680
      %v682 = vrot.slane %v315, 2
      %v683 = vrot.slane %v316, 2
      %v684 = vsel %vm626, %v682, %v683
      %v685 = vrot.slane %v317, 2
      %v686 = vsel %vm626, %v683, %v685
      %v687 = vrot.slane %v318, 2
      %v688 = vrot.slane %v319, 2
      %v689 = vsel %vm626, %v687, %v688
      %v690 = vrot.slane %v320, 2
      %v691 = vsel %vm626, %v688, %v690
      %v692 = vrot.slane %v321, 2
      %v693 = vrot.slane %v322, 2
      %v694 = vsel %vm626, %v692, %v693
      %v695 = vrot.slane %v323, 2
      %v696 = vsel %vm626, %v693, %v695
      %v697 = vrot.slane %v324, 2
      %v698 = vrot.slane %v325, 2
      %v699 = vsel %vm626, %v697, %v698
      %v700 = vrot.slane %v326, 2
      %v701 = vsel %vm626, %v698, %v700
      %v702 = vrot.slane %v327, 2
      %v703 = vrot.slane %v328, 2
      %v704 = vsel %vm626, %v702, %v703
      %v705 = vrot.slane %v329, 2
      %v706 = vsel %vm626, %v703, %v705
      %707 = vrot.lane.b32.xlu0 %v629, 8
      %v708 = vpop.permute.xlu0 %707
      %709 = vrot.lane.b32.xlu0 %v631, 8
      %v710 = vpop.permute.xlu0 %709
      %711 = vrot.lane.b32.xlu0 %v634, 8
      %v712 = vpop.permute.xlu0 %711
      %713 = vrot.lane.b32.xlu0 %v636, 8
      %v714 = vpop.permute.xlu0 %713
      %715 = vrot.lane.b32.xlu0 %v639, 8
      %v716 = vpop.permute.xlu0 %715
      %717 = vrot.lane.b32.xlu0 %v641, 8
      %v718 = vpop.permute.xlu0 %717
      %719 = vrot.lane.b32.xlu0 %v644, 8
      %v720 = vpop.permute.xlu0 %719
      %721 = vrot.lane.b32.xlu0 %v646, 8
      %v722 = vpop.permute.xlu0 %721
      %723 = vrot.lane.b32.xlu0 %v649, 8
      %v724 = vpop.permute.xlu0 %723
      %725 = vrot.lane.b32.xlu0 %v651, 8
      %v726 = vpop.permute.xlu0 %725
      %727 = vrot.lane.b32.xlu0 %v654, 8
      %v728 = vpop.permute.xlu0 %727
      %729 = vrot.lane.b32.xlu0 %v656, 8
      %v730 = vpop.permute.xlu0 %729
      %731 = vrot.lane.b32.xlu0 %v659, 8
      %v732 = vpop.permute.xlu0 %731
      %733 = vrot.lane.b32.xlu0 %v661, 8
      %v734 = vpop.permute.xlu0 %733
      %735 = vrot.lane.b32.xlu0 %v664, 8
      %v736 = vpop.permute.xlu0 %735
      %737 = vrot.lane.b32.xlu0 %v666, 8
      %v738 = vpop.permute.xlu0 %737
      %739 = vrot.lane.b32.xlu0 %v669, 8
      %v740 = vpop.permute.xlu0 %739
      %741 = vrot.lane.b32.xlu0 %v671, 8
      %v742 = vpop.permute.xlu0 %741
      %743 = vrot.lane.b32.xlu0 %v674, 8
      %v744 = vpop.permute.xlu0 %743
      %745 = vrot.lane.b32.xlu0 %v676, 8
      %v746 = vpop.permute.xlu0 %745
      %747 = vrot.lane.b32.xlu0 %v679, 8
      %v748 = vpop.permute.xlu0 %747
      %749 = vrot.lane.b32.xlu0 %v681, 8
      %v750 = vpop.permute.xlu0 %749
      %751 = vrot.lane.b32.xlu0 %v684, 8
      %v752 = vpop.permute.xlu0 %751
      %753 = vrot.lane.b32.xlu0 %v686, 8
      %v754 = vpop.permute.xlu0 %753
      %755 = vrot.lane.b32.xlu0 %v689, 8
      %v756 = vpop.permute.xlu0 %755
      %757 = vrot.lane.b32.xlu0 %v691, 8
      %v758 = vpop.permute.xlu0 %757
      %759 = vrot.lane.b32.xlu0 %v694, 8
      %v760 = vpop.permute.xlu0 %759
      %761 = vrot.lane.b32.xlu0 %v696, 8
      %v762 = vpop.permute.xlu0 %761
      %763 = vrot.lane.b32.xlu0 %v699, 8
      %v764 = vpop.permute.xlu0 %763
      %765 = vrot.lane.b32.xlu0 %v701, 8
      %v766 = vpop.permute.xlu0 %765
      %767 = vrot.lane.b32.xlu0 %v704, 8
      %v768 = vpop.permute.xlu0 %767
      %769 = vrot.lane.b32.xlu0 %v706, 8
      %v770 = vpop.permute.xlu0 %769
      %vm803 = vcmask 97344
      %804 = vst.msk [vmem:[#allocation3] sm:$0xff] %vm803, %v708
      %805 = vst.msk [vmem:[#allocation3 + $0x8] sm:$0xff] %vm803, %v710
      %806 = vst.msk [vmem:[#allocation3 + $0x10] sm:$0xff] %vm803, %v712
      %807 = vst.msk [vmem:[#allocation3 + $0x18] sm:$0xff] %vm803, %v714
      %808 = vst.msk [vmem:[#allocation3 + $0x20] sm:$0xff] %vm803, %v716
      %809 = vst.msk [vmem:[#allocation3 + $0x28] sm:$0xff] %vm803, %v718
      %810 = vst.msk [vmem:[#allocation3 + $0x30] sm:$0xff] %vm803, %v720
      %811 = vst.msk [vmem:[#allocation3 + $0x38] sm:$0xff] %vm803, %v722
      %812 = vst.msk [vmem:[#allocation3 + $0x40] sm:$0xff] %vm803, %v724
      %813 = vst.msk [vmem:[#allocation3 + $0x48] sm:$0xff] %vm803, %v726
      %814 = vst.msk [vmem:[#allocation3 + $0x50] sm:$0xff] %vm803, %v728
      %815 = vst.msk [vmem:[#allocation3 + $0x58] sm:$0xff] %vm803, %v730
      %816 = vst.msk [vmem:[#allocation3 + $0x60] sm:$0xff] %vm803, %v732
      %817 = vst.msk [vmem:[#allocation3 + $0x68] sm:$0xff] %vm803, %v734
      %818 = vst.msk [vmem:[#allocation3 + $0x70] sm:$0xff] %vm803, %v736
      %819 = vst.msk [vmem:[#allocation3 + $0x78] sm:$0xff] %vm803, %v738
      %820 = vst.msk [vmem:[#allocation3 + $0x80] sm:$0xff] %vm803, %v740
      %821 = vst.msk [vmem:[#allocation3 + $0x88] sm:$0xff] %vm803, %v742
      %822 = vst.msk [vmem:[#allocation3 + $0x90] sm:$0xff] %vm803, %v744
      %823 = vst.msk [vmem:[#allocation3 + $0x98] sm:$0xff] %vm803, %v746
      %824 = vst.msk [vmem:[#allocation3 + $0xa0] sm:$0xff] %vm803, %v748
      %825 = vst.msk [vmem:[#allocation3 + $0xa8] sm:$0xff] %vm803, %v750
      %826 = vst.msk [vmem:[#allocation3 + $0xb0] sm:$0xff] %vm803, %v752
      %827 = vst.msk [vmem:[#allocation3 + $0xb8] sm:$0xff] %vm803, %v754
      %828 = vst.msk [vmem:[#allocation3 + $0xc0] sm:$0xff] %vm803, %v756
      %829 = vst.msk [vmem:[#allocation3 + $0xc8] sm:$0xff] %vm803, %v758
      %830 = vst.msk [vmem:[#allocation3 + $0xd0] sm:$0xff] %vm803, %v760
      %831 = vst.msk [vmem:[#allocation3 + $0xd8] sm:$0xff] %vm803, %v762
      %832 = vst.msk [vmem:[#allocation3 + $0xe0] sm:$0xff] %vm803, %v764
      %833 = vst.msk [vmem:[#allocation3 + $0xe8] sm:$0xff] %vm803, %v766
      %834 = vst.msk [vmem:[#allocation3 + $0xf0] sm:$0xff] %vm803, %v768
      %835 = vst.msk [vmem:[#allocation3 + $0xf8] sm:$0xff] %vm803, %v770
      %838 = vrot.lane.b32.xlu0 %v285, 12
      %v839 = vpop.permute.xlu0 %838
      %840 = vrot.lane.b32.xlu0 %v286, 12
      %v841 = vpop.permute.xlu0 %840
      %842 = vrot.lane.b32.xlu0 %v288, 12
      %v843 = vpop.permute.xlu0 %842
      %844 = vrot.lane.b32.xlu0 %v289, 12
      %v845 = vpop.permute.xlu0 %844
      %846 = vrot.lane.b32.xlu0 %v291, 12
      %v847 = vpop.permute.xlu0 %846
      %848 = vrot.lane.b32.xlu0 %v292, 12
      %v849 = vpop.permute.xlu0 %848
      %850 = vrot.lane.b32.xlu0 %v294, 12
      %v851 = vpop.permute.xlu0 %850
      %852 = vrot.lane.b32.xlu0 %v295, 12
      %v853 = vpop.permute.xlu0 %852
      %854 = vrot.lane.b32.xlu0 %v297, 12
      %v855 = vpop.permute.xlu0 %854
      %856 = vrot.lane.b32.xlu0 %v298, 12
      %v857 = vpop.permute.xlu0 %856
      %858 = vrot.lane.b32.xlu0 %v300, 12
      %v859 = vpop.permute.xlu0 %858
      %860 = vrot.lane.b32.xlu0 %v301, 12
      %v861 = vpop.permute.xlu0 %860
      %862 = vrot.lane.b32.xlu0 %v303, 12
      %v863 = vpop.permute.xlu0 %862
      %864 = vrot.lane.b32.xlu0 %v304, 12
      %v865 = vpop.permute.xlu0 %864
      %866 = vrot.lane.b32.xlu0 %v306, 12
      %v867 = vpop.permute.xlu0 %866
      %868 = vrot.lane.b32.xlu0 %v307, 12
      %v869 = vpop.permute.xlu0 %868
      %870 = vrot.lane.b32.xlu0 %v309, 12
      %v871 = vpop.permute.xlu0 %870
      %872 = vrot.lane.b32.xlu0 %v310, 12
      %v873 = vpop.permute.xlu0 %872
      %874 = vrot.lane.b32.xlu0 %v312, 12
      %v875 = vpop.permute.xlu0 %874
      %876 = vrot.lane.b32.xlu0 %v313, 12
      %v877 = vpop.permute.xlu0 %876
      %878 = vrot.lane.b32.xlu0 %v315, 12
      %v879 = vpop.permute.xlu0 %878
      %880 = vrot.lane.b32.xlu0 %v316, 12
      %v881 = vpop.permute.xlu0 %880
      %882 = vrot.lane.b32.xlu0 %v318, 12
      %v883 = vpop.permute.xlu0 %882
      %884 = vrot.lane.b32.xlu0 %v319, 12
      %v885 = vpop.permute.xlu0 %884
      %886 = vrot.lane.b32.xlu0 %v321, 12
      %v887 = vpop.permute.xlu0 %886
      %888 = vrot.lane.b32.xlu0 %v322, 12
      %v889 = vpop.permute.xlu0 %888
      %890 = vrot.lane.b32.xlu0 %v324, 12
      %v891 = vpop.permute.xlu0 %890
      %892 = vrot.lane.b32.xlu0 %v325, 12
      %v893 = vpop.permute.xlu0 %892
      %894 = vrot.lane.b32.xlu0 %v327, 12
      %v895 = vpop.permute.xlu0 %894
      %896 = vrot.lane.b32.xlu0 %v328, 12
      %v897 = vpop.permute.xlu0 %896
      %898 = vrot.lane.b32.xlu0 %v330, 12
      %v899 = vpop.permute.xlu0 %898
      %900 = vrot.lane.b32.xlu0 %v331, 12
      %v901 = vpop.permute.xlu0 %900
      %vm934 = vcmask 130144
      %935 = vst.msk [vmem:[#allocation3] sm:$0xff] %vm934, %v839
      %936 = vst.msk [vmem:[#allocation3 + $0x8] sm:$0xff] %vm934, %v841
      %937 = vst.msk [vmem:[#allocation3 + $0x10] sm:$0xff] %vm934, %v843
      %938 = vst.msk [vmem:[#allocation3 + $0x18] sm:$0xff] %vm934, %v845
      %939 = vst.msk [vmem:[#allocation3 + $0x20] sm:$0xff] %vm934, %v847
      %940 = vst.msk [vmem:[#allocation3 + $0x28] sm:$0xff] %vm934, %v849
      %941 = vst.msk [vmem:[#allocation3 + $0x30] sm:$0xff] %vm934, %v851
      %942 = vst.msk [vmem:[#allocation3 + $0x38] sm:$0xff] %vm934, %v853
      %943 = vst.msk [vmem:[#allocation3 + $0x40] sm:$0xff] %vm934, %v855
      %944 = vst.msk [vmem:[#allocation3 + $0x48] sm:$0xff] %vm934, %v857
      %945 = vst.msk [vmem:[#allocation3 + $0x50] sm:$0xff] %vm934, %v859
      %946 = vst.msk [vmem:[#allocation3 + $0x58] sm:$0xff] %vm934, %v861
      %947 = vst.msk [vmem:[#allocation3 + $0x60] sm:$0xff] %vm934, %v863
      %948 = vst.msk [vmem:[#allocation3 + $0x68] sm:$0xff] %vm934, %v865
      %949 = vst.msk [vmem:[#allocation3 + $0x70] sm:$0xff] %vm934, %v867
      %950 = vst.msk [vmem:[#allocation3 + $0x78] sm:$0xff] %vm934, %v869
      %951 = vst.msk [vmem:[#allocation3 + $0x80] sm:$0xff] %vm934, %v871
      %952 = vst.msk [vmem:[#allocation3 + $0x88] sm:$0xff] %vm934, %v873
      %953 = vst.msk [vmem:[#allocation3 + $0x90] sm:$0xff] %vm934, %v875
      %954 = vst.msk [vmem:[#allocation3 + $0x98] sm:$0xff] %vm934, %v877
      %955 = vst.msk [vmem:[#allocation3 + $0xa0] sm:$0xff] %vm934, %v879
      %956 = vst.msk [vmem:[#allocation3 + $0xa8] sm:$0xff] %vm934, %v881
      %957 = vst.msk [vmem:[#allocation3 + $0xb0] sm:$0xff] %vm934, %v883
      %958 = vst.msk [vmem:[#allocation3 + $0xb8] sm:$0xff] %vm934, %v885
      %959 = vst.msk [vmem:[#allocation3 + $0xc0] sm:$0xff] %vm934, %v887
      %960 = vst.msk [vmem:[#allocation3 + $0xc8] sm:$0xff] %vm934, %v889
      %961 = vst.msk [vmem:[#allocation3 + $0xd0] sm:$0xff] %vm934, %v891
      %962 = vst.msk [vmem:[#allocation3 + $0xd8] sm:$0xff] %vm934, %v893
      %963 = vst.msk [vmem:[#allocation3 + $0xe0] sm:$0xff] %vm934, %v895
      %964 = vst.msk [vmem:[#allocation3 + $0xe8] sm:$0xff] %vm934, %v897
      %965 = vst.msk [vmem:[#allocation3 + $0xf0] sm:$0xff] %vm934, %v899
      %966 = vst.msk [vmem:[#allocation3 + $0xf8] sm:$0xff] %vm934, %v901
      %v968 = vrot.slane %v330, 1
      %v969 = vrot.slane %v331, 1
      %v970 = vsel %vm416, %v968, %v969
      %v971 = vrot.slane %v332, 1
      %v972 = vsel %vm416, %v969, %v971
      %973 = vrot.lane.b32.xlu0 %v424, 16
      %v974 = vpop.permute.xlu0 %973
      %975 = vrot.lane.b32.xlu0 %v426, 16
      %v976 = vpop.permute.xlu0 %975
      %977 = vrot.lane.b32.xlu0 %v429, 16
      %v978 = vpop.permute.xlu0 %977
      %979 = vrot.lane.b32.xlu0 %v431, 16
      %v980 = vpop.permute.xlu0 %979
      %981 = vrot.lane.b32.xlu0 %v434, 16
      %v982 = vpop.permute.xlu0 %981
      %983 = vrot.lane.b32.xlu0 %v436, 16
      %v984 = vpop.permute.xlu0 %983
      %985 = vrot.lane.b32.xlu0 %v439, 16
      %v986 = vpop.permute.xlu0 %985
      %987 = vrot.lane.b32.xlu0 %v441, 16
      %v988 = vpop.permute.xlu0 %987
      %989 = vrot.lane.b32.xlu0 %v444, 16
      %v990 = vpop.permute.xlu0 %989
      %991 = vrot.lane.b32.xlu0 %v446, 16
      %v992 = vpop.permute.xlu0 %991
      %993 = vrot.lane.b32.xlu0 %v449, 16
      %v994 = vpop.permute.xlu0 %993
      %995 = vrot.lane.b32.xlu0 %v451, 16
      %v996 = vpop.permute.xlu0 %995
      %997 = vrot.lane.b32.xlu0 %v454, 16
      %v998 = vpop.permute.xlu0 %997
      %999 = vrot.lane.b32.xlu0 %v456, 16
      %v1000 = vpop.permute.xlu0 %999
      %1001 = vrot.lane.b32.xlu0 %v459, 16
      %v1002 = vpop.permute.xlu0 %1001
      %1003 = vrot.lane.b32.xlu0 %v461, 16
      %v1004 = vpop.permute.xlu0 %1003
      %1005 = vrot.lane.b32.xlu0 %v464, 16
      %v1006 = vpop.permute.xlu0 %1005
      %1007 = vrot.lane.b32.xlu0 %v466, 16
      %v1008 = vpop.permute.xlu0 %1007
      %1009 = vrot.lane.b32.xlu0 %v469, 16
      %v1010 = vpop.permute.xlu0 %1009
      %1011 = vrot.lane.b32.xlu0 %v471, 16
      %v1012 = vpop.permute.xlu0 %1011
      %1013 = vrot.lane.b32.xlu0 %v474, 16
      %v1014 = vpop.permute.xlu0 %1013
      %1015 = vrot.lane.b32.xlu0 %v476, 16
      %v1016 = vpop.permute.xlu0 %1015
      %1017 = vrot.lane.b32.xlu0 %v479, 16
      %v1018 = vpop.permute.xlu0 %1017
      %1019 = vrot.lane.b32.xlu0 %v481, 16
      %v1020 = vpop.permute.xlu0 %1019
      %1021 = vrot.lane.b32.xlu0 %v484, 16
      %v1022 = vpop.permute.xlu0 %1021
      %1023 = vrot.lane.b32.xlu0 %v486, 16
      %v1024 = vpop.permute.xlu0 %1023
      %1025 = vrot.lane.b32.xlu0 %v489, 16
      %v1026 = vpop.permute.xlu0 %1025
      %1027 = vrot.lane.b32.xlu0 %v491, 16
      %v1028 = vpop.permute.xlu0 %1027
      %1029 = vrot.lane.b32.xlu0 %v494, 16
      %v1030 = vpop.permute.xlu0 %1029
      %1031 = vrot.lane.b32.xlu0 %v496, 16
      %v1032 = vpop.permute.xlu0 %1031
      %1033 = vrot.lane.b32.xlu0 %v970, 16
      %v1034 = vpop.permute.xlu0 %1033
      %1035 = vrot.lane.b32.xlu0 %v972, 16
      %v1036 = vpop.permute.xlu0 %1035
      %vm1069 = vcmask 162944
      %1070 = vst.msk [vmem:[#allocation3] sm:$0xff] %vm1069, %v974
      %1071 = vst.msk [vmem:[#allocation3 + $0x8] sm:$0xff] %vm1069, %v976
      %1072 = vst.msk [vmem:[#allocation3 + $0x10] sm:$0xff] %vm1069, %v978
      %1073 = vst.msk [vmem:[#allocation3 + $0x18] sm:$0xff] %vm1069, %v980
      %1074 = vst.msk [vmem:[#allocation3 + $0x20] sm:$0xff] %vm1069, %v982
      %1075 = vst.msk [vmem:[#allocation3 + $0x28] sm:$0xff] %vm1069, %v984
      %1076 = vst.msk [vmem:[#allocation3 + $0x30] sm:$0xff] %vm1069, %v986
      %1077 = vst.msk [vmem:[#allocation3 + $0x38] sm:$0xff] %vm1069, %v988
      %1078 = vst.msk [vmem:[#allocation3 + $0x40] sm:$0xff] %vm1069, %v990
      %1079 = vst.msk [vmem:[#allocation3 + $0x48] sm:$0xff] %vm1069, %v992
      %1080 = vst.msk [vmem:[#allocation3 + $0x50] sm:$0xff] %vm1069, %v994
      %1081 = vst.msk [vmem:[#allocation3 + $0x58] sm:$0xff] %vm1069, %v996
      %1082 = vst.msk [vmem:[#allocation3 + $0x60] sm:$0xff] %vm1069, %v998
      %1083 = vst.msk [vmem:[#allocation3 + $0x68] sm:$0xff] %vm1069, %v1000
      %1084 = vst.msk [vmem:[#allocation3 + $0x70] sm:$0xff] %vm1069, %v1002
      %1085 = vst.msk [vmem:[#allocation3 + $0x78] sm:$0xff] %vm1069, %v1004
      %1086 = vst.msk [vmem:[#allocation3 + $0x80] sm:$0xff] %vm1069, %v1006
      %1087 = vst.msk [vmem:[#allocation3 + $0x88] sm:$0xff] %vm1069, %v1008
      %1088 = vst.msk [vmem:[#allocation3 + $0x90] sm:$0xff] %vm1069, %v1010
      %1089 = vst.msk [vmem:[#allocation3 + $0x98] sm:$0xff] %vm1069, %v1012
      %1090 = vst.msk [vmem:[#allocation3 + $0xa0] sm:$0xff] %vm1069, %v1014
      %1091 = vst.msk [vmem:[#allocation3 + $0xa8] sm:$0xff] %vm1069, %v1016
      %1092 = vst.msk [vmem:[#allocation3 + $0xb0] sm:$0xff] %vm1069, %v1018
      %1093 = vst.msk [vmem:[#allocation3 + $0xb8] sm:$0xff] %vm1069, %v1020
      %1094 = vst.msk [vmem:[#allocation3 + $0xc0] sm:$0xff] %vm1069, %v1022
      %1095 = vst.msk [vmem:[#allocation3 + $0xc8] sm:$0xff] %vm1069, %v1024
      %1096 = vst.msk [vmem:[#allocation3 + $0xd0] sm:$0xff] %vm1069, %v1026
      %1097 = vst.msk [vmem:[#allocation3 + $0xd8] sm:$0xff] %vm1069, %v1028
      %1098 = vst.msk [vmem:[#allocation3 + $0xe0] sm:$0xff] %vm1069, %v1030
      %1099 = vst.msk [vmem:[#allocation3 + $0xe8] sm:$0xff] %vm1069, %v1032
      %1100 = vst.msk [vmem:[#allocation3 + $0xf0] sm:$0xff] %vm1069, %v1034
      %1101 = vst.msk [vmem:[#allocation3 + $0xf8] sm:$0xff] %vm1069, %v1036
      %v1102 = vrot.slane %v330, 2
      %v1103 = vrot.slane %v331, 2
      %v1104 = vsel %vm626, %v1102, %v1103
      %v1105 = vrot.slane %v332, 2
      %v1106 = vsel %vm626, %v1103, %v1105
      %1107 = vrot.lane.b32.xlu0 %v634, 20
      %v1108 = vpop.permute.xlu0 %1107
      %1109 = vrot.lane.b32.xlu0 %v636, 20
      %v1110 = vpop.permute.xlu0 %1109
      %1111 = vrot.lane.b32.xlu0 %v639, 20
      %v1112 = vpop.permute.xlu0 %1111
      %1113 = vrot.lane.b32.xlu0 %v641, 20
      %v1114 = vpop.permute.xlu0 %1113
      %1115 = vrot.lane.b32.xlu0 %v644, 20
      %v1116 = vpop.permute.xlu0 %1115
      %1117 = vrot.lane.b32.xlu0 %v646, 20
      %v1118 = vpop.permute.xlu0 %1117
      %1119 = vrot.lane.b32.xlu0 %v649, 20
      %v1120 = vpop.permute.xlu0 %1119
      %1121 = vrot.lane.b32.xlu0 %v651, 20
      %v1122 = vpop.permute.xlu0 %1121
      %1123 = vrot.lane.b32.xlu0 %v654, 20
      %v1124 = vpop.permute.xlu0 %1123
      %1125 = vrot.lane.b32.xlu0 %v656, 20
      %v1126 = vpop.permute.xlu0 %1125
      %1127 = vrot.lane.b32.xlu0 %v659, 20
      %v1128 = vpop.permute.xlu0 %1127
      %1129 = vrot.lane.b32.xlu0 %v661, 20
      %v1130 = vpop.permute.xlu0 %1129
      %1131 = vrot.lane.b32.xlu0 %v664, 20
      %v1132 = vpop.permute.xlu0 %1131
      %1133 = vrot.lane.b32.xlu0 %v666, 20
      %v1134 = vpop.permute.xlu0 %1133
      %1135 = vrot.lane.b32.xlu0 %v669, 20
      %v1136 = vpop.permute.xlu0 %1135
      %1137 = vrot.lane.b32.xlu0 %v671, 20
      %v1138 = vpop.permute.xlu0 %1137
      %1139 = vrot.lane.b32.xlu0 %v674, 20
      %v1140 = vpop.permute.xlu0 %1139
      %1141 = vrot.lane.b32.xlu0 %v676, 20
      %v1142 = vpop.permute.xlu0 %1141
      %1143 = vrot.lane.b32.xlu0 %v679, 20
      %v1144 = vpop.permute.xlu0 %1143
      %1145 = vrot.lane.b32.xlu0 %v681, 20
      %v1146 = vpop.permute.xlu0 %1145
      %1147 = vrot.lane.b32.xlu0 %v684, 20
      %v1148 = vpop.permute.xlu0 %1147
      %1149 = vrot.lane.b32.xlu0 %v686, 20
      %v1150 = vpop.permute.xlu0 %1149
      %1151 = vrot.lane.b32.xlu0 %v689, 20
      %v1152 = vpop.permute.xlu0 %1151
      %1153 = vrot.lane.b32.xlu0 %v691, 20
      %v1154 = vpop.permute.xlu0 %1153
      %1155 = vrot.lane.b32.xlu0 %v694, 20
      %v1156 = vpop.permute.xlu0 %1155
      %1157 = vrot.lane.b32.xlu0 %v696, 20
      %v1158 = vpop.permute.xlu0 %1157
      %1159 = vrot.lane.b32.xlu0 %v699, 20
      %v1160 = vpop.permute.xlu0 %1159
      %1161 = vrot.lane.b32.xlu0 %v701, 20
      %v1162 = vpop.permute.xlu0 %1161
      %1163 = vrot.lane.b32.xlu0 %v704, 20
      %v1164 = vpop.permute.xlu0 %1163
      %1165 = vrot.lane.b32.xlu0 %v706, 20
      %v1166 = vpop.permute.xlu0 %1165
      %1167 = vrot.lane.b32.xlu0 %v1104, 20
      %v1168 = vpop.permute.xlu0 %1167
      %1169 = vrot.lane.b32.xlu0 %v1106, 20
      %v1170 = vpop.permute.xlu0 %1169
      %vm1203 = vcmask 195744
      %1204 = vst.msk [vmem:[#allocation3] sm:$0xff] %vm1203, %v1108
      %1205 = vst.msk [vmem:[#allocation3 + $0x8] sm:$0xff] %vm1203, %v1110
      %1206 = vst.msk [vmem:[#allocation3 + $0x10] sm:$0xff] %vm1203, %v1112
      %1207 = vst.msk [vmem:[#allocation3 + $0x18] sm:$0xff] %vm1203, %v1114
      %1208 = vst.msk [vmem:[#allocation3 + $0x20] sm:$0xff] %vm1203, %v1116
      %1209 = vst.msk [vmem:[#allocation3 + $0x28] sm:$0xff] %vm1203, %v1118
      %1210 = vst.msk [vmem:[#allocation3 + $0x30] sm:$0xff] %vm1203, %v1120
      %1211 = vst.msk [vmem:[#allocation3 + $0x38] sm:$0xff] %vm1203, %v1122
      %1212 = vst.msk [vmem:[#allocation3 + $0x40] sm:$0xff] %vm1203, %v1124
      %1213 = vst.msk [vmem:[#allocation3 + $0x48] sm:$0xff] %vm1203, %v1126
      %1214 = vst.msk [vmem:[#allocation3 + $0x50] sm:$0xff] %vm1203, %v1128
      %1215 = vst.msk [vmem:[#allocation3 + $0x58] sm:$0xff] %vm1203, %v1130
      %1216 = vst.msk [vmem:[#allocation3 + $0x60] sm:$0xff] %vm1203, %v1132
      %1217 = vst.msk [vmem:[#allocation3 + $0x68] sm:$0xff] %vm1203, %v1134
      %1218 = vst.msk [vmem:[#allocation3 + $0x70] sm:$0xff] %vm1203, %v1136
      %1219 = vst.msk [vmem:[#allocation3 + $0x78] sm:$0xff] %vm1203, %v1138
      %1220 = vst.msk [vmem:[#allocation3 + $0x80] sm:$0xff] %vm1203, %v1140
      %1221 = vst.msk [vmem:[#allocation3 + $0x88] sm:$0xff] %vm1203, %v1142
      %1222 = vst.msk [vmem:[#allocation3 + $0x90] sm:$0xff] %vm1203, %v1144
      %1223 = vst.msk [vmem:[#allocation3 + $0x98] sm:$0xff] %vm1203, %v1146
      %1224 = vst.msk [vmem:[#allocation3 + $0xa0] sm:$0xff] %vm1203, %v1148
      %1225 = vst.msk [vmem:[#allocation3 + $0xa8] sm:$0xff] %vm1203, %v1150
      %1226 = vst.msk [vmem:[#allocation3 + $0xb0] sm:$0xff] %vm1203, %v1152
      %1227 = vst.msk [vmem:[#allocation3 + $0xb8] sm:$0xff] %vm1203, %v1154
      %1228 = vst.msk [vmem:[#allocation3 + $0xc0] sm:$0xff] %vm1203, %v1156
      %1229 = vst.msk [vmem:[#allocation3 + $0xc8] sm:$0xff] %vm1203, %v1158
      %1230 = vst.msk [vmem:[#allocation3 + $0xd0] sm:$0xff] %vm1203, %v1160
      %1231 = vst.msk [vmem:[#allocation3 + $0xd8] sm:$0xff] %vm1203, %v1162
      %1232 = vst.msk [vmem:[#allocation3 + $0xe0] sm:$0xff] %vm1203, %v1164
      %1233 = vst.msk [vmem:[#allocation3 + $0xe8] sm:$0xff] %vm1203, %v1166
      %1234 = vst.msk [vmem:[#allocation3 + $0xf0] sm:$0xff] %vm1203, %v1168
      %1235 = vst.msk [vmem:[#allocation3 + $0xf8] sm:$0xff] %vm1203, %v1170
      %1238 = vrot.lane.b32.xlu0 %v288, 24
      %v1239 = vpop.permute.xlu0 %1238
      %1240 = vrot.lane.b32.xlu0 %v289, 24
      %v1241 = vpop.permute.xlu0 %1240
      %1242 = vrot.lane.b32.xlu0 %v291, 24
      %v1243 = vpop.permute.xlu0 %1242
      %1244 = vrot.lane.b32.xlu0 %v292, 24
      %v1245 = vpop.permute.xlu0 %1244
      %1246 = vrot.lane.b32.xlu0 %v294, 24
      %v1247 = vpop.permute.xlu0 %1246
      %1248 = vrot.lane.b32.xlu0 %v295, 24
      %v1249 = vpop.permute.xlu0 %1248
      %1250 = vrot.lane.b32.xlu0 %v297, 24
      %v1251 = vpop.permute.xlu0 %1250
      %1252 = vrot.lane.b32.xlu0 %v298, 24
      %v1253 = vpop.permute.xlu0 %1252
      %1254 = vrot.lane.b32.xlu0 %v300, 24
      %v1255 = vpop.permute.xlu0 %1254
      %1256 = vrot.lane.b32.xlu0 %v301, 24
      %v1257 = vpop.permute.xlu0 %1256
      %1258 = vrot.lane.b32.xlu0 %v303, 24
      %v1259 = vpop.permute.xlu0 %1258
      %1260 = vrot.lane.b32.xlu0 %v304, 24
      %v1261 = vpop.permute.xlu0 %1260
      %1262 = vrot.lane.b32.xlu0 %v306, 24
      %v1263 = vpop.permute.xlu0 %1262
      %1264 = vrot.lane.b32.xlu0 %v307, 24
      %v1265 = vpop.permute.xlu0 %1264
      %1266 = vrot.lane.b32.xlu0 %v309, 24
      %v1267 = vpop.permute.xlu0 %1266
      %1268 = vrot.lane.b32.xlu0 %v310, 24
      %v1269 = vpop.permute.xlu0 %1268
      %1270 = vrot.lane.b32.xlu0 %v312, 24
      %v1271 = vpop.permute.xlu0 %1270
      %1272 = vrot.lane.b32.xlu0 %v313, 24
      %v1273 = vpop.permute.xlu0 %1272
      %1274 = vrot.lane.b32.xlu0 %v315, 24
      %v1275 = vpop.permute.xlu0 %1274
      %1276 = vrot.lane.b32.xlu0 %v316, 24
      %v1277 = vpop.permute.xlu0 %1276
      %1278 = vrot.lane.b32.xlu0 %v318, 24
      %v1279 = vpop.permute.xlu0 %1278
      %1280 = vrot.lane.b32.xlu0 %v319, 24
      %v1281 = vpop.permute.xlu0 %1280
      %1282 = vrot.lane.b32.xlu0 %v321, 24
      %v1283 = vpop.permute.xlu0 %1282
      %1284 = vrot.lane.b32.xlu0 %v322, 24
      %v1285 = vpop.permute.xlu0 %1284
      %1286 = vrot.lane.b32.xlu0 %v324, 24
      %v1287 = vpop.permute.xlu0 %1286
      %1288 = vrot.lane.b32.xlu0 %v325, 24
      %v1289 = vpop.permute.xlu0 %1288
      %1290 = vrot.lane.b32.xlu0 %v327, 24
      %v1291 = vpop.permute.xlu0 %1290
      %1292 = vrot.lane.b32.xlu0 %v328, 24
      %v1293 = vpop.permute.xlu0 %1292
      %1294 = vrot.lane.b32.xlu0 %v330, 24
      %v1295 = vpop.permute.xlu0 %1294
      %1296 = vrot.lane.b32.xlu0 %v331, 24
      %v1297 = vpop.permute.xlu0 %1296
      %1298 = vrot.lane.b32.xlu0 %v333, 24
      %v1299 = vpop.permute.xlu0 %1298
      %1300 = vrot.lane.b32.xlu0 %v334, 24
      %v1301 = vpop.permute.xlu0 %1300
      %vm1334 = vcmask 228544
      %1335 = vst.msk [vmem:[#allocation3] sm:$0xff] %vm1334, %v1239
      %1336 = vst.msk [vmem:[#allocation3 + $0x8] sm:$0xff] %vm1334, %v1241
      %1337 = vst.msk [vmem:[#allocation3 + $0x10] sm:$0xff] %vm1334, %v1243
      %1338 = vst.msk [vmem:[#allocation3 + $0x18] sm:$0xff] %vm1334, %v1245
      %1339 = vst.msk [vmem:[#allocation3 + $0x20] sm:$0xff] %vm1334, %v1247
      %1340 = vst.msk [vmem:[#allocation3 + $0x28] sm:$0xff] %vm1334, %v1249
      %1341 = vst.msk [vmem:[#allocation3 + $0x30] sm:$0xff] %vm1334, %v1251
      %1342 = vst.msk [vmem:[#allocation3 + $0x38] sm:$0xff] %vm1334, %v1253
      %1343 = vst.msk [vmem:[#allocation3 + $0x40] sm:$0xff] %vm1334, %v1255
      %1344 = vst.msk [vmem:[#allocation3 + $0x48] sm:$0xff] %vm1334, %v1257
      %1345 = vst.msk [vmem:[#allocation3 + $0x50] sm:$0xff] %vm1334, %v1259
      %1346 = vst.msk [vmem:[#allocation3 + $0x58] sm:$0xff] %vm1334, %v1261
      %1347 = vst.msk [vmem:[#allocation3 + $0x60] sm:$0xff] %vm1334, %v1263
      %1348 = vst.msk [vmem:[#allocation3 + $0x68] sm:$0xff] %vm1334, %v1265
      %1349 = vst.msk [vmem:[#allocation3 + $0x70] sm:$0xff] %vm1334, %v1267
      %1350 = vst.msk [vmem:[#allocation3 + $0x78] sm:$0xff] %vm1334, %v1269
      %1351 = vst.msk [vmem:[#allocation3 + $0x80] sm:$0xff] %vm1334, %v1271
      %1352 = vst.msk [vmem:[#allocation3 + $0x88] sm:$0xff] %vm1334, %v1273
      %1353 = vst.msk [vmem:[#allocation3 + $0x90] sm:$0xff] %vm1334, %v1275
      %1354 = vst.msk [vmem:[#allocation3 + $0x98] sm:$0xff] %vm1334, %v1277
      %1355 = vst.msk [vmem:[#allocation3 + $0xa0] sm:$0xff] %vm1334, %v1279
      %1356 = vst.msk [vmem:[#allocation3 + $0xa8] sm:$0xff] %vm1334, %v1281
      %1357 = vst.msk [vmem:[#allocation3 + $0xb0] sm:$0xff] %vm1334, %v1283
      %1358 = vst.msk [vmem:[#allocation3 + $0xb8] sm:$0xff] %vm1334, %v1285
      %1359 = vst.msk [vmem:[#allocation3 + $0xc0] sm:$0xff] %vm1334, %v1287
      %1360 = vst.msk [vmem:[#allocation3 + $0xc8] sm:$0xff] %vm1334, %v1289
      %1361 = vst.msk [vmem:[#allocation3 + $0xd0] sm:$0xff] %vm1334, %v1291
      %1362 = vst.msk [vmem:[#allocation3 + $0xd8] sm:$0xff] %vm1334, %v1293
      %1363 = vst.msk [vmem:[#allocation3 + $0xe0] sm:$0xff] %vm1334, %v1295
      %1364 = vst.msk [vmem:[#allocation3 + $0xe8] sm:$0xff] %vm1334, %v1297
      %1365 = vst.msk [vmem:[#allocation3 + $0xf0] sm:$0xff] %vm1334, %v1299
      %1366 = vst.msk [vmem:[#allocation3 + $0xf8] sm:$0xff] %vm1334, %v1301
      %v1368 = vrot.slane %v333, 1
      %v1369 = vrot.slane %v334, 1
      %v1370 = vsel %vm416, %v1368, %v1369
      %v1371 = vrot.slane %v335, 1
      %v1372 = vsel %vm416, %v1369, %v1371
      %1373 = vrot.lane.b32.xlu0 %v429, 28
      %v1374 = vpop.permute.xlu0 %1373
      %1375 = vrot.lane.b32.xlu0 %v431, 28
      %v1376 = vpop.permute.xlu0 %1375
      %1377 = vrot.lane.b32.xlu0 %v434, 28
      %v1378 = vpop.permute.xlu0 %1377
      %1379 = vrot.lane.b32.xlu0 %v436, 28
      %v1380 = vpop.permute.xlu0 %1379
      %1381 = vrot.lane.b32.xlu0 %v439, 28
      %v1382 = vpop.permute.xlu0 %1381
      %1383 = vrot.lane.b32.xlu0 %v441, 28
      %v1384 = vpop.permute.xlu0 %1383
      %1385 = vrot.lane.b32.xlu0 %v444, 28
      %v1386 = vpop.permute.xlu0 %1385
      %1387 = vrot.lane.b32.xlu0 %v446, 28
      %v1388 = vpop.permute.xlu0 %1387
      %1389 = vrot.lane.b32.xlu0 %v449, 28
      %v1390 = vpop.permute.xlu0 %1389
      %1391 = vrot.lane.b32.xlu0 %v451, 28
      %v1392 = vpop.permute.xlu0 %1391
      %1393 = vrot.lane.b32.xlu0 %v454, 28
      %v1394 = vpop.permute.xlu0 %1393
      %1395 = vrot.lane.b32.xlu0 %v456, 28
      %v1396 = vpop.permute.xlu0 %1395
      %1397 = vrot.lane.b32.xlu0 %v459, 28
      %v1398 = vpop.permute.xlu0 %1397
      %1399 = vrot.lane.b32.xlu0 %v461, 28
      %v1400 = vpop.permute.xlu0 %1399
      %1401 = vrot.lane.b32.xlu0 %v464, 28
      %v1402 = vpop.permute.xlu0 %1401
      %1403 = vrot.lane.b32.xlu0 %v466, 28
      %v1404 = vpop.permute.xlu0 %1403
      %1405 = vrot.lane.b32.xlu0 %v469, 28
      %v1406 = vpop.permute.xlu0 %1405
      %1407 = vrot.lane.b32.xlu0 %v471, 28
      %v1408 = vpop.permute.xlu0 %1407
      %1409 = vrot.lane.b32.xlu0 %v474, 28
      %v1410 = vpop.permute.xlu0 %1409
      %1411 = vrot.lane.b32.xlu0 %v476, 28
      %v1412 = vpop.permute.xlu0 %1411
      %1413 = vrot.lane.b32.xlu0 %v479, 28
      %v1414 = vpop.permute.xlu0 %1413
      %1415 = vrot.lane.b32.xlu0 %v481, 28
      %v1416 = vpop.permute.xlu0 %1415
      %1417 = vrot.lane.b32.xlu0 %v484, 28
      %v1418 = vpop.permute.xlu0 %1417
      %1419 = vrot.lane.b32.xlu0 %v486, 28
      %v1420 = vpop.permute.xlu0 %1419
      %1421 = vrot.lane.b32.xlu0 %v489, 28
      %v1422 = vpop.permute.xlu0 %1421
      %1423 = vrot.lane.b32.xlu0 %v491, 28
      %v1424 = vpop.permute.xlu0 %1423
      %1425 = vrot.lane.b32.xlu0 %v494, 28
      %v1426 = vpop.permute.xlu0 %1425
      %1427 = vrot.lane.b32.xlu0 %v496, 28
      %v1428 = vpop.permute.xlu0 %1427
      %1429 = vrot.lane.b32.xlu0 %v970, 28
      %v1430 = vpop.permute.xlu0 %1429
      %1431 = vrot.lane.b32.xlu0 %v972, 28
      %v1432 = vpop.permute.xlu0 %1431
      %1433 = vrot.lane.b32.xlu0 %v1370, 28
      %v1434 = vpop.permute.xlu0 %1433
      %1435 = vrot.lane.b32.xlu0 %v1372, 28
      %v1436 = vpop.permute.xlu0 %1435
      %vm1469 = vcmask 261344
      %1470 = vst.msk [vmem:[#allocation3] sm:$0xff] %vm1469, %v1374
      %1471 = vst.msk [vmem:[#allocation3 + $0x8] sm:$0xff] %vm1469, %v1376
      %1472 = vst.msk [vmem:[#allocation3 + $0x10] sm:$0xff] %vm1469, %v1378
      %1473 = vst.msk [vmem:[#allocation3 + $0x18] sm:$0xff] %vm1469, %v1380
      %1474 = vst.msk [vmem:[#allocation3 + $0x20] sm:$0xff] %vm1469, %v1382
      %1475 = vst.msk [vmem:[#allocation3 + $0x28] sm:$0xff] %vm1469, %v1384
      %1476 = vst.msk [vmem:[#allocation3 + $0x30] sm:$0xff] %vm1469, %v1386
      %1477 = vst.msk [vmem:[#allocation3 + $0x38] sm:$0xff] %vm1469, %v1388
      %1478 = vst.msk [vmem:[#allocation3 + $0x40] sm:$0xff] %vm1469, %v1390
      %1479 = vst.msk [vmem:[#allocation3 + $0x48] sm:$0xff] %vm1469, %v1392
      %1480 = vst.msk [vmem:[#allocation3 + $0x50] sm:$0xff] %vm1469, %v1394
      %1481 = vst.msk [vmem:[#allocation3 + $0x58] sm:$0xff] %vm1469, %v1396
      %1482 = vst.msk [vmem:[#allocation3 + $0x60] sm:$0xff] %vm1469, %v1398
      %1483 = vst.msk [vmem:[#allocation3 + $0x68] sm:$0xff] %vm1469, %v1400
      %1484 = vst.msk [vmem:[#allocation3 + $0x70] sm:$0xff] %vm1469, %v1402
      %1485 = vst.msk [vmem:[#allocation3 + $0x78] sm:$0xff] %vm1469, %v1404
      %1486 = vst.msk [vmem:[#allocation3 + $0x80] sm:$0xff] %vm1469, %v1406
      %1487 = vst.msk [vmem:[#allocation3 + $0x88] sm:$0xff] %vm1469, %v1408
      %1488 = vst.msk [vmem:[#allocation3 + $0x90] sm:$0xff] %vm1469, %v1410
      %1489 = vst.msk [vmem:[#allocation3 + $0x98] sm:$0xff] %vm1469, %v1412
      %1490 = vst.msk [vmem:[#allocation3 + $0xa0] sm:$0xff] %vm1469, %v1414
      %1491 = vst.msk [vmem:[#allocation3 + $0xa8] sm:$0xff] %vm1469, %v1416
      %1492 = vst.msk [vmem:[#allocation3 + $0xb0] sm:$0xff] %vm1469, %v1418
      %1493 = vst.msk [vmem:[#allocation3 + $0xb8] sm:$0xff] %vm1469, %v1420
      %1494 = vst.msk [vmem:[#allocation3 + $0xc0] sm:$0xff] %vm1469, %v1422
      %1495 = vst.msk [vmem:[#allocation3 + $0xc8] sm:$0xff] %vm1469, %v1424
      %1496 = vst.msk [vmem:[#allocation3 + $0xd0] sm:$0xff] %vm1469, %v1426
      %1497 = vst.msk [vmem:[#allocation3 + $0xd8] sm:$0xff] %vm1469, %v1428
      %1498 = vst.msk [vmem:[#allocation3 + $0xe0] sm:$0xff] %vm1469, %v1430
      %1499 = vst.msk [vmem:[#allocation3 + $0xe8] sm:$0xff] %vm1469, %v1432
      %1500 = vst.msk [vmem:[#allocation3 + $0xf0] sm:$0xff] %vm1469, %v1434
      %1501 = vst.msk [vmem:[#allocation3 + $0xf8] sm:$0xff] %vm1469, %v1436
      %v1502 = vrot.slane %v333, 2
      %v1503 = vrot.slane %v334, 2
      %v1504 = vsel %vm626, %v1502, %v1503
      %v1505 = vrot.slane %v335, 2
      %v1506 = vsel %vm626, %v1503, %v1505
      %1507 = vrot.lane.b32.xlu0 %v639, 32
      %v1508 = vpop.permute.xlu0 %1507
      %1509 = vrot.lane.b32.xlu0 %v641, 32
      %v1510 = vpop.permute.xlu0 %1509
      %1511 = vrot.lane.b32.xlu0 %v644, 32
      %v1512 = vpop.permute.xlu0 %1511
      %1513 = vrot.lane.b32.xlu0 %v646, 32
      %v1514 = vpop.permute.xlu0 %1513
      %1515 = vrot.lane.b32.xlu0 %v649, 32
      %v1516 = vpop.permute.xlu0 %1515
      %1517 = vrot.lane.b32.xlu0 %v651, 32
      %v1518 = vpop.permute.xlu0 %1517
      %1519 = vrot.lane.b32.xlu0 %v654, 32
      %v1520 = vpop.permute.xlu0 %1519
      %1521 = vrot.lane.b32.xlu0 %v656, 32
      %v1522 = vpop.permute.xlu0 %1521
      %1523 = vrot.lane.b32.xlu0 %v659, 32
      %v1524 = vpop.permute.xlu0 %1523
      %1525 = vrot.lane.b32.xlu0 %v661, 32
      %v1526 = vpop.permute.xlu0 %1525
      %1527 = vrot.lane.b32.xlu0 %v664, 32
      %v1528 = vpop.permute.xlu0 %1527
      %1529 = vrot.lane.b32.xlu0 %v666, 32
      %v1530 = vpop.permute.xlu0 %1529
      %1531 = vrot.lane.b32.xlu0 %v669, 32
      %v1532 = vpop.permute.xlu0 %1531
      %1533 = vrot.lane.b32.xlu0 %v671, 32
      %v1534 = vpop.permute.xlu0 %1533
      %1535 = vrot.lane.b32.xlu0 %v674, 32
      %v1536 = vpop.permute.xlu0 %1535
      %1537 = vrot.lane.b32.xlu0 %v676, 32
      %v1538 = vpop.permute.xlu0 %1537
      %1539 = vrot.lane.b32.xlu0 %v679, 32
      %v1540 = vpop.permute.xlu0 %1539
      %1541 = vrot.lane.b32.xlu0 %v681, 32
      %v1542 = vpop.permute.xlu0 %1541
      %1543 = vrot.lane.b32.xlu0 %v684, 32
      %v1544 = vpop.permute.xlu0 %1543
      %1545 = vrot.lane.b32.xlu0 %v686, 32
      %v1546 = vpop.permute.xlu0 %1545
      %1547 = vrot.lane.b32.xlu0 %v689, 32
      %v1548 = vpop.permute.xlu0 %1547
      %1549 = vrot.lane.b32.xlu0 %v691, 32
      %v1550 = vpop.permute.xlu0 %1549
      %1551 = vrot.lane.b32.xlu0 %v694, 32
      %v1552 = vpop.permute.xlu0 %1551
      %1553 = vrot.lane.b32.xlu0 %v696, 32
      %v1554 = vpop.permute.xlu0 %1553
      %1555 = vrot.lane.b32.xlu0 %v699, 32
      %v1556 = vpop.permute.xlu0 %1555
      %1557 = vrot.lane.b32.xlu0 %v701, 32
      %v1558 = vpop.permute.xlu0 %1557
      %1559 = vrot.lane.b32.xlu0 %v704, 32
      %v1560 = vpop.permute.xlu0 %1559
      %1561 = vrot.lane.b32.xlu0 %v706, 32
      %v1562 = vpop.permute.xlu0 %1561
      %1563 = vrot.lane.b32.xlu0 %v1104, 32
      %v1564 = vpop.permute.xlu0 %1563
      %1565 = vrot.lane.b32.xlu0 %v1106, 32
      %v1566 = vpop.permute.xlu0 %1565
      %1567 = vrot.lane.b32.xlu0 %v1504, 32
      %v1568 = vpop.permute.xlu0 %1567
      %1569 = vrot.lane.b32.xlu0 %v1506, 32
      %v1570 = vpop.permute.xlu0 %1569
      %vm1603 = vcmask 294144
      %1604 = vst.msk [vmem:[#allocation3] sm:$0xff] %vm1603, %v1508
      %1605 = vst.msk [vmem:[#allocation3 + $0x8] sm:$0xff] %vm1603, %v1510
      %1606 = vst.msk [vmem:[#allocation3 + $0x10] sm:$0xff] %vm1603, %v1512
      %1607 = vst.msk [vmem:[#allocation3 + $0x18] sm:$0xff] %vm1603, %v1514
      %1608 = vst.msk [vmem:[#allocation3 + $0x20] sm:$0xff] %vm1603, %v1516
      %1609 = vst.msk [vmem:[#allocation3 + $0x28] sm:$0xff] %vm1603, %v1518
      %1610 = vst.msk [vmem:[#allocation3 + $0x30] sm:$0xff] %vm1603, %v1520
      %1611 = vst.msk [vmem:[#allocation3 + $0x38] sm:$0xff] %vm1603, %v1522
      %1612 = vst.msk [vmem:[#allocation3 + $0x40] sm:$0xff] %vm1603, %v1524
      %1613 = vst.msk [vmem:[#allocation3 + $0x48] sm:$0xff] %vm1603, %v1526
      %1614 = vst.msk [vmem:[#allocation3 + $0x50] sm:$0xff] %vm1603, %v1528
      %1615 = vst.msk [vmem:[#allocation3 + $0x58] sm:$0xff] %vm1603, %v1530
      %1616 = vst.msk [vmem:[#allocation3 + $0x60] sm:$0xff] %vm1603, %v1532
      %1617 = vst.msk [vmem:[#allocation3 + $0x68] sm:$0xff] %vm1603, %v1534
      %1618 = vst.msk [vmem:[#allocation3 + $0x70] sm:$0xff] %vm1603, %v1536
      %1619 = vst.msk [vmem:[#allocation3 + $0x78] sm:$0xff] %vm1603, %v1538
      %1620 = vst.msk [vmem:[#allocation3 + $0x80] sm:$0xff] %vm1603, %v1540
      %1621 = vst.msk [vmem:[#allocation3 + $0x88] sm:$0xff] %vm1603, %v1542
      %1622 = vst.msk [vmem:[#allocation3 + $0x90] sm:$0xff] %vm1603, %v1544
      %1623 = vst.msk [vmem:[#allocation3 + $0x98] sm:$0xff] %vm1603, %v1546
      %1624 = vst.msk [vmem:[#allocation3 + $0xa0] sm:$0xff] %vm1603, %v1548
      %1625 = vst.msk [vmem:[#allocation3 + $0xa8] sm:$0xff] %vm1603, %v1550
      %1626 = vst.msk [vmem:[#allocation3 + $0xb0] sm:$0xff] %vm1603, %v1552
      %1627 = vst.msk [vmem:[#allocation3 + $0xb8] sm:$0xff] %vm1603, %v1554
      %1628 = vst.msk [vmem:[#allocation3 + $0xc0] sm:$0xff] %vm1603, %v1556
      %1629 = vst.msk [vmem:[#allocation3 + $0xc8] sm:$0xff] %vm1603, %v1558
      %1630 = vst.msk [vmem:[#allocation3 + $0xd0] sm:$0xff] %vm1603, %v1560
      %1631 = vst.msk [vmem:[#allocation3 + $0xd8] sm:$0xff] %vm1603, %v1562
      %1632 = vst.msk [vmem:[#allocation3 + $0xe0] sm:$0xff] %vm1603, %v1564
      %1633 = vst.msk [vmem:[#allocation3 + $0xe8] sm:$0xff] %vm1603, %v1566
      %1634 = vst.msk [vmem:[#allocation3 + $0xf0] sm:$0xff] %vm1603, %v1568
      %1635 = vst.msk [vmem:[#allocation3 + $0xf8] sm:$0xff] %vm1603, %v1570
      %v1636 = vld [vmem:[#allocation3] sm:$0xff]
      %v1637 = vld [vmem:[#allocation3 + $0x8] sm:$0xff]
      %v1638 = vld [vmem:[#allocation3 + $0x10] sm:$0xff]
      %v1639 = vld [vmem:[#allocation3 + $0x18] sm:$0xff]
      %v1640 = vld [vmem:[#allocation3 + $0x20] sm:$0xff]
      %v1641 = vld [vmem:[#allocation3 + $0x28] sm:$0xff]
      %v1642 = vld [vmem:[#allocation3 + $0x30] sm:$0xff]
      %v1643 = vld [vmem:[#allocation3 + $0x38] sm:$0xff]
      %v1644 = vld [vmem:[#allocation3 + $0x40] sm:$0xff]
      %v1645 = vld [vmem:[#allocation3 + $0x48] sm:$0xff]
      %v1646 = vld [vmem:[#allocation3 + $0x50] sm:$0xff]
      %v1647 = vld [vmem:[#allocation3 + $0x58] sm:$0xff]
      %v1648 = vld [vmem:[#allocation3 + $0x60] sm:$0xff]
      %v1649 = vld [vmem:[#allocation3 + $0x68] sm:$0xff]
      %v1650 = vld [vmem:[#allocation3 + $0x70] sm:$0xff]
      %v1651 = vld [vmem:[#allocation3 + $0x78] sm:$0xff]
      %v1652 = vld [vmem:[#allocation3 + $0x80] sm:$0xff]
      %v1653 = vld [vmem:[#allocation3 + $0x88] sm:$0xff]
      %v1654 = vld [vmem:[#allocation3 + $0x90] sm:$0xff]
      %v1655 = vld [vmem:[#allocation3 + $0x98] sm:$0xff]
      %v1656 = vld [vmem:[#allocation3 + $0xa0] sm:$0xff]
      %v1657 = vld [vmem:[#allocation3 + $0xa8] sm:$0xff]
      %v1658 = vld [vmem:[#allocation3 + $0xb0] sm:$0xff]
      %v1659 = vld [vmem:[#allocation3 + $0xb8] sm:$0xff]
      %v1660 = vld [vmem:[#allocation3 + $0xc0] sm:$0xff]
      %v1661 = vld [vmem:[#allocation3 + $0xc8] sm:$0xff]
      %v1662 = vld [vmem:[#allocation3 + $0xd0] sm:$0xff]
      %v1663 = vld [vmem:[#allocation3 + $0xd8] sm:$0xff]
      %v1664 = vld [vmem:[#allocation3 + $0xe0] sm:$0xff]
      %v1665 = vld [vmem:[#allocation3 + $0xe8] sm:$0xff]
      %v1666 = vld [vmem:[#allocation3 + $0xf0] sm:$0xff]
      %v1667 = vld [vmem:[#allocation3 + $0xf8] sm:$0xff]
      %v1668 = vld [vmem:[%s1] sm:$0xff]
      %v1669 = vld [vmem:[%s1 + $0x8] sm:$0xff]
      %v1670 = vld [vmem:[%s1 + $0x10] sm:$0xff]
      %v1671 = vld [vmem:[%s1 + $0x18] sm:$0xff]
      %v1672 = vld [vmem:[%s1 + $0x20] sm:$0xf]
      %v1673 = vld [vmem:[%s2] sm:$0x1]
      %v1675 = vlaneseq
      %v1676 = vshrl.u32 %v1675, 7
      %v1677 = vsub.s32 0, %v1676
      %v1678 = vrot.slane %v1673, %v1677
      %vm1680 = vcmask 293888
      %v1682 = vsel %vm1680, %v1636, 0
      %v1685 = vsel %vm1680, %v1637, 0
      %v1688 = vsel %vm1680, %v1638, 0
      %v1691 = vsel %vm1680, %v1639, 0
      %v1694 = vsel %vm1680, %v1640, 0
      %v1697 = vsel %vm1680, %v1641, 0
      %v1700 = vsel %vm1680, %v1642, 0
      %v1703 = vsel %vm1680, %v1643, 0
      %v1706 = vsel %vm1680, %v1644, 0
      %v1709 = vsel %vm1680, %v1645, 0
      %v1712 = vsel %vm1680, %v1646, 0
      %v1715 = vsel %vm1680, %v1647, 0
      %v1718 = vsel %vm1680, %v1648, 0
      %v1721 = vsel %vm1680, %v1649, 0
      %v1724 = vsel %vm1680, %v1650, 0
      %v1727 = vsel %vm1680, %v1651, 0
      %v1730 = vsel %vm1680, %v1652, 0
      %v1733 = vsel %vm1680, %v1653, 0
      %v1736 = vsel %vm1680, %v1654, 0
      %v1739 = vsel %vm1680, %v1655, 0
      %v1742 = vsel %vm1680, %v1656, 0
      %v1745 = vsel %vm1680, %v1657, 0
      %v1748 = vsel %vm1680, %v1658, 0
      %v1751 = vsel %vm1680, %v1659, 0
      %v1754 = vsel %vm1680, %v1660, 0
      %v1757 = vsel %vm1680, %v1661, 0
      %v1760 = vsel %vm1680, %v1662, 0
      %v1763 = vsel %vm1680, %v1663, 0
      %v1766 = vsel %vm1680, %v1664, 0
      %v1769 = vsel %vm1680, %v1665, 0
      %v1772 = vsel %vm1680, %v1666, 0
      %v1775 = vsel %vm1680, %v1667, 0
      %vm1777 = vcmask 1043456
      %v1779 = vsel %vm1777, %v1672, 0
      %1781 = vmatprep.subr.mxu0 0.0
      %1782 = vmatpush1.msra.mxu0 %v1668
      %1783 = vmatprep.subr.mxu0 0.0
      %1784 = vmatpush1.msra.mxu0 %v1669
      %1785 = vmatprep.subr.mxu0 0.0
      %1786 = vmatpush1.msra.mxu0 %v1670
      %1787 = vmatprep.subr.mxu0 0.0
      %1788 = vmatpush1.msra.mxu0 %v1671
      %1789 = vmatprep.subr.mxu0 0.0
      %1790 = vmatpush1.msra.mxu0 %v1779
      %1791 = vmatprep.subr.mxu0 0.0
      %1792 = vmatpush1.msra.mxu0 0.0
      %1793 = vmatprep.subr.mxu0 0.0
      %1794 = vmatpush1.msra.mxu0 0.0
      %1795 = vmatprep.subr.mxu0 0.0
      %1796 = vmatpush1.msra.mxu0 0.0
      %1797 = vmatprep.subr.mxu0 0.0
      %1798 = vmatpush1.msra.mxu0 0.0
      %1799 = vmatprep.subr.mxu0 0.0
      %1800 = vmatpush1.msra.mxu0 0.0
      %1801 = vmatprep.subr.mxu0 0.0
      %1802 = vmatpush1.msra.mxu0 0.0
      %1803 = vmatprep.subr.mxu0 0.0
      %1804 = vmatpush1.msra.mxu0 0.0
      %1805 = vmatprep.subr.mxu0 0.0
      %1806 = vmatpush1.msra.mxu0 0.0
      %1807 = vmatprep.subr.mxu0 0.0
      %1808 = vmatpush1.msra.mxu0 0.0
      %1809 = vmatprep.subr.mxu0 0.0
      %1810 = vmatpush1.msra.mxu0 0.0
      %1811 = vmatprep.subr.mxu0 0.0
      %1812 = vmatpush1.msra.mxu0 0.0
      %1813 = vmatprep.subr.mxu0 0.0
      %1814 = vmatpush1.msra.mxu0 0.0
      %1815 = vmatprep.subr.mxu0 0.0
      %1816 = vmatpush1.msra.mxu0 0.0
      %1817 = vmatprep.subr.mxu0 0.0
      %1818 = vmatpush1.msra.mxu0 0.0
      %1819 = vmatprep.subr.mxu0 0.0
      %1820 = vmatpush1.msra.mxu0 0.0
      %1821 = vmatprep.subr.mxu0 0.0
      %1822 = vmatpush1.msra.mxu0 0.0
      %1823 = vmatprep.subr.mxu0 0.0
      %1824 = vmatpush1.msra.mxu0 0.0
      %1825 = vmatprep.subr.mxu0 0.0
      %1826 = vmatpush1.msra.mxu0 0.0
      %1827 = vmatprep.subr.mxu0 0.0
      %1828 = vmatpush1.msra.mxu0 0.0
      %1829 = vmatprep.subr.mxu0 0.0
      %1830 = vmatpush1.msra.mxu0 0.0
      %1831 = vmatprep.subr.mxu0 0.0
      %1832 = vmatpush1.msra.mxu0 0.0
      %1833 = vmatprep.subr.mxu0 0.0
      %1834 = vmatpush1.msra.mxu0 0.0
      %1835 = vmatprep.subr.mxu0 0.0
      %1836 = vmatpush1.msra.mxu0 0.0
      %1837 = vmatprep.subr.mxu0 0.0
      %1838 = vmatpush1.msra.mxu0 0.0
      %1839 = vmatprep.subr.mxu0 0.0
      %1840 = vmatpush1.msra.mxu0 0.0
      %1841 = vmatprep.subr.mxu0 0.0
      %1842 = vmatpush1.msra.mxu0 0.0
      %1843 = vmatprep.subr.mxu0 0.0
      %1844 = vmatpush1.msra.mxu0 0.0
      %1845 = vmatprep.mubr.f32.mxu0 0.0
      %1846 = vmatmul.mubr.f32.gmra.mrb[0].mxu0 %v1682
      %v1847 = vpop.f32.mrb[0].mxu0
      %v1848 = vadd.f32 %v1678, %v1847
      %v1849 = vpop.f32.mrb[0].mxu0
      %1850 = vmatprep.mubr.f32.mxu0 0.0
      %1851 = vmatmul.mubr.f32.gmra.mrb[0].mxu0 %v1685
      %v1852 = vpop.f32.mrb[0].mxu0
      %v1853 = vadd.f32 %v1678, %v1852
      %v1854 = vpop.f32.mrb[0].mxu0
      %1855 = vmatprep.mubr.f32.mxu0 0.0
      %1856 = vmatmul.mubr.f32.gmra.mrb[0].mxu0 %v1688
      %v1857 = vpop.f32.mrb[0].mxu0
      %v1858 = vadd.f32 %v1678, %v1857
      %v1859 = vpop.f32.mrb[0].mxu0
      %1860 = vmatprep.mubr.f32.mxu0 0.0
      %1861 = vmatmul.mubr.f32.gmra.mrb[0].mxu0 %v1691
      %v1862 = vpop.f32.mrb[0].mxu0
      %v1863 = vadd.f32 %v1678, %v1862
      %v1864 = vpop.f32.mrb[0].mxu0
      %1865 = vmatprep.mubr.f32.mxu0 0.0
      %1866 = vmatmul.mubr.f32.gmra.mrb[0].mxu0 %v1694
      %v1867 = vpop.f32.mrb[0].mxu0
      %v1868 = vadd.f32 %v1678, %v1867
      %v1869 = vpop.f32.mrb[0].mxu0
      %1870 = vmatprep.mubr.f32.mxu0 0.0
      %1871 = vmatmul.mubr.f32.gmra.mrb[0].mxu0 %v1697
      %v1872 = vpop.f32.mrb[0].mxu0
      %v1873 = vadd.f32 %v1678, %v1872
      %v1874 = vpop.f32.mrb[0].mxu0
      %1875 = vmatprep.mubr.f32.mxu0 0.0
      %1876 = vmatmul.mubr.f32.gmra.mrb[0].mxu0 %v1700
      %v1877 = vpop.f32.mrb[0].mxu0
      %v1878 = vadd.f32 %v1678, %v1877
      %v1879 = vpop.f32.mrb[0].mxu0
      %1880 = vmatprep.mubr.f32.mxu0 0.0
      %1881 = vmatmul.mubr.f32.gmra.mrb[0].mxu0 %v1703
      %v1882 = vpop.f32.mrb[0].mxu0
      %v1883 = vadd.f32 %v1678, %v1882
      %v1884 = vpop.f32.mrb[0].mxu0
      %1885 = vmatprep.mubr.f32.mxu0 0.0
      %1886 = vmatmul.mubr.f32.gmra.mrb[0].mxu0 %v1706
      %v1887 = vpop.f32.mrb[0].mxu0
      %v1888 = vadd.f32 %v1678, %v1887
      %v1889 = vpop.f32.mrb[0].mxu0
      %1890 = vmatprep.mubr.f32.mxu0 0.0
      %1891 = vmatmul.mubr.f32.gmra.mrb[0].mxu0 %v1709
      %v1892 = vpop.f32.mrb[0].mxu0
      %v1893 = vadd.f32 %v1678, %v1892
      %v1894 = vpop.f32.mrb[0].mxu0
      %1895 = vmatprep.mubr.f32.mxu0 0.0
      %1896 = vmatmul.mubr.f32.gmra.mrb[0].mxu0 %v1712
      %v1897 = vpop.f32.mrb[0].mxu0
      %v1898 = vadd.f32 %v1678, %v1897
      %v1899 = vpop.f32.mrb[0].mxu0
      %1900 = vmatprep.mubr.f32.mxu0 0.0
      %1901 = vmatmul.mubr.f32.gmra.mrb[0].mxu0 %v1715
      %v1902 = vpop.f32.mrb[0].mxu0
      %v1903 = vadd.f32 %v1678, %v1902
      %v1904 = vpop.f32.mrb[0].mxu0
      %1905 = vmatprep.mubr.f32.mxu0 0.0
      %1906 = vmatmul.mubr.f32.gmra.mrb[0].mxu0 %v1718
      %v1907 = vpop.f32.mrb[0].mxu0
      %v1908 = vadd.f32 %v1678, %v1907
      %v1909 = vpop.f32.mrb[0].mxu0
      %1910 = vmatprep.mubr.f32.mxu0 0.0
      %1911 = vmatmul.mubr.f32.gmra.mrb[0].mxu0 %v1721
      %v1912 = vpop.f32.mrb[0].mxu0
      %v1913 = vadd.f32 %v1678, %v1912
      %v1914 = vpop.f32.mrb[0].mxu0
      %1915 = vmatprep.mubr.f32.mxu0 0.0
      %1916 = vmatmul.mubr.f32.gmra.mrb[0].mxu0 %v1724
      %v1917 = vpop.f32.mrb[0].mxu0
      %v1918 = vadd.f32 %v1678, %v1917
      %v1919 = vpop.f32.mrb[0].mxu0
      %1920 = vmatprep.mubr.f32.mxu0 0.0
      %1921 = vmatmul.mubr.f32.gmra.mrb[0].mxu0 %v1727
      %v1922 = vpop.f32.mrb[0].mxu0
      %v1923 = vadd.f32 %v1678, %v1922
      %v1924 = vpop.f32.mrb[0].mxu0
      %1925 = vmatprep.mubr.f32.mxu0 0.0
      %1926 = vmatmul.mubr.f32.gmra.mrb[0].mxu0 %v1730
      %v1927 = vpop.f32.mrb[0].mxu0
      %v1928 = vadd.f32 %v1678, %v1927
      %v1929 = vpop.f32.mrb[0].mxu0
      %1930 = vmatprep.mubr.f32.mxu0 0.0
      %1931 = vmatmul.mubr.f32.gmra.mrb[0].mxu0 %v1733
      %v1932 = vpop.f32.mrb[0].mxu0
      %v1933 = vadd.f32 %v1678, %v1932
      %v1934 = vpop.f32.mrb[0].mxu0
      %1935 = vmatprep.mubr.f32.mxu0 0.0
      %1936 = vmatmul.mubr.f32.gmra.mrb[0].mxu0 %v1736
      %v1937 = vpop.f32.mrb[0].mxu0
      %v1938 = vadd.f32 %v1678, %v1937
      %v1939 = vpop.f32.mrb[0].mxu0
      %1940 = vmatprep.mubr.f32.mxu0 0.0
      %1941 = vmatmul.mubr.f32.gmra.mrb[0].mxu0 %v1739
      %v1942 = vpop.f32.mrb[0].mxu0
      %v1943 = vadd.f32 %v1678, %v1942
      %v1944 = vpop.f32.mrb[0].mxu0
      %1945 = vmatprep.mubr.f32.mxu0 0.0
      %1946 = vmatmul.mubr.f32.gmra.mrb[0].mxu0 %v1742
      %v1947 = vpop.f32.mrb[0].mxu0
      %v1948 = vadd.f32 %v1678, %v1947
      %v1949 = vpop.f32.mrb[0].mxu0
      %1950 = vmatprep.mubr.f32.mxu0 0.0
      %1951 = vmatmul.mubr.f32.gmra.mrb[0].mxu0 %v1745
      %v1952 = vpop.f32.mrb[0].mxu0
      %v1953 = vadd.f32 %v1678, %v1952
      %v1954 = vpop.f32.mrb[0].mxu0
      %1955 = vmatprep.mubr.f32.mxu0 0.0
      %1956 = vmatmul.mubr.f32.gmra.mrb[0].mxu0 %v1748
      %v1957 = vpop.f32.mrb[0].mxu0
      %v1958 = vadd.f32 %v1678, %v1957
      %v1959 = vpop.f32.mrb[0].mxu0
      %1960 = vmatprep.mubr.f32.mxu0 0.0
      %1961 = vmatmul.mubr.f32.gmra.mrb[0].mxu0 %v1751
      %v1962 = vpop.f32.mrb[0].mxu0
      %v1963 = vadd.f32 %v1678, %v1962
      %v1964 = vpop.f32.mrb[0].mxu0
      %1965 = vmatprep.mubr.f32.mxu0 0.0
      %1966 = vmatmul.mubr.f32.gmra.mrb[0].mxu0 %v1754
      %v1967 = vpop.f32.mrb[0].mxu0
      %v1968 = vadd.f32 %v1678, %v1967
      %v1969 = vpop.f32.mrb[0].mxu0
      %1970 = vmatprep.mubr.f32.mxu0 0.0
      %1971 = vmatmul.mubr.f32.gmra.mrb[0].mxu0 %v1757
      %v1972 = vpop.f32.mrb[0].mxu0
      %v1973 = vadd.f32 %v1678, %v1972
      %v1974 = vpop.f32.mrb[0].mxu0
      %1975 = vmatprep.mubr.f32.mxu0 0.0
      %1976 = vmatmul.mubr.f32.gmra.mrb[0].mxu0 %v1760
      %v1977 = vpop.f32.mrb[0].mxu0
      %v1978 = vadd.f32 %v1678, %v1977
      %v1979 = vpop.f32.mrb[0].mxu0
      %1980 = vmatprep.mubr.f32.mxu0 0.0
      %1981 = vmatmul.mubr.f32.gmra.mrb[0].mxu0 %v1763
      %v1982 = vpop.f32.mrb[0].mxu0
      %v1983 = vadd.f32 %v1678, %v1982
      %v1984 = vpop.f32.mrb[0].mxu0
      %1985 = vmatprep.mubr.f32.mxu0 0.0
      %1986 = vmatmul.mubr.f32.gmra.mrb[0].mxu0 %v1766
      %v1987 = vpop.f32.mrb[0].mxu0
      %v1988 = vadd.f32 %v1678, %v1987
      %v1989 = vpop.f32.mrb[0].mxu0
      %1990 = vmatprep.mubr.f32.mxu0 0.0
      %1991 = vmatmul.mubr.f32.gmra.mrb[0].mxu0 %v1769
      %v1992 = vpop.f32.mrb[0].mxu0
      %v1993 = vadd.f32 %v1678, %v1992
      %v1994 = vpop.f32.mrb[0].mxu0
      %1995 = vmatprep.mubr.f32.mxu0 0.0
      %1996 = vmatmul.mubr.f32.gmra.mrb[0].mxu0 %v1772
      %v1997 = vpop.f32.mrb[0].mxu0
      %v1998 = vadd.f32 %v1678, %v1997
      %v1999 = vpop.f32.mrb[0].mxu0
      %2000 = vmatprep.mubr.f32.mxu0 0.0
      %2001 = vmatmul.mubr.f32.gmra.mrb[0].mxu0 %v1775
      %v2002 = vpop.f32.mrb[0].mxu0
      %v2003 = vadd.f32 %v1678, %v2002
      %v2004 = vpop.f32.mrb[0].mxu0
      %2005 = vdwg.mxu0
      %v2006 = vmax.f32 %v1848, 0.0
      %v2007 = vmax.f32 %v1853, 0.0
      %v2008 = vmax.f32 %v1858, 0.0
      %v2009 = vmax.f32 %v1863, 0.0
      %v2010 = vmax.f32 %v1868, 0.0
      %v2011 = vmax.f32 %v1873, 0.0
      %v2012 = vmax.f32 %v1878, 0.0
      %v2013 = vmax.f32 %v1883, 0.0
      %v2014 = vmax.f32 %v1888, 0.0
      %v2015 = vmax.f32 %v1893, 0.0
      %v2016 = vmax.f32 %v1898, 0.0
      %v2017 = vmax.f32 %v1903, 0.0
      %v2018 = vmax.f32 %v1908, 0.0
      %v2019 = vmax.f32 %v1913, 0.0
      %v2020 = vmax.f32 %v1918, 0.0
      %v2021 = vmax.f32 %v1923, 0.0
      %v2022 = vmax.f32 %v1928, 0.0
      %v2023 = vmax.f32 %v1933, 0.0
      %v2024 = vmax.f32 %v1938, 0.0
      %v2025 = vmax.f32 %v1943, 0.0
      %v2026 = vmax.f32 %v1948, 0.0
      %v2027 = vmax.f32 %v1953, 0.0
      %v2028 = vmax.f32 %v1958, 0.0
      %v2029 = vmax.f32 %v1963, 0.0
      %v2030 = vmax.f32 %v1968, 0.0
      %v2031 = vmax.f32 %v1973, 0.0
      %v2032 = vmax.f32 %v1978, 0.0
      %v2033 = vmax.f32 %v1983, 0.0
      %v2034 = vmax.f32 %v1988, 0.0
      %v2035 = vmax.f32 %v1993, 0.0
      %v2036 = vmax.f32 %v1998, 0.0
      %v2037 = vmax.f32 %v2003, 0.0
      %v2070 = vcombine.high %v2006, %v2006
      %v2072 = vunpack.c.l.s4 1983009808
      %v2073 = vunpack.c.0.s8 %v2072
      %v2074 = vlaneseq
      %v2075 = vshrl.u32 %v2074, 7
      %v2076 = vsub.s32 %v2073, %v2075
      %v2077 = vrot.slane %v2006, %v2076
      %v2079 = vunpack.c.l.s4 1983009808
      %v2080 = vunpack.c.0.s8 %v2079
      %v2081 = vlaneseq
      %v2082 = vshrl.u32 %v2081, 7
      %v2083 = vsub.s32 %v2080, %v2082
      %v2084 = vrot.slane %v2070, %v2083
      %v2085 = vcombine.high %v2077, %v2077
      %v2086 = vcombine.high %v2084, %v2084
      %v2087 = vcombine.high %v2007, %v2007
      %v2089 = vunpack.c.l.s4 1983009808
      %v2090 = vunpack.c.0.s8 %v2089
      %v2091 = vlaneseq
      %v2092 = vshrl.u32 %v2091, 7
      %v2093 = vsub.s32 %v2090, %v2092
      %v2094 = vrot.slane %v2007, %v2093
      %v2096 = vunpack.c.l.s4 1983009808
      %v2097 = vunpack.c.0.s8 %v2096
      %v2098 = vlaneseq
      %v2099 = vshrl.u32 %v2098, 7
      %v2100 = vsub.s32 %v2097, %v2099
      %v2101 = vrot.slane %v2087, %v2100
      %v2102 = vcombine.high %v2094, %v2094
      %v2103 = vcombine.high %v2101, %v2101
      %v2104 = vcombine.high %v2008, %v2008
      %v2106 = vunpack.c.l.s4 1983009808
      %v2107 = vunpack.c.0.s8 %v2106
      %v2108 = vlaneseq
      %v2109 = vshrl.u32 %v2108, 7
      %v2110 = vsub.s32 %v2107, %v2109
      %v2111 = vrot.slane %v2008, %v2110
      %v2113 = vunpack.c.l.s4 1983009808
      %v2114 = vunpack.c.0.s8 %v2113
      %v2115 = vlaneseq
      %v2116 = vshrl.u32 %v2115, 7
      %v2117 = vsub.s32 %v2114, %v2116
      %v2118 = vrot.slane %v2104, %v2117
      %v2119 = vcombine.high %v2111, %v2111
      %v2120 = vcombine.high %v2118, %v2118
      %v2121 = vcombine.high %v2009, %v2009
      %v2123 = vunpack.c.l.s4 1983009808
      %v2124 = vunpack.c.0.s8 %v2123
      %v2125 = vlaneseq
      %v2126 = vshrl.u32 %v2125, 7
      %v2127 = vsub.s32 %v2124, %v2126
      %v2128 = vrot.slane %v2009, %v2127
      %v2130 = vunpack.c.l.s4 1983009808
      %v2131 = vunpack.c.0.s8 %v2130
      %v2132 = vlaneseq
      %v2133 = vshrl.u32 %v2132, 7
      %v2134 = vsub.s32 %v2131, %v2133
      %v2135 = vrot.slane %v2121, %v2134
      %v2136 = vcombine.high %v2128, %v2128
      %v2137 = vcombine.high %v2135, %v2135
      %v2138 = vcombine.high %v2010, %v2010
      %v2140 = vunpack.c.l.s4 1983009808
      %v2141 = vunpack.c.0.s8 %v2140
      %v2142 = vlaneseq
      %v2143 = vshrl.u32 %v2142, 7
      %v2144 = vsub.s32 %v2141, %v2143
      %v2145 = vrot.slane %v2010, %v2144
      %v2147 = vunpack.c.l.s4 1983009808
      %v2148 = vunpack.c.0.s8 %v2147
      %v2149 = vlaneseq
      %v2150 = vshrl.u32 %v2149, 7
      %v2151 = vsub.s32 %v2148, %v2150
      %v2152 = vrot.slane %v2138, %v2151
      %v2153 = vcombine.high %v2145, %v2145
      %v2154 = vcombine.high %v2152, %v2152
      %v2155 = vcombine.high %v2011, %v2011
      %v2157 = vunpack.c.l.s4 1983009808
      %v2158 = vunpack.c.0.s8 %v2157
      %v2159 = vlaneseq
      %v2160 = vshrl.u32 %v2159, 7
      %v2161 = vsub.s32 %v2158, %v2160
      %v2162 = vrot.slane %v2011, %v2161
      %v2164 = vunpack.c.l.s4 1983009808
      %v2165 = vunpack.c.0.s8 %v2164
      %v2166 = vlaneseq
      %v2167 = vshrl.u32 %v2166, 7
      %v2168 = vsub.s32 %v2165, %v2167
      %v2169 = vrot.slane %v2155, %v2168
      %v2170 = vcombine.high %v2162, %v2162
      %v2171 = vcombine.high %v2169, %v2169
      %v2172 = vcombine.high %v2012, %v2012
      %v2174 = vunpack.c.l.s4 1983009808
      %v2175 = vunpack.c.0.s8 %v2174
      %v2176 = vlaneseq
      %v2177 = vshrl.u32 %v2176, 7
      %v2178 = vsub.s32 %v2175, %v2177
      %v2179 = vrot.slane %v2012, %v2178
      %v2181 = vunpack.c.l.s4 1983009808
      %v2182 = vunpack.c.0.s8 %v2181
      %v2183 = vlaneseq
      %v2184 = vshrl.u32 %v2183, 7
      %v2185 = vsub.s32 %v2182, %v2184
      %v2186 = vrot.slane %v2172, %v2185
      %v2187 = vcombine.high %v2179, %v2179
      %v2188 = vcombine.high %v2186, %v2186
      %v2189 = vcombine.high %v2013, %v2013
      %v2191 = vunpack.c.l.s4 1983009808
      %v2192 = vunpack.c.0.s8 %v2191
      %v2193 = vlaneseq
      %v2194 = vshrl.u32 %v2193, 7
      %v2195 = vsub.s32 %v2192, %v2194
      %v2196 = vrot.slane %v2013, %v2195
      %v2198 = vunpack.c.l.s4 1983009808
      %v2199 = vunpack.c.0.s8 %v2198
      %v2200 = vlaneseq
      %v2201 = vshrl.u32 %v2200, 7
      %v2202 = vsub.s32 %v2199, %v2201
      %v2203 = vrot.slane %v2189, %v2202
      %v2204 = vcombine.high %v2196, %v2196
      %v2205 = vcombine.high %v2203, %v2203
      %v2206 = vcombine.high %v2014, %v2014
      %v2208 = vunpack.c.l.s4 1983009808
      %v2209 = vunpack.c.0.s8 %v2208
      %v2210 = vlaneseq
      %v2211 = vshrl.u32 %v2210, 7
      %v2212 = vsub.s32 %v2209, %v2211
      %v2213 = vrot.slane %v2014, %v2212
      %v2215 = vunpack.c.l.s4 1983009808
      %v2216 = vunpack.c.0.s8 %v2215
      %v2217 = vlaneseq
      %v2218 = vshrl.u32 %v2217, 7
      %v2219 = vsub.s32 %v2216, %v2218
      %v2220 = vrot.slane %v2206, %v2219
      %v2221 = vcombine.high %v2213, %v2213
      %v2222 = vcombine.high %v2220, %v2220
      %v2223 = vcombine.high %v2015, %v2015
      %v2225 = vunpack.c.l.s4 1983009808
      %v2226 = vunpack.c.0.s8 %v2225
      %v2227 = vlaneseq
      %v2228 = vshrl.u32 %v2227, 7
      %v2229 = vsub.s32 %v2226, %v2228
      %v2230 = vrot.slane %v2015, %v2229
      %v2232 = vunpack.c.l.s4 1983009808
      %v2233 = vunpack.c.0.s8 %v2232
      %v2234 = vlaneseq
      %v2235 = vshrl.u32 %v2234, 7
      %v2236 = vsub.s32 %v2233, %v2235
      %v2237 = vrot.slane %v2223, %v2236
      %v2238 = vcombine.high %v2230, %v2230
      %v2239 = vcombine.high %v2237, %v2237
      %v2240 = vcombine.high %v2016, %v2016
      %v2242 = vunpack.c.l.s4 1983009808
      %v2243 = vunpack.c.0.s8 %v2242
      %v2244 = vlaneseq
      %v2245 = vshrl.u32 %v2244, 7
      %v2246 = vsub.s32 %v2243, %v2245
      %v2247 = vrot.slane %v2016, %v2246
      %v2249 = vunpack.c.l.s4 1983009808
      %v2250 = vunpack.c.0.s8 %v2249
      %v2251 = vlaneseq
      %v2252 = vshrl.u32 %v2251, 7
      %v2253 = vsub.s32 %v2250, %v2252
      %v2254 = vrot.slane %v2240, %v2253
      %v2255 = vcombine.high %v2247, %v2247
      %v2256 = vcombine.high %v2254, %v2254
      %v2257 = vcombine.high %v2017, %v2017
      %v2259 = vunpack.c.l.s4 1983009808
      %v2260 = vunpack.c.0.s8 %v2259
      %v2261 = vlaneseq
      %v2262 = vshrl.u32 %v2261, 7
      %v2263 = vsub.s32 %v2260, %v2262
      %v2264 = vrot.slane %v2017, %v2263
      %v2266 = vunpack.c.l.s4 1983009808
      %v2267 = vunpack.c.0.s8 %v2266
      %v2268 = vlaneseq
      %v2269 = vshrl.u32 %v2268, 7
      %v2270 = vsub.s32 %v2267, %v2269
      %v2271 = vrot.slane %v2257, %v2270
      %v2272 = vcombine.high %v2264, %v2264
      %v2273 = vcombine.high %v2271, %v2271
      %v2274 = vcombine.high %v2018, %v2018
      %v2276 = vunpack.c.l.s4 1983009808
      %v2277 = vunpack.c.0.s8 %v2276
      %v2278 = vlaneseq
      %v2279 = vshrl.u32 %v2278, 7
      %v2280 = vsub.s32 %v2277, %v2279
      %v2281 = vrot.slane %v2018, %v2280
      %v2283 = vunpack.c.l.s4 1983009808
      %v2284 = vunpack.c.0.s8 %v2283
      %v2285 = vlaneseq
      %v2286 = vshrl.u32 %v2285, 7
      %v2287 = vsub.s32 %v2284, %v2286
      %v2288 = vrot.slane %v2274, %v2287
      %v2289 = vcombine.high %v2281, %v2281
      %v2290 = vcombine.high %v2288, %v2288
      %v2291 = vcombine.high %v2019, %v2019
      %v2293 = vunpack.c.l.s4 1983009808
      %v2294 = vunpack.c.0.s8 %v2293
      %v2295 = vlaneseq
      %v2296 = vshrl.u32 %v2295, 7
      %v2297 = vsub.s32 %v2294, %v2296
      %v2298 = vrot.slane %v2019, %v2297
      %v2300 = vunpack.c.l.s4 1983009808
      %v2301 = vunpack.c.0.s8 %v2300
      %v2302 = vlaneseq
      %v2303 = vshrl.u32 %v2302, 7
      %v2304 = vsub.s32 %v2301, %v2303
      %v2305 = vrot.slane %v2291, %v2304
      %v2306 = vcombine.high %v2298, %v2298
      %v2307 = vcombine.high %v2305, %v2305
      %v2308 = vcombine.high %v2020, %v2020
      %v2310 = vunpack.c.l.s4 1983009808
      %v2311 = vunpack.c.0.s8 %v2310
      %v2312 = vlaneseq
      %v2313 = vshrl.u32 %v2312, 7
      %v2314 = vsub.s32 %v2311, %v2313
      %v2315 = vrot.slane %v2020, %v2314
      %v2317 = vunpack.c.l.s4 1983009808
      %v2318 = vunpack.c.0.s8 %v2317
      %v2319 = vlaneseq
      %v2320 = vshrl.u32 %v2319, 7
      %v2321 = vsub.s32 %v2318, %v2320
      %v2322 = vrot.slane %v2308, %v2321
      %v2323 = vcombine.high %v2315, %v2315
      %v2324 = vcombine.high %v2322, %v2322
      %v2325 = vcombine.high %v2021, %v2021
      %v2327 = vunpack.c.l.s4 1983009808
      %v2328 = vunpack.c.0.s8 %v2327
      %v2329 = vlaneseq
      %v2330 = vshrl.u32 %v2329, 7
      %v2331 = vsub.s32 %v2328, %v2330
      %v2332 = vrot.slane %v2021, %v2331
      %v2334 = vunpack.c.l.s4 1983009808
      %v2335 = vunpack.c.0.s8 %v2334
      %v2336 = vlaneseq
      %v2337 = vshrl.u32 %v2336, 7
      %v2338 = vsub.s32 %v2335, %v2337
      %v2339 = vrot.slane %v2325, %v2338
      %v2340 = vcombine.high %v2332, %v2332
      %v2341 = vcombine.high %v2339, %v2339
      %v2342 = vcombine.high %v2022, %v2022
      %v2344 = vunpack.c.l.s4 1983009808
      %v2345 = vunpack.c.0.s8 %v2344
      %v2346 = vlaneseq
      %v2347 = vshrl.u32 %v2346, 7
      %v2348 = vsub.s32 %v2345, %v2347
      %v2349 = vrot.slane %v2022, %v2348
      %v2351 = vunpack.c.l.s4 1983009808
      %v2352 = vunpack.c.0.s8 %v2351
      %v2353 = vlaneseq
      %v2354 = vshrl.u32 %v2353, 7
      %v2355 = vsub.s32 %v2352, %v2354
      %v2356 = vrot.slane %v2342, %v2355
      %v2357 = vcombine.high %v2349, %v2349
      %v2358 = vcombine.high %v2356, %v2356
      %v2359 = vcombine.high %v2023, %v2023
      %v2361 = vunpack.c.l.s4 1983009808
      %v2362 = vunpack.c.0.s8 %v2361
      %v2363 = vlaneseq
      %v2364 = vshrl.u32 %v2363, 7
      %v2365 = vsub.s32 %v2362, %v2364
      %v2366 = vrot.slane %v2023, %v2365
      %v2368 = vunpack.c.l.s4 1983009808
      %v2369 = vunpack.c.0.s8 %v2368
      %v2370 = vlaneseq
      %v2371 = vshrl.u32 %v2370, 7
      %v2372 = vsub.s32 %v2369, %v2371
      %v2373 = vrot.slane %v2359, %v2372
      %v2374 = vcombine.high %v2366, %v2366
      %v2375 = vcombine.high %v2373, %v2373
      %v2376 = vcombine.high %v2024, %v2024
      %v2378 = vunpack.c.l.s4 1983009808
      %v2379 = vunpack.c.0.s8 %v2378
      %v2380 = vlaneseq
      %v2381 = vshrl.u32 %v2380, 7
      %v2382 = vsub.s32 %v2379, %v2381
      %v2383 = vrot.slane %v2024, %v2382
      %v2385 = vunpack.c.l.s4 1983009808
      %v2386 = vunpack.c.0.s8 %v2385
      %v2387 = vlaneseq
      %v2388 = vshrl.u32 %v2387, 7
      %v2389 = vsub.s32 %v2386, %v2388
      %v2390 = vrot.slane %v2376, %v2389
      %v2391 = vcombine.high %v2383, %v2383
      %v2392 = vcombine.high %v2390, %v2390
      %v2393 = vcombine.high %v2025, %v2025
      %v2395 = vunpack.c.l.s4 1983009808
      %v2396 = vunpack.c.0.s8 %v2395
      %v2397 = vlaneseq
      %v2398 = vshrl.u32 %v2397, 7
      %v2399 = vsub.s32 %v2396, %v2398
      %v2400 = vrot.slane %v2025, %v2399
      %v2402 = vunpack.c.l.s4 1983009808
      %v2403 = vunpack.c.0.s8 %v2402
      %v2404 = vlaneseq
      %v2405 = vshrl.u32 %v2404, 7
      %v2406 = vsub.s32 %v2403, %v2405
      %v2407 = vrot.slane %v2393, %v2406
      %v2408 = vcombine.high %v2400, %v2400
      %v2409 = vcombine.high %v2407, %v2407
      %v2410 = vcombine.high %v2026, %v2026
      %v2412 = vunpack.c.l.s4 1983009808
      %v2413 = vunpack.c.0.s8 %v2412
      %v2414 = vlaneseq
      %v2415 = vshrl.u32 %v2414, 7
      %v2416 = vsub.s32 %v2413, %v2415
      %v2417 = vrot.slane %v2026, %v2416
      %v2419 = vunpack.c.l.s4 1983009808
      %v2420 = vunpack.c.0.s8 %v2419
      %v2421 = vlaneseq
      %v2422 = vshrl.u32 %v2421, 7
      %v2423 = vsub.s32 %v2420, %v2422
      %v2424 = vrot.slane %v2410, %v2423
      %v2425 = vcombine.high %v2417, %v2417
      %v2426 = vcombine.high %v2424, %v2424
      %v2427 = vcombine.high %v2027, %v2027
      %v2429 = vunpack.c.l.s4 1983009808
      %v2430 = vunpack.c.0.s8 %v2429
      %v2431 = vlaneseq
      %v2432 = vshrl.u32 %v2431, 7
      %v2433 = vsub.s32 %v2430, %v2432
      %v2434 = vrot.slane %v2027, %v2433
      %v2436 = vunpack.c.l.s4 1983009808
      %v2437 = vunpack.c.0.s8 %v2436
      %v2438 = vlaneseq
      %v2439 = vshrl.u32 %v2438, 7
      %v2440 = vsub.s32 %v2437, %v2439
      %v2441 = vrot.slane %v2427, %v2440
      %v2442 = vcombine.high %v2434, %v2434
      %v2443 = vcombine.high %v2441, %v2441
      %v2444 = vcombine.high %v2028, %v2028
      %v2446 = vunpack.c.l.s4 1983009808
      %v2447 = vunpack.c.0.s8 %v2446
      %v2448 = vlaneseq
      %v2449 = vshrl.u32 %v2448, 7
      %v2450 = vsub.s32 %v2447, %v2449
      %v2451 = vrot.slane %v2028, %v2450
      %v2453 = vunpack.c.l.s4 1983009808
      %v2454 = vunpack.c.0.s8 %v2453
      %v2455 = vlaneseq
      %v2456 = vshrl.u32 %v2455, 7
      %v2457 = vsub.s32 %v2454, %v2456
      %v2458 = vrot.slane %v2444, %v2457
      %v2459 = vcombine.high %v2451, %v2451
      %v2460 = vcombine.high %v2458, %v2458
      %v2461 = vcombine.high %v2029, %v2029
      %v2463 = vunpack.c.l.s4 1983009808
      %v2464 = vunpack.c.0.s8 %v2463
      %v2465 = vlaneseq
      %v2466 = vshrl.u32 %v2465, 7
      %v2467 = vsub.s32 %v2464, %v2466
      %v2468 = vrot.slane %v2029, %v2467
      %v2470 = vunpack.c.l.s4 1983009808
      %v2471 = vunpack.c.0.s8 %v2470
      %v2472 = vlaneseq
      %v2473 = vshrl.u32 %v2472, 7
      %v2474 = vsub.s32 %v2471, %v2473
      %v2475 = vrot.slane %v2461, %v2474
      %v2476 = vcombine.high %v2468, %v2468
      %v2477 = vcombine.high %v2475, %v2475
      %v2478 = vcombine.high %v2030, %v2030
      %v2480 = vunpack.c.l.s4 1983009808
      %v2481 = vunpack.c.0.s8 %v2480
      %v2482 = vlaneseq
      %v2483 = vshrl.u32 %v2482, 7
      %v2484 = vsub.s32 %v2481, %v2483
      %v2485 = vrot.slane %v2030, %v2484
      %v2487 = vunpack.c.l.s4 1983009808
      %v2488 = vunpack.c.0.s8 %v2487
      %v2489 = vlaneseq
      %v2490 = vshrl.u32 %v2489, 7
      %v2491 = vsub.s32 %v2488, %v2490
      %v2492 = vrot.slane %v2478, %v2491
      %v2493 = vcombine.high %v2485, %v2485
      %v2494 = vcombine.high %v2492, %v2492
      %v2495 = vcombine.high %v2031, %v2031
      %v2497 = vunpack.c.l.s4 1983009808
      %v2498 = vunpack.c.0.s8 %v2497
      %v2499 = vlaneseq
      %v2500 = vshrl.u32 %v2499, 7
      %v2501 = vsub.s32 %v2498, %v2500
      %v2502 = vrot.slane %v2031, %v2501
      %v2504 = vunpack.c.l.s4 1983009808
      %v2505 = vunpack.c.0.s8 %v2504
      %v2506 = vlaneseq
      %v2507 = vshrl.u32 %v2506, 7
      %v2508 = vsub.s32 %v2505, %v2507
      %v2509 = vrot.slane %v2495, %v2508
      %v2510 = vcombine.high %v2502, %v2502
      %v2511 = vcombine.high %v2509, %v2509
      %v2512 = vcombine.high %v2032, %v2032
      %v2514 = vunpack.c.l.s4 1983009808
      %v2515 = vunpack.c.0.s8 %v2514
      %v2516 = vlaneseq
      %v2517 = vshrl.u32 %v2516, 7
      %v2518 = vsub.s32 %v2515, %v2517
      %v2519 = vrot.slane %v2032, %v2518
      %v2521 = vunpack.c.l.s4 1983009808
      %v2522 = vunpack.c.0.s8 %v2521
      %v2523 = vlaneseq
      %v2524 = vshrl.u32 %v2523, 7
      %v2525 = vsub.s32 %v2522, %v2524
      %v2526 = vrot.slane %v2512, %v2525
      %v2527 = vcombine.high %v2519, %v2519
      %v2528 = vcombine.high %v2526, %v2526
      %v2529 = vcombine.high %v2033, %v2033
      %v2531 = vunpack.c.l.s4 1983009808
      %v2532 = vunpack.c.0.s8 %v2531
      %v2533 = vlaneseq
      %v2534 = vshrl.u32 %v2533, 7
      %v2535 = vsub.s32 %v2532, %v2534
      %v2536 = vrot.slane %v2033, %v2535
      %v2538 = vunpack.c.l.s4 1983009808
      %v2539 = vunpack.c.0.s8 %v2538
      %v2540 = vlaneseq
      %v2541 = vshrl.u32 %v2540, 7
      %v2542 = vsub.s32 %v2539, %v2541
      %v2543 = vrot.slane %v2529, %v2542
      %v2544 = vcombine.high %v2536, %v2536
      %v2545 = vcombine.high %v2543, %v2543
      %v2546 = vcombine.high %v2034, %v2034
      %v2548 = vunpack.c.l.s4 1983009808
      %v2549 = vunpack.c.0.s8 %v2548
      %v2550 = vlaneseq
      %v2551 = vshrl.u32 %v2550, 7
      %v2552 = vsub.s32 %v2549, %v2551
      %v2553 = vrot.slane %v2034, %v2552
      %v2555 = vunpack.c.l.s4 1983009808
      %v2556 = vunpack.c.0.s8 %v2555
      %v2557 = vlaneseq
      %v2558 = vshrl.u32 %v2557, 7
      %v2559 = vsub.s32 %v2556, %v2558
      %v2560 = vrot.slane %v2546, %v2559
      %v2561 = vcombine.high %v2553, %v2553
      %v2562 = vcombine.high %v2560, %v2560
      %v2563 = vcombine.high %v2035, %v2035
      %v2565 = vunpack.c.l.s4 1983009808
      %v2566 = vunpack.c.0.s8 %v2565
      %v2567 = vlaneseq
      %v2568 = vshrl.u32 %v2567, 7
      %v2569 = vsub.s32 %v2566, %v2568
      %v2570 = vrot.slane %v2035, %v2569
      %v2572 = vunpack.c.l.s4 1983009808
      %v2573 = vunpack.c.0.s8 %v2572
      %v2574 = vlaneseq
      %v2575 = vshrl.u32 %v2574, 7
      %v2576 = vsub.s32 %v2573, %v2575
      %v2577 = vrot.slane %v2563, %v2576
      %v2578 = vcombine.high %v2570, %v2570
      %v2579 = vcombine.high %v2577, %v2577
      %v2580 = vcombine.high %v2036, %v2036
      %v2582 = vunpack.c.l.s4 1983009808
      %v2583 = vunpack.c.0.s8 %v2582
      %v2584 = vlaneseq
      %v2585 = vshrl.u32 %v2584, 7
      %v2586 = vsub.s32 %v2583, %v2585
      %v2587 = vrot.slane %v2036, %v2586
      %v2589 = vunpack.c.l.s4 1983009808
      %v2590 = vunpack.c.0.s8 %v2589
      %v2591 = vlaneseq
      %v2592 = vshrl.u32 %v2591, 7
      %v2593 = vsub.s32 %v2590, %v2592
      %v2594 = vrot.slane %v2580, %v2593
      %v2595 = vcombine.high %v2587, %v2587
      %v2596 = vcombine.high %v2594, %v2594
      %v2597 = vcombine.high %v2037, %v2037
      %v2599 = vunpack.c.l.s4 1983009808
      %v2600 = vunpack.c.0.s8 %v2599
      %v2601 = vlaneseq
      %v2602 = vshrl.u32 %v2601, 7
      %v2603 = vsub.s32 %v2600, %v2602
      %v2604 = vrot.slane %v2037, %v2603
      %v2606 = vunpack.c.l.s4 1983009808
      %v2607 = vunpack.c.0.s8 %v2606
      %v2608 = vlaneseq
      %v2609 = vshrl.u32 %v2608, 7
      %v2610 = vsub.s32 %v2607, %v2609
      %v2611 = vrot.slane %v2597, %v2610
      %v2612 = vcombine.high %v2604, %v2604
      %v2613 = vcombine.high %v2611, %v2611
      %v2742 = vrot.slane %v2077, 7
      %v2743 = vrot.slane %v2742, 2
      %v2744 = vrot.slane %v2085, 7
      %v2745 = vrot.slane %v2744, 2
      %v2746 = vrot.slane %v2084, 7
      %v2747 = vrot.slane %v2746, 2
      %v2748 = vrot.slane %v2086, 7
      %v2749 = vrot.slane %v2748, 2
      %v2750 = vrot.slane %v2094, 7
      %v2751 = vrot.slane %v2750, 2
      %v2752 = vrot.slane %v2102, 7
      %v2753 = vrot.slane %v2752, 2
      %v2754 = vrot.slane %v2101, 7
      %v2755 = vrot.slane %v2754, 2
      %v2756 = vrot.slane %v2103, 7
      %v2757 = vrot.slane %v2756, 2
      %v2758 = vrot.slane %v2111, 7
      %v2759 = vrot.slane %v2758, 2
      %v2760 = vrot.slane %v2119, 7
      %v2761 = vrot.slane %v2760, 2
      %v2762 = vrot.slane %v2118, 7
      %v2763 = vrot.slane %v2762, 2
      %v2764 = vrot.slane %v2120, 7
      %v2765 = vrot.slane %v2764, 2
      %v2766 = vrot.slane %v2128, 7
      %v2767 = vrot.slane %v2766, 2
      %v2768 = vrot.slane %v2136, 7
      %v2769 = vrot.slane %v2768, 2
      %v2770 = vrot.slane %v2135, 7
      %v2771 = vrot.slane %v2770, 2
      %v2772 = vrot.slane %v2137, 7
      %v2773 = vrot.slane %v2772, 2
      %v2774 = vrot.slane %v2145, 7
      %v2775 = vrot.slane %v2774, 2
      %v2776 = vrot.slane %v2153, 7
      %v2777 = vrot.slane %v2776, 2
      %v2778 = vrot.slane %v2152, 7
      %v2779 = vrot.slane %v2778, 2
      %v2780 = vrot.slane %v2154, 7
      %v2781 = vrot.slane %v2780, 2
      %v2782 = vrot.slane %v2162, 7
      %v2783 = vrot.slane %v2782, 2
      %v2784 = vrot.slane %v2170, 7
      %v2785 = vrot.slane %v2784, 2
      %v2786 = vrot.slane %v2169, 7
      %v2787 = vrot.slane %v2786, 2
      %v2788 = vrot.slane %v2171, 7
      %v2789 = vrot.slane %v2788, 2
      %v2790 = vrot.slane %v2179, 7
      %v2791 = vrot.slane %v2790, 2
      %v2792 = vrot.slane %v2187, 7
      %v2793 = vrot.slane %v2792, 2
      %v2794 = vrot.slane %v2186, 7
      %v2795 = vrot.slane %v2794, 2
      %v2796 = vrot.slane %v2188, 7
      %v2797 = vrot.slane %v2796, 2
      %v2798 = vrot.slane %v2196, 7
      %v2799 = vrot.slane %v2798, 2
      %v2800 = vrot.slane %v2204, 7
      %v2801 = vrot.slane %v2800, 2
      %v2802 = vrot.slane %v2203, 7
      %v2803 = vrot.slane %v2802, 2
      %v2804 = vrot.slane %v2205, 7
      %v2805 = vrot.slane %v2804, 2
      %v2806 = vrot.slane %v2213, 7
      %v2807 = vrot.slane %v2806, 2
      %v2808 = vrot.slane %v2221, 7
      %v2809 = vrot.slane %v2808, 2
      %v2810 = vrot.slane %v2220, 7
      %v2811 = vrot.slane %v2810, 2
      %v2812 = vrot.slane %v2222, 7
      %v2813 = vrot.slane %v2812, 2
      %v2814 = vrot.slane %v2230, 7
      %v2815 = vrot.slane %v2814, 2
      %v2816 = vrot.slane %v2238, 7
      %v2817 = vrot.slane %v2816, 2
      %v2818 = vrot.slane %v2237, 7
      %v2819 = vrot.slane %v2818, 2
      %v2820 = vrot.slane %v2239, 7
      %v2821 = vrot.slane %v2820, 2
      %v2822 = vrot.slane %v2247, 7
      %v2823 = vrot.slane %v2822, 2
      %v2824 = vrot.slane %v2255, 7
      %v2825 = vrot.slane %v2824, 2
      %v2826 = vrot.slane %v2254, 7
      %v2827 = vrot.slane %v2826, 2
      %v2828 = vrot.slane %v2256, 7
      %v2829 = vrot.slane %v2828, 2
      %v2830 = vrot.slane %v2264, 7
      %v2831 = vrot.slane %v2830, 2
      %v2832 = vrot.slane %v2272, 7
      %v2833 = vrot.slane %v2832, 2
      %v2834 = vrot.slane %v2271, 7
      %v2835 = vrot.slane %v2834, 2
      %v2836 = vrot.slane %v2273, 7
      %v2837 = vrot.slane %v2836, 2
      %v2838 = vrot.slane %v2281, 7
      %v2839 = vrot.slane %v2838, 2
      %v2840 = vrot.slane %v2289, 7
      %v2841 = vrot.slane %v2840, 2
      %v2842 = vrot.slane %v2288, 7
      %v2843 = vrot.slane %v2842, 2
      %v2844 = vrot.slane %v2290, 7
      %v2845 = vrot.slane %v2844, 2
      %v2846 = vrot.slane %v2298, 7
      %v2847 = vrot.slane %v2846, 2
      %v2848 = vrot.slane %v2306, 7
      %v2849 = vrot.slane %v2848, 2
      %v2850 = vrot.slane %v2305, 7
      %v2851 = vrot.slane %v2850, 2
      %v2852 = vrot.slane %v2307, 7
      %v2853 = vrot.slane %v2852, 2
      %v2854 = vrot.slane %v2315, 7
      %v2855 = vrot.slane %v2854, 2
      %v2856 = vrot.slane %v2323, 7
      %v2857 = vrot.slane %v2856, 2
      %v2858 = vrot.slane %v2322, 7
      %v2859 = vrot.slane %v2858, 2
      %v2860 = vrot.slane %v2324, 7
      %v2861 = vrot.slane %v2860, 2
      %v2862 = vrot.slane %v2332, 7
      %v2863 = vrot.slane %v2862, 2
      %v2864 = vrot.slane %v2340, 7
      %v2865 = vrot.slane %v2864, 2
      %v2866 = vrot.slane %v2339, 7
      %v2867 = vrot.slane %v2866, 2
      %v2868 = vrot.slane %v2341, 7
      %v2869 = vrot.slane %v2868, 2
      %v2870 = vrot.slane %v2349, 7
      %v2871 = vrot.slane %v2870, 2
      %v2872 = vrot.slane %v2357, 7
      %v2873 = vrot.slane %v2872, 2
      %v2874 = vrot.slane %v2356, 7
      %v2875 = vrot.slane %v2874, 2
      %v2876 = vrot.slane %v2358, 7
      %v2877 = vrot.slane %v2876, 2
      %v2878 = vrot.slane %v2366, 7
      %v2879 = vrot.slane %v2878, 2
      %v2880 = vrot.slane %v2374, 7
      %v2881 = vrot.slane %v2880, 2
      %v2882 = vrot.slane %v2373, 7
      %v2883 = vrot.slane %v2882, 2
      %v2884 = vrot.slane %v2375, 7
      %v2885 = vrot.slane %v2884, 2
      %v2886 = vrot.slane %v2383, 7
      %v2887 = vrot.slane %v2886, 2
      %v2888 = vrot.slane %v2391, 7
      %v2889 = vrot.slane %v2888, 2
      %v2890 = vrot.slane %v2390, 7
      %v2891 = vrot.slane %v2890, 2
      %v2892 = vrot.slane %v2392, 7
      %v2893 = vrot.slane %v2892, 2
      %v2894 = vrot.slane %v2400, 7
      %v2895 = vrot.slane %v2894, 2
      %v2896 = vrot.slane %v2408, 7
      %v2897 = vrot.slane %v2896, 2
      %v2898 = vrot.slane %v2407, 7
      %v2899 = vrot.slane %v2898, 2
      %v2900 = vrot.slane %v2409, 7
      %v2901 = vrot.slane %v2900, 2
      %v2902 = vrot.slane %v2417, 7
      %v2903 = vrot.slane %v2902, 2
      %v2904 = vrot.slane %v2425, 7
      %v2905 = vrot.slane %v2904, 2
      %v2906 = vrot.slane %v2424, 7
      %v2907 = vrot.slane %v2906, 2
      %v2908 = vrot.slane %v2426, 7
      %v2909 = vrot.slane %v2908, 2
      %v2910 = vrot.slane %v2434, 7
      %v2911 = vrot.slane %v2910, 2
      %v2912 = vrot.slane %v2442, 7
      %v2913 = vrot.slane %v2912, 2
      %v2914 = vrot.slane %v2441, 7
      %v2915 = vrot.slane %v2914, 2
      %v2916 = vrot.slane %v2443, 7
      %v2917 = vrot.slane %v2916, 2
      %v2918 = vrot.slane %v2451, 7
      %v2919 = vrot.slane %v2918, 2
      %v2920 = vrot.slane %v2459, 7
      %v2921 = vrot.slane %v2920, 2
      %v2922 = vrot.slane %v2458, 7
      %v2923 = vrot.slane %v2922, 2
      %v2924 = vrot.slane %v2460, 7
      %v2925 = vrot.slane %v2924, 2
      %v2926 = vrot.slane %v2468, 7
      %v2927 = vrot.slane %v2926, 2
      %v2928 = vrot.slane %v2476, 7
      %v2929 = vrot.slane %v2928, 2
      %v2930 = vrot.slane %v2475, 7
      %v2931 = vrot.slane %v2930, 2
      %v2932 = vrot.slane %v2477, 7
      %v2933 = vrot.slane %v2932, 2
      %v2934 = vrot.slane %v2485, 7
      %v2935 = vrot.slane %v2934, 2
      %v2936 = vrot.slane %v2493, 7
      %v2937 = vrot.slane %v2936, 2
      %v2938 = vrot.slane %v2492, 7
      %v2939 = vrot.slane %v2938, 2
      %v2940 = vrot.slane %v2494, 7
      %v2941 = vrot.slane %v2940, 2
      %v2942 = vrot.slane %v2502, 7
      %v2943 = vrot.slane %v2942, 2
      %v2944 = vrot.slane %v2510, 7
      %v2945 = vrot.slane %v2944, 2
      %v2946 = vrot.slane %v2509, 7
      %v2947 = vrot.slane %v2946, 2
      %v2948 = vrot.slane %v2511, 7
      %v2949 = vrot.slane %v2948, 2
      %v2950 = vrot.slane %v2519, 7
      %v2951 = vrot.slane %v2950, 2
      %v2952 = vrot.slane %v2527, 7
      %v2953 = vrot.slane %v2952, 2
      %v2954 = vrot.slane %v2526, 7
      %v2955 = vrot.slane %v2954, 2
      %v2956 = vrot.slane %v2528, 7
      %v2957 = vrot.slane %v2956, 2
      %v2958 = vrot.slane %v2536, 7
      %v2959 = vrot.slane %v2958, 2
      %v2960 = vrot.slane %v2544, 7
      %v2961 = vrot.slane %v2960, 2
      %v2962 = vrot.slane %v2543, 7
      %v2963 = vrot.slane %v2962, 2
      %v2964 = vrot.slane %v2545, 7
      %v2965 = vrot.slane %v2964, 2
      %v2966 = vrot.slane %v2553, 7
      %v2967 = vrot.slane %v2966, 2
      %v2968 = vrot.slane %v2561, 7
      %v2969 = vrot.slane %v2968, 2
      %v2970 = vrot.slane %v2560, 7
      %v2971 = vrot.slane %v2970, 2
      %v2972 = vrot.slane %v2562, 7
      %v2973 = vrot.slane %v2972, 2
      %v2974 = vrot.slane %v2570, 7
      %v2975 = vrot.slane %v2974, 2
      %v2976 = vrot.slane %v2578, 7
      %v2977 = vrot.slane %v2976, 2
      %v2978 = vrot.slane %v2577, 7
      %v2979 = vrot.slane %v2978, 2
      %v2980 = vrot.slane %v2579, 7
      %v2981 = vrot.slane %v2980, 2
      %v2982 = vrot.slane %v2587, 7
      %v2983 = vrot.slane %v2982, 2
      %v2984 = vrot.slane %v2595, 7
      %v2985 = vrot.slane %v2984, 2
      %v2986 = vrot.slane %v2594, 7
      %v2987 = vrot.slane %v2986, 2
      %v2988 = vrot.slane %v2596, 7
      %v2989 = vrot.slane %v2988, 2
      %v2990 = vrot.slane %v2604, 7
      %v2991 = vrot.slane %v2990, 2
      %v2992 = vrot.slane %v2612, 7
      %v2993 = vrot.slane %v2992, 2
      %v2994 = vrot.slane %v2611, 7
      %v2995 = vrot.slane %v2994, 2
      %v2996 = vrot.slane %v2613, 7
      %v2997 = vrot.slane %v2996, 2
      %v3126 = vmax.f32 %v2077, %v2743
      %v3127 = vmax.f32 %v2085, %v2745
      %v3128 = vmax.f32 %v2084, %v2747
      %v3129 = vmax.f32 %v2086, %v2749
      %v3130 = vmax.f32 %v2094, %v2751
      %v3131 = vmax.f32 %v2102, %v2753
      %v3132 = vmax.f32 %v2101, %v2755
      %v3133 = vmax.f32 %v2103, %v2757
      %v3134 = vmax.f32 %v2111, %v2759
      %v3135 = vmax.f32 %v2119, %v2761
      %v3136 = vmax.f32 %v2118, %v2763
      %v3137 = vmax.f32 %v2120, %v2765
      %v3138 = vmax.f32 %v2128, %v2767
      %v3139 = vmax.f32 %v2136, %v2769
      %v3140 = vmax.f32 %v2135, %v2771
      %v3141 = vmax.f32 %v2137, %v2773
      %v3142 = vmax.f32 %v2145, %v2775
      %v3143 = vmax.f32 %v2153, %v2777
      %v3144 = vmax.f32 %v2152, %v2779
      %v3145 = vmax.f32 %v2154, %v2781
      %v3146 = vmax.f32 %v2162, %v2783
      %v3147 = vmax.f32 %v2170, %v2785
      %v3148 = vmax.f32 %v2169, %v2787
      %v3149 = vmax.f32 %v2171, %v2789
      %v3150 = vmax.f32 %v2179, %v2791
      %v3151 = vmax.f32 %v2187, %v2793
      %v3152 = vmax.f32 %v2186, %v2795
      %v3153 = vmax.f32 %v2188, %v2797
      %v3154 = vmax.f32 %v2196, %v2799
      %v3155 = vmax.f32 %v2204, %v2801
      %v3156 = vmax.f32 %v2203, %v2803
      %v3157 = vmax.f32 %v2205, %v2805
      %v3158 = vmax.f32 %v2213, %v2807
      %v3159 = vmax.f32 %v2221, %v2809
      %v3160 = vmax.f32 %v2220, %v2811
      %v3161 = vmax.f32 %v2222, %v2813
      %v3162 = vmax.f32 %v2230, %v2815
      %v3163 = vmax.f32 %v2238, %v2817
      %v3164 = vmax.f32 %v2237, %v2819
      %v3165 = vmax.f32 %v2239, %v2821
      %v3166 = vmax.f32 %v2247, %v2823
      %v3167 = vmax.f32 %v2255, %v2825
      %v3168 = vmax.f32 %v2254, %v2827
      %v3169 = vmax.f32 %v2256, %v2829
      %v3170 = vmax.f32 %v2264, %v2831
      %v3171 = vmax.f32 %v2272, %v2833
      %v3172 = vmax.f32 %v2271, %v2835
      %v3173 = vmax.f32 %v2273, %v2837
      %v3174 = vmax.f32 %v2281, %v2839
      %v3175 = vmax.f32 %v2289, %v2841
      %v3176 = vmax.f32 %v2288, %v2843
      %v3177 = vmax.f32 %v2290, %v2845
      %v3178 = vmax.f32 %v2298, %v2847
      %v3179 = vmax.f32 %v2306, %v2849
      %v3180 = vmax.f32 %v2305, %v2851
      %v3181 = vmax.f32 %v2307, %v2853
      %v3182 = vmax.f32 %v2315, %v2855
      %v3183 = vmax.f32 %v2323, %v2857
      %v3184 = vmax.f32 %v2322, %v2859
      %v3185 = vmax.f32 %v2324, %v2861
      %v3186 = vmax.f32 %v2332, %v2863
      %v3187 = vmax.f32 %v2340, %v2865
      %v3188 = vmax.f32 %v2339, %v2867
      %v3189 = vmax.f32 %v2341, %v2869
      %v3190 = vmax.f32 %v2349, %v2871
      %v3191 = vmax.f32 %v2357, %v2873
      %v3192 = vmax.f32 %v2356, %v2875
      %v3193 = vmax.f32 %v2358, %v2877
      %v3194 = vmax.f32 %v2366, %v2879
      %v3195 = vmax.f32 %v2374, %v2881
      %v3196 = vmax.f32 %v2373, %v2883
      %v3197 = vmax.f32 %v2375, %v2885
      %v3198 = vmax.f32 %v2383, %v2887
      %v3199 = vmax.f32 %v2391, %v2889
      %v3200 = vmax.f32 %v2390, %v2891
      %v3201 = vmax.f32 %v2392, %v2893
      %v3202 = vmax.f32 %v2400, %v2895
      %v3203 = vmax.f32 %v2408, %v2897
      %v3204 = vmax.f32 %v2407, %v2899
      %v3205 = vmax.f32 %v2409, %v2901
      %v3206 = vmax.f32 %v2417, %v2903
      %v3207 = vmax.f32 %v2425, %v2905
      %v3208 = vmax.f32 %v2424, %v2907
      %v3209 = vmax.f32 %v2426, %v2909
      %v3210 = vmax.f32 %v2434, %v2911
      %v3211 = vmax.f32 %v2442, %v2913
      %v3212 = vmax.f32 %v2441, %v2915
      %v3213 = vmax.f32 %v2443, %v2917
      %v3214 = vmax.f32 %v2451, %v2919
      %v3215 = vmax.f32 %v2459, %v2921
      %v3216 = vmax.f32 %v2458, %v2923
      %v3217 = vmax.f32 %v2460, %v2925
      %v3218 = vmax.f32 %v2468, %v2927
      %v3219 = vmax.f32 %v2476, %v2929
      %v3220 = vmax.f32 %v2475, %v2931
      %v3221 = vmax.f32 %v2477, %v2933
      %v3222 = vmax.f32 %v2485, %v2935
      %v3223 = vmax.f32 %v2493, %v2937
      %v3224 = vmax.f32 %v2492, %v2939
      %v3225 = vmax.f32 %v2494, %v2941
      %v3226 = vmax.f32 %v2502, %v2943
      %v3227 = vmax.f32 %v2510, %v2945
      %v3228 = vmax.f32 %v2509, %v2947
      %v3229 = vmax.f32 %v2511, %v2949
      %v3230 = vmax.f32 %v2519, %v2951
      %v3231 = vmax.f32 %v2527, %v2953
      %v3232 = vmax.f32 %v2526, %v2955
      %v3233 = vmax.f32 %v2528, %v2957
      %v3234 = vmax.f32 %v2536, %v2959
      %v3235 = vmax.f32 %v2544, %v2961
      %v3236 = vmax.f32 %v2543, %v2963
      %v3237 = vmax.f32 %v2545, %v2965
      %v3238 = vmax.f32 %v2553, %v2967
      %v3239 = vmax.f32 %v2561, %v2969
      %v3240 = vmax.f32 %v2560, %v2971
      %v3241 = vmax.f32 %v2562, %v2973
      %v3242 = vmax.f32 %v2570, %v2975
      %v3243 = vmax.f32 %v2578, %v2977
      %v3244 = vmax.f32 %v2577, %v2979
      %v3245 = vmax.f32 %v2579, %v2981
      %v3246 = vmax.f32 %v2587, %v2983
      %v3247 = vmax.f32 %v2595, %v2985
      %v3248 = vmax.f32 %v2594, %v2987
      %v3249 = vmax.f32 %v2596, %v2989
      %v3250 = vmax.f32 %v2604, %v2991
      %v3251 = vmax.f32 %v2612, %v2993
      %v3252 = vmax.f32 %v2611, %v2995
      %v3253 = vmax.f32 %v2613, %v2997
      %v3254 = vmax.f32 %v3126, %v3134
      %v3255 = vmax.f32 %v3127, %v3135
      %v3256 = vmax.f32 %v3128, %v3136
      %v3257 = vmax.f32 %v3129, %v3137
      %v3258 = vmax.f32 %v3130, %v3138
      %v3259 = vmax.f32 %v3131, %v3139
      %v3260 = vmax.f32 %v3132, %v3140
      %v3261 = vmax.f32 %v3133, %v3141
      %v3262 = vmax.f32 %v3142, %v3150
      %v3263 = vmax.f32 %v3143, %v3151
      %v3264 = vmax.f32 %v3144, %v3152
      %v3265 = vmax.f32 %v3145, %v3153
      %v3266 = vmax.f32 %v3146, %v3154
      %v3267 = vmax.f32 %v3147, %v3155
      %v3268 = vmax.f32 %v3148, %v3156
      %v3269 = vmax.f32 %v3149, %v3157
      %v3270 = vmax.f32 %v3158, %v3166
      %v3271 = vmax.f32 %v3159, %v3167
      %v3272 = vmax.f32 %v3160, %v3168
      %v3273 = vmax.f32 %v3161, %v3169
      %v3274 = vmax.f32 %v3162, %v3170
      %v3275 = vmax.f32 %v3163, %v3171
      %v3276 = vmax.f32 %v3164, %v3172
      %v3277 = vmax.f32 %v3165, %v3173
      %v3278 = vmax.f32 %v3174, %v3182
      %v3279 = vmax.f32 %v3175, %v3183
      %v3280 = vmax.f32 %v3176, %v3184
      %v3281 = vmax.f32 %v3177, %v3185
      %v3282 = vmax.f32 %v3178, %v3186
      %v3283 = vmax.f32 %v3179, %v3187
      %v3284 = vmax.f32 %v3180, %v3188
      %v3285 = vmax.f32 %v3181, %v3189
      %v3286 = vmax.f32 %v3190, %v3198
      %v3287 = vmax.f32 %v3191, %v3199
      %v3288 = vmax.f32 %v3192, %v3200
      %v3289 = vmax.f32 %v3193, %v3201
      %v3290 = vmax.f32 %v3194, %v3202
      %v3291 = vmax.f32 %v3195, %v3203
      %v3292 = vmax.f32 %v3196, %v3204
      %v3293 = vmax.f32 %v3197, %v3205
      %v3294 = vmax.f32 %v3206, %v3214
      %v3295 = vmax.f32 %v3207, %v3215
      %v3296 = vmax.f32 %v3208, %v3216
      %v3297 = vmax.f32 %v3209, %v3217
      %v3298 = vmax.f32 %v3210, %v3218
      %v3299 = vmax.f32 %v3211, %v3219
      %v3300 = vmax.f32 %v3212, %v3220
      %v3301 = vmax.f32 %v3213, %v3221
      %v3302 = vmax.f32 %v3222, %v3230
      %v3303 = vmax.f32 %v3223, %v3231
      %v3304 = vmax.f32 %v3224, %v3232
      %v3305 = vmax.f32 %v3225, %v3233
      %v3306 = vmax.f32 %v3226, %v3234
      %v3307 = vmax.f32 %v3227, %v3235
      %v3308 = vmax.f32 %v3228, %v3236
      %v3309 = vmax.f32 %v3229, %v3237
      %v3310 = vmax.f32 %v3238, %v3246
      %v3311 = vmax.f32 %v3239, %v3247
      %v3312 = vmax.f32 %v3240, %v3248
      %v3313 = vmax.f32 %v3241, %v3249
      %v3314 = vmax.f32 %v3242, %v3250
      %v3315 = vmax.f32 %v3243, %v3251
      %v3316 = vmax.f32 %v3244, %v3252
      %v3317 = vmax.f32 %v3245, %v3253
      %v3382 = vlaneseq
      %v3383 = vshrl.u32 %v3382, 7
      %v3384 = vsub.s32 0, %v3383
      %v3385 = vrot.slane %v3254, %v3384
      %v3386 = vlaneseq
      %v3387 = vshrl.u32 %v3386, 7
      %v3388 = vsub.s32 0, %v3387
      %v3389 = vrot.slane %v3255, %v3388
      %v3390 = vlaneseq
      %v3391 = vshrl.u32 %v3390, 7
      %v3392 = vsub.s32 0, %v3391
      %v3393 = vrot.slane %v3256, %v3392
      %v3394 = vlaneseq
      %v3395 = vshrl.u32 %v3394, 7
      %v3396 = vsub.s32 0, %v3395
      %v3397 = vrot.slane %v3257, %v3396
      %v3398 = vlaneseq
      %v3399 = vshrl.u32 %v3398, 7
      %v3400 = vsub.s32 0, %v3399
      %v3401 = vrot.slane %v3258, %v3400
      %v3402 = vlaneseq
      %v3403 = vshrl.u32 %v3402, 7
      %v3404 = vsub.s32 0, %v3403
      %v3405 = vrot.slane %v3259, %v3404
      %v3406 = vlaneseq
      %v3407 = vshrl.u32 %v3406, 7
      %v3408 = vsub.s32 0, %v3407
      %v3409 = vrot.slane %v3260, %v3408
      %v3410 = vlaneseq
      %v3411 = vshrl.u32 %v3410, 7
      %v3412 = vsub.s32 0, %v3411
      %v3413 = vrot.slane %v3261, %v3412
      %v3414 = vlaneseq
      %v3415 = vshrl.u32 %v3414, 7
      %v3416 = vsub.s32 0, %v3415
      %v3417 = vrot.slane %v3262, %v3416
      %v3418 = vlaneseq
      %v3419 = vshrl.u32 %v3418, 7
      %v3420 = vsub.s32 0, %v3419
      %v3421 = vrot.slane %v3263, %v3420
      %v3422 = vlaneseq
      %v3423 = vshrl.u32 %v3422, 7
      %v3424 = vsub.s32 0, %v3423
      %v3425 = vrot.slane %v3264, %v3424
      %v3426 = vlaneseq
      %v3427 = vshrl.u32 %v3426, 7
      %v3428 = vsub.s32 0, %v3427
      %v3429 = vrot.slane %v3265, %v3428
      %v3430 = vlaneseq
      %v3431 = vshrl.u32 %v3430, 7
      %v3432 = vsub.s32 0, %v3431
      %v3433 = vrot.slane %v3266, %v3432
      %v3434 = vlaneseq
      %v3435 = vshrl.u32 %v3434, 7
      %v3436 = vsub.s32 0, %v3435
      %v3437 = vrot.slane %v3267, %v3436
      %v3438 = vlaneseq
      %v3439 = vshrl.u32 %v3438, 7
      %v3440 = vsub.s32 0, %v3439
      %v3441 = vrot.slane %v3268, %v3440
      %v3442 = vlaneseq
      %v3443 = vshrl.u32 %v3442, 7
      %v3444 = vsub.s32 0, %v3443
      %v3445 = vrot.slane %v3269, %v3444
      %v3446 = vlaneseq
      %v3447 = vshrl.u32 %v3446, 7
      %v3448 = vsub.s32 0, %v3447
      %v3449 = vrot.slane %v3270, %v3448
      %v3450 = vlaneseq
      %v3451 = vshrl.u32 %v3450, 7
      %v3452 = vsub.s32 0, %v3451
      %v3453 = vrot.slane %v3271, %v3452
      %v3454 = vlaneseq
      %v3455 = vshrl.u32 %v3454, 7
      %v3456 = vsub.s32 0, %v3455
      %v3457 = vrot.slane %v3272, %v3456
      %v3458 = vlaneseq
      %v3459 = vshrl.u32 %v3458, 7
      %v3460 = vsub.s32 0, %v3459
      %v3461 = vrot.slane %v3273, %v3460
      %v3462 = vlaneseq
      %v3463 = vshrl.u32 %v3462, 7
      %v3464 = vsub.s32 0, %v3463
      %v3465 = vrot.slane %v3274, %v3464
      %v3466 = vlaneseq
      %v3467 = vshrl.u32 %v3466, 7
      %v3468 = vsub.s32 0, %v3467
      %v3469 = vrot.slane %v3275, %v3468
      %v3470 = vlaneseq
      %v3471 = vshrl.u32 %v3470, 7
      %v3472 = vsub.s32 0, %v3471
      %v3473 = vrot.slane %v3276, %v3472
      %v3474 = vlaneseq
      %v3475 = vshrl.u32 %v3474, 7
      %v3476 = vsub.s32 0, %v3475
      %v3477 = vrot.slane %v3277, %v3476
      %v3478 = vlaneseq
      %v3479 = vshrl.u32 %v3478, 7
      %v3480 = vsub.s32 0, %v3479
      %v3481 = vrot.slane %v3278, %v3480
      %v3482 = vlaneseq
      %v3483 = vshrl.u32 %v3482, 7
      %v3484 = vsub.s32 0, %v3483
      %v3485 = vrot.slane %v3279, %v3484
      %v3486 = vlaneseq
      %v3487 = vshrl.u32 %v3486, 7
      %v3488 = vsub.s32 0, %v3487
      %v3489 = vrot.slane %v3280, %v3488
      %v3490 = vlaneseq
      %v3491 = vshrl.u32 %v3490, 7
      %v3492 = vsub.s32 0, %v3491
      %v3493 = vrot.slane %v3281, %v3492
      %v3494 = vlaneseq
      %v3495 = vshrl.u32 %v3494, 7
      %v3496 = vsub.s32 0, %v3495
      %v3497 = vrot.slane %v3282, %v3496
      %v3498 = vlaneseq
      %v3499 = vshrl.u32 %v3498, 7
      %v3500 = vsub.s32 0, %v3499
      %v3501 = vrot.slane %v3283, %v3500
      %v3502 = vlaneseq
      %v3503 = vshrl.u32 %v3502, 7
      %v3504 = vsub.s32 0, %v3503
      %v3505 = vrot.slane %v3284, %v3504
      %v3506 = vlaneseq
      %v3507 = vshrl.u32 %v3506, 7
      %v3508 = vsub.s32 0, %v3507
      %v3509 = vrot.slane %v3285, %v3508
      %v3510 = vlaneseq
      %v3511 = vshrl.u32 %v3510, 7
      %v3512 = vsub.s32 0, %v3511
      %v3513 = vrot.slane %v3286, %v3512
      %v3514 = vlaneseq
      %v3515 = vshrl.u32 %v3514, 7
      %v3516 = vsub.s32 0, %v3515
      %v3517 = vrot.slane %v3287, %v3516
      %v3518 = vlaneseq
      %v3519 = vshrl.u32 %v3518, 7
      %v3520 = vsub.s32 0, %v3519
      %v3521 = vrot.slane %v3288, %v3520
      %v3522 = vlaneseq
      %v3523 = vshrl.u32 %v3522, 7
      %v3524 = vsub.s32 0, %v3523
      %v3525 = vrot.slane %v3289, %v3524
      %v3526 = vlaneseq
      %v3527 = vshrl.u32 %v3526, 7
      %v3528 = vsub.s32 0, %v3527
      %v3529 = vrot.slane %v3290, %v3528
      %v3530 = vlaneseq
      %v3531 = vshrl.u32 %v3530, 7
      %v3532 = vsub.s32 0, %v3531
      %v3533 = vrot.slane %v3291, %v3532
      %v3534 = vlaneseq
      %v3535 = vshrl.u32 %v3534, 7
      %v3536 = vsub.s32 0, %v3535
      %v3537 = vrot.slane %v3292, %v3536
      %v3538 = vlaneseq
      %v3539 = vshrl.u32 %v3538, 7
      %v3540 = vsub.s32 0, %v3539
      %v3541 = vrot.slane %v3293, %v3540
      %v3542 = vlaneseq
      %v3543 = vshrl.u32 %v3542, 7
      %v3544 = vsub.s32 0, %v3543
      %v3545 = vrot.slane %v3294, %v3544
      %v3546 = vlaneseq
      %v3547 = vshrl.u32 %v3546, 7
      %v3548 = vsub.s32 0, %v3547
      %v3549 = vrot.slane %v3295, %v3548
      %v3550 = vlaneseq
      %v3551 = vshrl.u32 %v3550, 7
      %v3552 = vsub.s32 0, %v3551
      %v3553 = vrot.slane %v3296, %v3552
      %v3554 = vlaneseq
      %v3555 = vshrl.u32 %v3554, 7
      %v3556 = vsub.s32 0, %v3555
      %v3557 = vrot.slane %v3297, %v3556
      %v3558 = vlaneseq
      %v3559 = vshrl.u32 %v3558, 7
      %v3560 = vsub.s32 0, %v3559
      %v3561 = vrot.slane %v3298, %v3560
      %v3562 = vlaneseq
      %v3563 = vshrl.u32 %v3562, 7
      %v3564 = vsub.s32 0, %v3563
      %v3565 = vrot.slane %v3299, %v3564
      %v3566 = vlaneseq
      %v3567 = vshrl.u32 %v3566, 7
      %v3568 = vsub.s32 0, %v3567
      %v3569 = vrot.slane %v3300, %v3568
      %v3570 = vlaneseq
      %v3571 = vshrl.u32 %v3570, 7
      %v3572 = vsub.s32 0, %v3571
      %v3573 = vrot.slane %v3301, %v3572
      %v3574 = vlaneseq
      %v3575 = vshrl.u32 %v3574, 7
      %v3576 = vsub.s32 0, %v3575
      %v3577 = vrot.slane %v3302, %v3576
      %v3578 = vlaneseq
      %v3579 = vshrl.u32 %v3578, 7
      %v3580 = vsub.s32 0, %v3579
      %v3581 = vrot.slane %v3303, %v3580
      %v3582 = vlaneseq
      %v3583 = vshrl.u32 %v3582, 7
      %v3584 = vsub.s32 0, %v3583
      %v3585 = vrot.slane %v3304, %v3584
      %v3586 = vlaneseq
      %v3587 = vshrl.u32 %v3586, 7
      %v3588 = vsub.s32 0, %v3587
      %v3589 = vrot.slane %v3305, %v3588
      %v3590 = vlaneseq
      %v3591 = vshrl.u32 %v3590, 7
      %v3592 = vsub.s32 0, %v3591
      %v3593 = vrot.slane %v3306, %v3592
      %v3594 = vlaneseq
      %v3595 = vshrl.u32 %v3594, 7
      %v3596 = vsub.s32 0, %v3595
      %v3597 = vrot.slane %v3307, %v3596
      %v3598 = vlaneseq
      %v3599 = vshrl.u32 %v3598, 7
      %v3600 = vsub.s32 0, %v3599
      %v3601 = vrot.slane %v3308, %v3600
      %v3602 = vlaneseq
      %v3603 = vshrl.u32 %v3602, 7
      %v3604 = vsub.s32 0, %v3603
      %v3605 = vrot.slane %v3309, %v3604
      %v3606 = vlaneseq
      %v3607 = vshrl.u32 %v3606, 7
      %v3608 = vsub.s32 0, %v3607
      %v3609 = vrot.slane %v3310, %v3608
      %v3610 = vlaneseq
      %v3611 = vshrl.u32 %v3610, 7
      %v3612 = vsub.s32 0, %v3611
      %v3613 = vrot.slane %v3311, %v3612
      %v3614 = vlaneseq
      %v3615 = vshrl.u32 %v3614, 7
      %v3616 = vsub.s32 0, %v3615
      %v3617 = vrot.slane %v3312, %v3616
      %v3618 = vlaneseq
      %v3619 = vshrl.u32 %v3618, 7
      %v3620 = vsub.s32 0, %v3619
      %v3621 = vrot.slane %v3313, %v3620
      %v3622 = vlaneseq
      %v3623 = vshrl.u32 %v3622, 7
      %v3624 = vsub.s32 0, %v3623
      %v3625 = vrot.slane %v3314, %v3624
      %v3626 = vlaneseq
      %v3627 = vshrl.u32 %v3626, 7
      %v3628 = vsub.s32 0, %v3627
      %v3629 = vrot.slane %v3315, %v3628
      %v3630 = vlaneseq
      %v3631 = vshrl.u32 %v3630, 7
      %v3632 = vsub.s32 0, %v3631
      %v3633 = vrot.slane %v3316, %v3632
      %v3634 = vlaneseq
      %v3635 = vshrl.u32 %v3634, 7
      %v3636 = vsub.s32 0, %v3635
      %v3637 = vrot.slane %v3317, %v3636
      %vm3638 = vcmask 1041409
      %v3639 = vsel %vm3638, %v3389, %v3385
      %vm3640 = vcmask 1042434
      %v3641 = vsel %vm3640, %v3393, %v3639
      %vm3642 = vcmask 1043459
      %v3643 = vsel %vm3642, %v3397, %v3641
      %vm3644 = vcmask 1044484
      %v3645 = vsel %vm3644, %v3401, %v3643
      %vm3646 = vcmask 1045509
      %v3647 = vsel %vm3646, %v3405, %v3645
      %vm3648 = vcmask 1046534
      %v3649 = vsel %vm3648, %v3409, %v3647
      %vm3650 = vcmask 1047559
      %v3651 = vsel %vm3650, %v3413, %v3649
      %v3652 = vsel %vm3638, %v3421, %v3417
      %v3653 = vsel %vm3640, %v3425, %v3652
      %v3654 = vsel %vm3642, %v3429, %v3653
      %v3655 = vsel %vm3644, %v3433, %v3654
      %v3656 = vsel %vm3646, %v3437, %v3655
      %v3657 = vsel %vm3648, %v3441, %v3656
      %v3658 = vsel %vm3650, %v3445, %v3657
      %v3659 = vsel %vm3638, %v3453, %v3449
      %v3660 = vsel %vm3640, %v3457, %v3659
      %v3661 = vsel %vm3642, %v3461, %v3660
      %v3662 = vsel %vm3644, %v3465, %v3661
      %v3663 = vsel %vm3646, %v3469, %v3662
      %v3664 = vsel %vm3648, %v3473, %v3663
      %v3665 = vsel %vm3650, %v3477, %v3664
      %v3666 = vsel %vm3638, %v3485, %v3481
      %v3667 = vsel %vm3640, %v3489, %v3666
      %v3668 = vsel %vm3642, %v3493, %v3667
      %v3669 = vsel %vm3644, %v3497, %v3668
      %v3670 = vsel %vm3646, %v3501, %v3669
      %v3671 = vsel %vm3648, %v3505, %v3670
      %v3672 = vsel %vm3650, %v3509, %v3671
      %v3673 = vsel %vm3638, %v3517, %v3513
      %v3674 = vsel %vm3640, %v3521, %v3673
      %v3675 = vsel %vm3642, %v3525, %v3674
      %v3676 = vsel %vm3644, %v3529, %v3675
      %v3677 = vsel %vm3646, %v3533, %v3676
      %v3678 = vsel %vm3648, %v3537, %v3677
      %v3679 = vsel %vm3650, %v3541, %v3678
      %v3680 = vsel %vm3638, %v3549, %v3545
      %v3681 = vsel %vm3640, %v3553, %v3680
      %v3682 = vsel %vm3642, %v3557, %v3681
      %v3683 = vsel %vm3644, %v3561, %v3682
      %v3684 = vsel %vm3646, %v3565, %v3683
      %v3685 = vsel %vm3648, %v3569, %v3684
      %v3686 = vsel %vm3650, %v3573, %v3685
      %v3687 = vsel %vm3638, %v3581, %v3577
      %v3688 = vsel %vm3640, %v3585, %v3687
      %v3689 = vsel %vm3642, %v3589, %v3688
      %v3690 = vsel %vm3644, %v3593, %v3689
      %v3691 = vsel %vm3646, %v3597, %v3690
      %v3692 = vsel %vm3648, %v3601, %v3691
      %v3693 = vsel %vm3650, %v3605, %v3692
      %v3694 = vsel %vm3638, %v3613, %v3609
      %v3695 = vsel %vm3640, %v3617, %v3694
      %v3696 = vsel %vm3642, %v3621, %v3695
      %v3697 = vsel %vm3644, %v3625, %v3696
      %v3698 = vsel %vm3646, %v3629, %v3697
      %v3699 = vsel %vm3648, %v3633, %v3698
      %v3700 = vsel %vm3650, %v3637, %v3699
      %vm3709 = vcmask 64512
      %3710 = vst.msk [vmem:[%s170] sm:$0xff] %vm3709, %v3651
      %3711 = vst.msk [vmem:[%s170 + $0x8] sm:$0xff] %vm3709, %v3658
      %3712 = vst.msk [vmem:[%s170 + $0x10] sm:$0xff] %vm3709, %v3665
      %3713 = vst.msk [vmem:[%s170 + $0x18] sm:$0xff] %vm3709, %v3672
      %3714 = vst.msk [vmem:[%s170 + $0x20] sm:$0xff] %vm3709, %v3679
      %3715 = vst.msk [vmem:[%s170 + $0x28] sm:$0xff] %vm3709, %v3686
      %3716 = vst.msk [vmem:[%s170 + $0x30] sm:$0xff] %vm3709, %v3693
      %3717 = vst.msk [vmem:[%s170 + $0x38] sm:$0xff] %vm3709, %v3700
      %p3718 = scmp.lt.s32.totalorder %s14, 1
      %s3719 = scalar_select %p3718, %s14, 1
      %s3720 = smul.addr %s3719, 8
      %s3721 = smul.addr %s3720, 8
      %s3722 = scalar_lea.vmem %s3, %s3721
      // Predicated region
      $region33: #{cnn_block_forward.1} parent=31 // pred_check
        %p3723 = pneg %p100
      $region34: #{cnn_block_forward.1} parent=31 // pred_check_branch
        %3725 = sbr.rel (%p3723) target = $region36
      $region35: #{cnn_block_forward.1} parent=31 // pred_region
        _
      $region36: #{cnn_block_forward.1} parent=31 // pred_fallthru
        _
    $region32: #{cnn_block_forward.1} parent=5 // pred_fallthru
      _
    %p3726 = scmp.le.s32.totalorder 2, %s9
    // Predicated region
    $region37: #{cnn_block_forward.1} parent=5 // pred_check
      %p3727 = pneg %p3726
    $region38: #{cnn_block_forward.1} parent=5 // pred_check_branch
      %3729 = sbr.rel (%p3727) target = $region40
    $region39: #{cnn_block_forward.1} parent=5 // pred_region
      %s3730 = ssub.s32 %s9, 2
      // Predicated region
      $region41: #{cnn_block_forward.1} parent=39 // pred_check
        %p3731 = pneg %p106
      $region42: #{cnn_block_forward.1} parent=39 // pred_check_branch
        %3733 = sbr.rel (%p3731) target = $region44
      $region43: #{cnn_block_forward.1} parent=39 // pred_region
        %p3734 = scmp.lt.s32.totalorder %s15, 1
        %s3735 = scalar_select %p3734, %s15, 1
        %s3736 = smul.addr %s3735, 8
        %s3737 = smul.addr %s3736, 8
        %s3738 = scalar_lea.vmem %s3, %s3737
      $region44: #{cnn_block_forward.1} parent=39 // pred_fallthru
        _
    $region40: #{cnn_block_forward.1} parent=5 // pred_fallthru
      _
  $region6: #{cnn_block_forward.1} parent=0 // loop_footer
    %s13 = sadd.s32 1, %s9
  $region7: #{cnn_block_forward.1} parent=0 // loop_footer_branch
    %8 = sbr.rel target = $region3
  $region8: #{cnn_block_forward.1} parent=0 // loop_exit
    _

</llo_original>
